<compile_context>
chip_gen: v6e
topology: v6e:2x2x1
jax: 0.10.0
libtpu: 0.0.40
codegen_flags: <defaults>
</compile_context>

<pallas_src>
import jax
import jax.numpy as jnp
from jax.experimental import pallas as pl
from jax.experimental.pallas import tpu as pltpu

EPS = 1e-5
NEG_SLOPE = 0.2


def _leaky(x):
    return jnp.where(x > 0, x, NEG_SLOPE * x)


# ----------------------------- fused Pallas kernel -------------------------- #

def _matcher_kernel(x_ref, t_ref, pmat_ref, mbig_ref, bsum_ref,
                    w1_ref, b1_ref, g1_ref, be1_ref,
                    w2c_ref, w2t_ref, b2_ref, g2_ref, be2_ref, w3t_ref,
                    o_ref, p1_ref):
    """Whole TextImageMatcher forward for one batch, entirely in VMEM.

    x_ref   : (B, H, W, 2C)      image features, NHWC (un-padded)
    t_ref   : (16*B, S)          text, row = b*16 + (i*4 + j)
    pmat_ref: (16*B, B*H*W)      adaptive-avg-pool(4) matrix (block-diag over b)
    mbig_ref: (16*B, 9*16*B)     3x3-conv tap gather (+zero pad) on the 4x4 grid
    bsum_ref: (B, 16*B)          per-batch row-sum selector
    w1_ref  : (9*2C, C)          stage-1 im2col weight (block-diag for groups=2)
    w2c/w2t : (C, 9*C)/(S, 9*C)  stage-2 per-tap weights, conv / text channel halves
    w3t_ref : (16*B, C)          final 4x4 conv weight tiled per row
    o_ref   : (B, 1)
    p1_ref  : VMEM scratch (B, H, W, 9*2C) — stage-1 im2col patches
    """
    B, H, W, C2 = x_ref.shape
    C = b1_ref.shape[-1]
    M2 = t_ref.shape[0]                       # 16 * B

    # ---------- stage 1: Conv2d(2C->C, 3x3, pad=1, groups=2) -----------------
    # in-VMEM im2col: tap k=(dy,dx) lands in lane block [k*2C, (k+1)*2C); the
    # zero-initialised scratch provides the pad=1 border (no HBM jnp.pad).
    p1_ref[...] = jnp.zeros(p1_ref.shape, p1_ref.dtype)
    for dy in range(3):
        for dx in range(3):
            k = dy * 3 + dx
            lo_h, hi_h = max(0, 1 - dy), min(H, H + 1 - dy)
            lo_w, hi_w = max(0, 1 - dx), min(W, W + 1 - dx)
            p1_ref[:, lo_h:hi_h, lo_w:hi_w, k * C2:(k + 1) * C2] = \
                x_ref[:, lo_h + dy - 1:hi_h + dy - 1,
                      lo_w + dx - 1:hi_w + dx - 1, :]

    patches = p1_ref[...].reshape(B * H * W, 9 * C2)
    acc = jnp.dot(patches, w1_ref[...],
                  preferred_element_type=jnp.float32) + b1_ref[...]      # (BHW, C)

    # BatchNorm2d (training-mode biased stats over B*H*W) fused with
    # AdaptiveAvgPool2d(4): stats from raw conv sums, pooling of the raw conv
    # output via one matmul, BN affine + LeakyReLU only on the 16*B pooled rows
    # (pooling and the BN affine commute).
    n1 = float(B * H * W)
    mu1 = jnp.sum(acc, axis=0, keepdims=True) / n1
    var1 = jnp.sum(acc * acc, axis=0, keepdims=True) / n1 - mu1 * mu1
    pooled = jnp.dot(pmat_ref[...], acc,
                     preferred_element_type=jnp.float32)                 # (16B, C)
    h1 = (pooled - mu1) * jax.lax.rsqrt(var1 + EPS) * g1_ref[...] + be1_ref[...]
    h1 = _leaky(h1)

    # ---------- stage 2: concat(text) -> Conv2d(C+S->C, 3x3, pad=1) ----------
    # per-tap partial products zw[:, k*C:(k+1)*C] = [h1 | text] @ w2_tap_k
    # (channel concat folded into two matmuls); the spatial gather + zero
    # padding of the 3x3 conv on the 4x4 grid is the precomputed mbig matrix.
    zw = (jnp.dot(h1, w2c_ref[...], preferred_element_type=jnp.float32) +
          jnp.dot(t_ref[...], w2t_ref[...], preferred_element_type=jnp.float32))
    zwtall = jnp.concatenate([zw[:, k * C:(k + 1) * C] for k in range(9)],
                             axis=0)                                     # (9*16B, C)
    acc2 = jnp.dot(mbig_ref[...], zwtall,
                   preferred_element_type=jnp.float32) + b2_ref[...]     # (16B, C)

    # BatchNorm2d over the whole (B, 4, 4) extent, then LeakyReLU(0.2).
    n2 = float(M2)
    mu2 = jnp.sum(acc2, axis=0, keepdims=True) / n2
    var2 = jnp.sum(acc2 * acc2, axis=0, keepdims=True) / n2 - mu2 * mu2
    y2 = (acc2 - mu2) * jax.lax.rsqrt(var2 + EPS) * g2_ref[...] + be2_ref[...]
    y2 = _leaky(y2)

    # ---- final Conv2d(C->1, 4x4, valid, no bias) == full (h,w,c) contraction ----
    rowsum = jnp.sum(y2 * w3t_ref[...], axis=1, keepdims=True)           # (16B, 1)
    o_ref[...] = jnp.dot(bsum_ref[...], rowsum,
                         preferred_element_type=jnp.float32)             # (B, 1)


# ------------------------------- glue / wrapper ----------------------------- #

def _vmem_specs(n):
    return [pl.BlockSpec(memory_space=pltpu.MemorySpace.VMEM) for _ in range(n)]


def _spectral_normalize(w, n_iter=30):
    """Approximate torch spectral_norm: divide by the top singular value of the (out, -1) view."""
    m = w.reshape(w.shape[0], -1).astype(jnp.float32)
    v = jnp.ones((m.shape[1],), jnp.float32) / jnp.sqrt(m.shape[1])
    for _ in range(n_iter):
        u = m @ v
        u = u / (jnp.linalg.norm(u) + 1e-12)
        v = m.T @ u
        v = v / (jnp.linalg.norm(v) + 1e-12)
    sigma = u @ (m @ v)
    return w / sigma


def init_params(key, img_channel, sentence):
    C, S = img_channel, sentence
    assert C % 2 == 0
    ks = jax.random.split(key, 9)

    # ---- raw (PyTorch-layout) parameters -------------------------------------
    w1 = _spectral_normalize(0.1 * jax.random.normal(ks[0], (C, C, 3, 3), jnp.float32))
    b1 = 0.1 * jax.random.normal(ks[1], (C,), jnp.float32)
    g1 = 1.0 + 0.1 * jax.random.normal(ks[2], (C,), jnp.float32)
    be1 = 0.1 * jax.random.normal(ks[3], (C,), jnp.float32)

    w2 = _spectral_normalize(0.1 * jax.random.normal(ks[4], (C, C + S, 3, 3), jnp.float32))
    b2 = 0.1 * jax.random.normal(ks[5], (C,), jnp.float32)
    g2 = 1.0 + 0.1 * jax.random.normal(ks[6], (C,), jnp.float32)
    be2 = 0.1 * jax.random.normal(ks[7], (C,), jnp.float32)

    w3 = _spectral_normalize(0.1 * jax.random.normal(ks[8], (1, C, 4, 4), jnp.float32))
    raw = dict(w1=w1, b1=b1, g1=g1, be1=be1, w2=w2, b2=b2, g2=g2, be2=be2, w3=w3)

    # ---- kernel-layout parameters ---------------------------------------------
    # stage 1: grouped conv as a block-diagonal HWIO weight -> im2col matrix.
    half = C // 2
    w1_hwio = jnp.zeros((3, 3, 2 * C, C), jnp.float32)
    w1_hwio = w1_hwio.at[:, :, :C, :half].set(jnp.transpose(w1[:half], (2, 3, 1, 0)))
    w1_hwio = w1_hwio.at[:, :, C:, half:].set(jnp.transpose(w1[half:], (2, 3, 1, 0)))
    w1_mat = w1_hwio.reshape(9 * 2 * C, C)            # row = (dy*3+dx)*2C + cin

    # stage 2: per-tap weights, split into conv-channel and text-channel halves.
    w2_hwio = jnp.transpose(w2, (2, 3, 1, 0))         # (3, 3, C+S, C)
    taps = [(dy, dx) for dy in range(3) for dx in range(3)]
    w2c = jnp.concatenate([w2_hwio[dy, dx, :C, :] for dy, dx in taps], axis=1)  # (C, 9C)
    w2t = jnp.concatenate([w2_hwio[dy, dx, C:, :] for dy, dx in taps], axis=1)  # (S, 9C)

    # final conv: row p = h*4 + w, col c.
    w3_rows = jnp.transpose(w3, (2, 3, 1, 0)).reshape(16, C)

    kparams = dict(w1=w1_mat, b1=b1.reshape(1, C), g1=g1.reshape(1, C),
                   be1=be1.reshape(1, C), w2c=w2c, w2t=w2t, b2=b2.reshape(1, C),
                   g2=g2.reshape(1, C), be2=be2.reshape(1, C), w3_rows=w3_rows)
    return kparams, raw


def text_image_matcher(params, img_feat, text_emb):
    """img_feat: (B, 2*C, H, W) NCHW; text_emb: (T, B, S). Returns (B,)."""
    B, C2, H, W = img_feat.shape
    C = C2 // 2
    S = text_emb.shape[-1]
    assert H % 4 == 0 and W % 4 == 0

    x = jnp.transpose(img_feat, (0, 2, 3, 1))                  # NHWC (B, H, W, 2C)

    # text: (T,B,S) -> (B,S,T) -> pad/crop to 16 (matches the PyTorch [1:17] crop)
    # -> rows ordered (b, p = i*4 + j).
    t = jnp.transpose(text_emb, (1, 2, 0))
    T = t.shape[-1]
    if T < 16:
        t = jnp.pad(t, ((0, 0), (0, 0), (0, 16 - T)))
    elif T > 16:
        t = t[:, :, 1:17]
    t2d = jnp.transpose(t, (0, 2, 1)).reshape(B * 16, S)       # (16B, S)

    # Shape-only constant matrices (fold pooling / conv-tap gather / batch
    # reduction into MXU matmuls inside the kernel).
    M1, M2 = B * H * W, 16 * B
    ph, pw = H // 4, W // 4

    r2 = jnp.arange(M2)
    b_r, p_r = r2 // 16, r2 % 16
    h_r, w_r = p_r // 4, p_r % 4

    c1 = jnp.arange(M1)
    b_c, hw_c = c1 // (H * W), c1 % (H * W)
    h_c, w_c = hw_c // W, hw_c % W
    pmat = ((b_r[:, None] == b_c[None, :]) &
            (h_r[:, None] == (h_c // ph)[None, :]) &
            (w_r[:, None] == (w_c // pw)[None, :])).astype(jnp.float32) / float(ph * pw)

    blocks = []
    for dy in range(3):
        for dx in range(3):
            hs, ws = h_r + dy - 1, w_r + dx - 1
            valid = (hs >= 0) & (hs < 4) & (ws >= 0) & (ws < 4)
            src = b_r * 16 + jnp.clip(hs, 0, 3) * 4 + jnp.clip(ws, 0, 3)
            blocks.append(((r2[None, :] == src[:, None]) & valid[:, None])
                          .astype(jnp.float32))
    mbig = jnp.concatenate(blocks, axis=1)                     # (16B, 9*16B)

    bsum = (jnp.arange(B)[:, None] == b_r[None, :]).astype(jnp.float32)   # (B, 16B)
    w3t = jnp.tile(params["w3_rows"], (B, 1))                  # (16B, C)

    out = pl.pallas_call(
        _matcher_kernel,
        out_shape=jax.ShapeDtypeStruct((B, 1), jnp.float32),
        in_specs=_vmem_specs(15),
        out_specs=pl.BlockSpec(memory_space=pltpu.MemorySpace.VMEM),
        scratch_shapes=[pltpu.VMEM((B, H, W, 9 * C2), jnp.float32)],
        compiler_params=pltpu.CompilerParams(vmem_limit_bytes=32 * 1024 * 1024),
    )(x, t2d, pmat, mbig, bsum,
      params["w1"], params["b1"], params["g1"], params["be1"],
      params["w2c"], params["w2t"], params["b2"], params["g2"], params["be2"],
      w3t)

    return out.reshape(-1)                                     # matches .view(-1)


# --------------------------- plain-JAX reference ---------------------------- #

def reference_forward(raw, img_feat, text_emb):
    """NCHW reference mirroring the PyTorch module (training-mode BN)."""
    B, C2, H, W = img_feat.shape
    C = C2 // 2

    def bn(v, g, b):
        mu = jnp.mean(v, axis=(0, 2, 3), keepdims=True)
        var = jnp.mean((v - mu) ** 2, axis=(0, 2, 3), keepdims=True)
        return ((v - mu) * jax.lax.rsqrt(var + EPS) * g.reshape(1, -1, 1, 1)
                + b.reshape(1, -1, 1, 1))

    def conv(v, w, pad, groups=1):
        return jax.lax.conv_general_dilated(
            v, w, (1, 1), ((pad, pad), (pad, pad)),
            dimension_numbers=("NCHW", "OIHW", "NCHW"),
            feature_group_count=groups, precision=jax.lax.Precision.HIGHEST)

    y = conv(img_feat, raw["w1"], 1, groups=2) + raw["b1"].reshape(1, C, 1, 1)
    y = bn(y, raw["g1"], raw["be1"])
    y = jnp.mean(y.reshape(B, C, 4, H // 4, 4, W // 4), axis=(3, 5))
    y = jnp.where(y > 0, y, NEG_SLOPE * y)

    t = jnp.transpose(text_emb, (1, 2, 0))
    T = t.shape[-1]
    if T < 16:
        t = jnp.pad(t, ((0, 0), (0, 0), (0, 16 - T)))
    elif T > 16:
        t = t[:, :, 1:17]
    t = t.reshape(B, -1, 4, 4)

    z = jnp.concatenate([y, t], axis=1)
    r = conv(z, raw["w2"], 1) + raw["b2"].reshape(1, C, 1, 1)
    r = bn(r, raw["g2"], raw["be2"])
    r = jnp.where(r > 0, r, NEG_SLOPE * r)
    return conv(r, raw["w3"], 0).reshape(-1)


if __name__ == "__main__":
    B, C, S, H, W, T = 2, 8, 8, 16, 16, 8   # img_channel=8, sentence=8

    key = jax.random.PRNGKey(0)
    k_img, k_txt, k_par = jax.random.split(key, 3)
    img_feat = jax.random.normal(k_img, (B, 2 * C, H, W), jnp.float32)  # NCHW
    text_emb = jax.random.normal(k_txt, (T, B, S), jnp.float32)         # (T, B, S)

    kparams, raw = init_params(k_par, C, S)

    fwd = jax.jit(text_image_matcher)
    out = jax.block_until_ready(fwd(kparams, img_feat, text_emb))

    assert out.shape == (B,)
    assert bool(jnp.all(jnp.isfinite(out)))

    ref = jax.block_until_ready(reference_forward(raw, img_feat, text_emb))
    assert jnp.allclose(out, ref, rtol=3e-3, atol=3e-3), (out, ref)

    print("KERNEL_OK")
</pallas_src>

<mosaic_0001>
module attributes {stable_mosaic.version = 11 : i64} {
  func.func @_matcher_kernel(%arg0: memref<2x16x16x16xf32, #tpu.memory_space<vmem>>, %arg1: memref<32x8xf32, #tpu.memory_space<vmem>>, %arg2: memref<32x512xf32, #tpu.memory_space<vmem>>, %arg3: memref<32x288xf32, #tpu.memory_space<vmem>>, %arg4: memref<2x32xf32, #tpu.memory_space<vmem>>, %arg5: memref<144x8xf32, #tpu.memory_space<vmem>>, %arg6: memref<1x8xf32, #tpu.memory_space<vmem>>, %arg7: memref<1x8xf32, #tpu.memory_space<vmem>>, %arg8: memref<1x8xf32, #tpu.memory_space<vmem>>, %arg9: memref<8x72xf32, #tpu.memory_space<vmem>>, %arg10: memref<8x72xf32, #tpu.memory_space<vmem>>, %arg11: memref<1x8xf32, #tpu.memory_space<vmem>>, %arg12: memref<1x8xf32, #tpu.memory_space<vmem>>, %arg13: memref<1x8xf32, #tpu.memory_space<vmem>>, %arg14: memref<32x8xf32, #tpu.memory_space<vmem>>, %arg15: memref<2x1xf32, #tpu.memory_space<vmem>>, %arg16: memref<2x16x16x144xf32, #tpu.memory_space<vmem>>) attributes {dimension_semantics = [], scalar_prefetch = 0 : i64, scratch_operands = 1 : i64, tpu.core_type = #tpu.core_type<tc>} {
    %cst = arith.constant 0.000000e+00 : f32
    %0 = vector.broadcast %cst : f32 to vector<2x16x16x144xf32>
    %c0 = arith.constant 0 : index
    %c0_0 = arith.constant 0 : index
    %c0_1 = arith.constant 0 : index
    %c0_2 = arith.constant 0 : index
    %1 = vector.load %arg16[%c0, %c0_0, %c0_1, %c0_2] : memref<2x16x16x144xf32, #tpu.memory_space<vmem>>, vector<2x16x16x144xf32>
    tpu.vector_store %arg16[%c0, %c0_0, %c0_1, %c0_2], %0 {strides = array<i32>} : memref<2x16x16x144xf32, #tpu.memory_space<vmem>>, vector<2x16x16x144xf32>,
    %c0_3 = arith.constant 0 : index
    %c0_4 = arith.constant 0 : index
    %c0_5 = arith.constant 0 : index
    %c0_6 = arith.constant 0 : index
    %2 = vector.load %arg0[%c0_3, %c0_4, %c0_5, %c0_6] : memref<2x16x16x16xf32, #tpu.memory_space<vmem>>, vector<2x15x15x16xf32>
    %c0_7 = arith.constant 0 : index
    %c1 = arith.constant 1 : index
    %c1_8 = arith.constant 1 : index
    %c0_9 = arith.constant 0 : index
    %3 = vector.load %arg16[%c0_7, %c1, %c1_8, %c0_9] : memref<2x16x16x144xf32, #tpu.memory_space<vmem>>, vector<2x15x15x16xf32>
    tpu.vector_store %arg16[%c0_7, %c1, %c1_8, %c0_9], %2 {strides = array<i32>} : memref<2x16x16x144xf32, #tpu.memory_space<vmem>>, vector<2x15x15x16xf32>,
    %c0_10 = arith.constant 0 : index
    %c0_11 = arith.constant 0 : index
    %c0_12 = arith.constant 0 : index
    %c0_13 = arith.constant 0 : index
    %4 = vector.load %arg0[%c0_10, %c0_11, %c0_12, %c0_13] : memref<2x16x16x16xf32, #tpu.memory_space<vmem>>, vector<2x15x16x16xf32>
    %c0_14 = arith.constant 0 : index
    %c1_15 = arith.constant 1 : index
    %c0_16 = arith.constant 0 : index
    %c16 = arith.constant 16 : index
    %5 = vector.load %arg16[%c0_14, %c1_15, %c0_16, %c16] : memref<2x16x16x144xf32, #tpu.memory_space<vmem>>, vector<2x15x16x16xf32>
    tpu.vector_store %arg16[%c0_14, %c1_15, %c0_16, %c16], %4 {strides = array<i32>} : memref<2x16x16x144xf32, #tpu.memory_space<vmem>>, vector<2x15x16x16xf32>,
    %c0_17 = arith.constant 0 : index
    %c0_18 = arith.constant 0 : index
    %c1_19 = arith.constant 1 : index
    %c0_20 = arith.constant 0 : index
    %6 = vector.load %arg0[%c0_17, %c0_18, %c1_19, %c0_20] : memref<2x16x16x16xf32, #tpu.memory_space<vmem>>, vector<2x15x15x16xf32>
    %c0_21 = arith.constant 0 : index
    %c1_22 = arith.constant 1 : index
    %c0_23 = arith.constant 0 : index
    %c32 = arith.constant 32 : index
    %7 = vector.load %arg16[%c0_21, %c1_22, %c0_23, %c32] : memref<2x16x16x144xf32, #tpu.memory_space<vmem>>, vector<2x15x15x16xf32>
    tpu.vector_store %arg16[%c0_21, %c1_22, %c0_23, %c32], %6 {strides = array<i32>} : memref<2x16x16x144xf32, #tpu.memory_space<vmem>>, vector<2x15x15x16xf32>,
    %c0_24 = arith.constant 0 : index
    %c0_25 = arith.constant 0 : index
    %c0_26 = arith.constant 0 : index
    %c0_27 = arith.constant 0 : index
    %8 = vector.load %arg0[%c0_24, %c0_25, %c0_26, %c0_27] : memref<2x16x16x16xf32, #tpu.memory_space<vmem>>, vector<2x16x15x16xf32>
    %c0_28 = arith.constant 0 : index
    %c0_29 = arith.constant 0 : index
    %c1_30 = arith.constant 1 : index
    %c48 = arith.constant 48 : index
    %9 = vector.load %arg16[%c0_28, %c0_29, %c1_30, %c48] : memref<2x16x16x144xf32, #tpu.memory_space<vmem>>, vector<2x16x15x16xf32>
    tpu.vector_store %arg16[%c0_28, %c0_29, %c1_30, %c48], %8 {strides = array<i32>} : memref<2x16x16x144xf32, #tpu.memory_space<vmem>>, vector<2x16x15x16xf32>,
    %c0_31 = arith.constant 0 : index
    %c0_32 = arith.constant 0 : index
    %c0_33 = arith.constant 0 : index
    %c0_34 = arith.constant 0 : index
    %10 = vector.load %arg0[%c0_31, %c0_32, %c0_33, %c0_34] : memref<2x16x16x16xf32, #tpu.memory_space<vmem>>, vector<2x16x16x16xf32>
    %c0_35 = arith.constant 0 : index
    %c0_36 = arith.constant 0 : index
    %c0_37 = arith.constant 0 : index
    %c64 = arith.constant 64 : index
    %11 = vector.load %arg16[%c0_35, %c0_36, %c0_37, %c64] : memref<2x16x16x144xf32, #tpu.memory_space<vmem>>, vector<2x16x16x16xf32>
    tpu.vector_store %arg16[%c0_35, %c0_36, %c0_37, %c64], %10 {strides = array<i32>} : memref<2x16x16x144xf32, #tpu.memory_space<vmem>>, vector<2x16x16x16xf32>,
    %c0_38 = arith.constant 0 : index
    %c0_39 = arith.constant 0 : index
    %c1_40 = arith.constant 1 : index
    %c0_41 = arith.constant 0 : index
    %12 = vector.load %arg0[%c0_38, %c0_39, %c1_40, %c0_41] : memref<2x16x16x16xf32, #tpu.memory_space<vmem>>, vector<2x16x15x16xf32>
    %c0_42 = arith.constant 0 : index
    %c0_43 = arith.constant 0 : index
    %c0_44 = arith.constant 0 : index
    %c80 = arith.constant 80 : index
    %13 = vector.load %arg16[%c0_42, %c0_43, %c0_44, %c80] : memref<2x16x16x144xf32, #tpu.memory_space<vmem>>, vector<2x16x15x16xf32>
    tpu.vector_store %arg16[%c0_42, %c0_43, %c0_44, %c80], %12 {strides = array<i32>} : memref<2x16x16x144xf32, #tpu.memory_space<vmem>>, vector<2x16x15x16xf32>,
    %c0_45 = arith.constant 0 : index
    %c1_46 = arith.constant 1 : index
    %c0_47 = arith.constant 0 : index
    %c0_48 = arith.constant 0 : index
    %14 = vector.load %arg0[%c0_45, %c1_46, %c0_47, %c0_48] : memref<2x16x16x16xf32, #tpu.memory_space<vmem>>, vector<2x15x15x16xf32>
    %c0_49 = arith.constant 0 : index
    %c0_50 = arith.constant 0 : index
    %c1_51 = arith.constant 1 : index
    %c96 = arith.constant 96 : index
    %15 = vector.load %arg16[%c0_49, %c0_50, %c1_51, %c96] : memref<2x16x16x144xf32, #tpu.memory_space<vmem>>, vector<2x15x15x16xf32>
    tpu.vector_store %arg16[%c0_49, %c0_50, %c1_51, %c96], %14 {strides = array<i32>} : memref<2x16x16x144xf32, #tpu.memory_space<vmem>>, vector<2x15x15x16xf32>,
    %c0_52 = arith.constant 0 : index
    %c1_53 = arith.constant 1 : index
    %c0_54 = arith.constant 0 : index
    %c0_55 = arith.constant 0 : index
    %16 = vector.load %arg0[%c0_52, %c1_53, %c0_54, %c0_55] : memref<2x16x16x16xf32, #tpu.memory_space<vmem>>, vector<2x15x16x16xf32>
    %c0_56 = arith.constant 0 : index
    %c0_57 = arith.constant 0 : index
    %c0_58 = arith.constant 0 : index
    %c112 = arith.constant 112 : index
    %17 = vector.load %arg16[%c0_56, %c0_57, %c0_58, %c112] : memref<2x16x16x144xf32, #tpu.memory_space<vmem>>, vector<2x15x16x16xf32>
    tpu.vector_store %arg16[%c0_56, %c0_57, %c0_58, %c112], %16 {strides = array<i32>} : memref<2x16x16x144xf32, #tpu.memory_space<vmem>>, vector<2x15x16x16xf32>,
    %c0_59 = arith.constant 0 : index
    %c1_60 = arith.constant 1 : index
    %c1_61 = arith.constant 1 : index
    %c0_62 = arith.constant 0 : index
    %18 = vector.load %arg0[%c0_59, %c1_60, %c1_61, %c0_62] : memref<2x16x16x16xf32, #tpu.memory_space<vmem>>, vector<2x15x15x16xf32>
    %c0_63 = arith.constant 0 : index
    %c0_64 = arith.constant 0 : index
    %c0_65 = arith.constant 0 : index
    %c128 = arith.constant 128 : index
    %19 = vector.load %arg16[%c0_63, %c0_64, %c0_65, %c128] : memref<2x16x16x144xf32, #tpu.memory_space<vmem>>, vector<2x15x15x16xf32>
    tpu.vector_store %arg16[%c0_63, %c0_64, %c0_65, %c128], %18 {strides = array<i32>} : memref<2x16x16x144xf32, #tpu.memory_space<vmem>>, vector<2x15x15x16xf32>,
    %c0_66 = arith.constant 0 : index
    %c0_67 = arith.constant 0 : index
    %c0_68 = arith.constant 0 : index
    %c0_69 = arith.constant 0 : index
    %20 = vector.load %arg16[%c0_66, %c0_67, %c0_68, %c0_69] : memref<2x16x16x144xf32, #tpu.memory_space<vmem>>, vector<2x16x16x144xf32>
    %21 = vector.shape_cast %20 : vector<2x16x16x144xf32> to vector<512x144xf32>
    %c0_70 = arith.constant 0 : index
    %c0_71 = arith.constant 0 : index
    %22 = vector.load %arg5[%c0_70, %c0_71] : memref<144x8xf32, #tpu.memory_space<vmem>>, vector<144x8xf32>
    %cst_72 = arith.constant dense<0.000000e+00> : vector<512x8xf32>
    %23 = tpu.matmul %21, %22, %cst_72 {dimension_numbers = #tpu.dot_dimension_numbers<[1], [0], [0], [1], [0, 0, 1, 1], [], []>} : vector<512x144xf32>, vector<144x8xf32>, vector<512x8xf32> -> vector<512x8xf32>
    %c0_73 = arith.constant 0 : index
    %c0_74 = arith.constant 0 : index
    %24 = vector.load %arg6[%c0_73, %c0_74] : memref<1x8xf32, #tpu.memory_space<vmem>>, vector<1x8xf32>
    %25 = vector.broadcast %24 : vector<1x8xf32> to vector<512x8xf32>
    %26 = arith.addf %23, %25 : vector<512x8xf32>
    %cst_75 = arith.constant dense<0.000000e+00> : vector<8xf32>
    %27 = vector.multi_reduction <add>, %26, %cst_75 [0] : vector<512x8xf32> to vector<8xf32>
    %28 = vector.shape_cast %27 : vector<8xf32> to vector<1x8xf32>
    %cst_76 = arith.constant 5.120000e+02 : f32
    %29 = vector.broadcast %cst_76 : f32 to vector<1x8xf32>
    %30 = arith.divf %28, %29 : vector<1x8xf32>
    %31 = arith.mulf %26, %26 : vector<512x8xf32>
    %cst_77 = arith.constant dense<0.000000e+00> : vector<8xf32>
    %32 = vector.multi_reduction <add>, %31, %cst_77 [0] : vector<512x8xf32> to vector<8xf32>
    %33 = vector.shape_cast %32 : vector<8xf32> to vector<1x8xf32>
    %cst_78 = arith.constant 5.120000e+02 : f32
    %34 = vector.broadcast %cst_78 : f32 to vector<1x8xf32>
    %35 = arith.divf %33, %34 : vector<1x8xf32>
    %36 = arith.mulf %30, %30 : vector<1x8xf32>
    %37 = arith.subf %35, %36 : vector<1x8xf32>
    %c0_79 = arith.constant 0 : index
    %c0_80 = arith.constant 0 : index
    %38 = vector.load %arg2[%c0_79, %c0_80] : memref<32x512xf32, #tpu.memory_space<vmem>>, vector<32x512xf32>
    %cst_81 = arith.constant dense<0.000000e+00> : vector<32x8xf32>
    %39 = tpu.matmul %38, %26, %cst_81 {dimension_numbers = #tpu.dot_dimension_numbers<[1], [0], [0], [1], [0, 0, 1, 1], [], []>} : vector<32x512xf32>, vector<512x8xf32>, vector<32x8xf32> -> vector<32x8xf32>
    %40 = vector.broadcast %30 : vector<1x8xf32> to vector<32x8xf32>
    %41 = arith.subf %39, %40 : vector<32x8xf32>
    %cst_82 = arith.constant 9.99999974E-6 : f32
    %42 = vector.broadcast %cst_82 : f32 to vector<1x8xf32>
    %43 = arith.addf %37, %42 : vector<1x8xf32>
    %44 = math.rsqrt %43 : vector<1x8xf32>
    %45 = vector.broadcast %44 : vector<1x8xf32> to vector<32x8xf32>
    %46 = arith.mulf %41, %45 : vector<32x8xf32>
    %c0_83 = arith.constant 0 : index
    %c0_84 = arith.constant 0 : index
    %47 = vector.load %arg7[%c0_83, %c0_84] : memref<1x8xf32, #tpu.memory_space<vmem>>, vector<1x8xf32>
    %48 = vector.broadcast %47 : vector<1x8xf32> to vector<32x8xf32>
    %49 = arith.mulf %46, %48 : vector<32x8xf32>
    %c0_85 = arith.constant 0 : index
    %c0_86 = arith.constant 0 : index
    %50 = vector.load %arg8[%c0_85, %c0_86] : memref<1x8xf32, #tpu.memory_space<vmem>>, vector<1x8xf32>
    %51 = vector.broadcast %50 : vector<1x8xf32> to vector<32x8xf32>
    %52 = arith.addf %49, %51 : vector<32x8xf32>
    %cst_87 = arith.constant 0.000000e+00 : f32
    %53 = vector.broadcast %cst_87 : f32 to vector<32x8xf32>
    %54 = arith.cmpf ogt, %52, %53 : vector<32x8xf32>
    %cst_88 = arith.constant 2.000000e-01 : f32
    %55 = vector.broadcast %cst_88 : f32 to vector<32x8xf32>
    %56 = arith.mulf %55, %52 : vector<32x8xf32>
    %57 = arith.select %54, %52, %56 : vector<32x8xi1>, vector<32x8xf32>
    %c0_89 = arith.constant 0 : index
    %c0_90 = arith.constant 0 : index
    %58 = vector.load %arg9[%c0_89, %c0_90] : memref<8x72xf32, #tpu.memory_space<vmem>>, vector<8x72xf32>
    %cst_91 = arith.constant dense<0.000000e+00> : vector<32x72xf32>
    %59 = tpu.matmul %57, %58, %cst_91 {dimension_numbers = #tpu.dot_dimension_numbers<[1], [0], [0], [1], [0, 0, 1, 1], [], []>} : vector<32x8xf32>, vector<8x72xf32>, vector<32x72xf32> -> vector<32x72xf32>
    %c0_92 = arith.constant 0 : index
    %c0_93 = arith.constant 0 : index
    %60 = vector.load %arg1[%c0_92, %c0_93] : memref<32x8xf32, #tpu.memory_space<vmem>>, vector<32x8xf32>
    %c0_94 = arith.constant 0 : index
    %c0_95 = arith.constant 0 : index
    %61 = vector.load %arg10[%c0_94, %c0_95] : memref<8x72xf32, #tpu.memory_space<vmem>>, vector<8x72xf32>
    %cst_96 = arith.constant dense<0.000000e+00> : vector<32x72xf32>
    %62 = tpu.matmul %60, %61, %cst_96 {dimension_numbers = #tpu.dot_dimension_numbers<[1], [0], [0], [1], [0, 0, 1, 1], [], []>} : vector<32x8xf32>, vector<8x72xf32>, vector<32x72xf32> -> vector<32x72xf32>
    %63 = arith.addf %59, %62 : vector<32x72xf32>
    %64 = vector.extract_strided_slice %63 {offsets = [0, 0], sizes = [32, 8], strides = [1, 1]} : vector<32x72xf32> to vector<32x8xf32>
    %65 = vector.extract_strided_slice %63 {offsets = [0, 8], sizes = [32, 8], strides = [1, 1]} : vector<32x72xf32> to vector<32x8xf32>
    %66 = vector.extract_strided_slice %63 {offsets = [0, 16], sizes = [32, 8], strides = [1, 1]} : vector<32x72xf32> to vector<32x8xf32>
    %67 = vector.extract_strided_slice %63 {offsets = [0, 24], sizes = [32, 8], strides = [1, 1]} : vector<32x72xf32> to vector<32x8xf32>
    %68 = vector.extract_strided_slice %63 {offsets = [0, 32], sizes = [32, 8], strides = [1, 1]} : vector<32x72xf32> to vector<32x8xf32>
    %69 = vector.extract_strided_slice %63 {offsets = [0, 40], sizes = [32, 8], strides = [1, 1]} : vector<32x72xf32> to vector<32x8xf32>
    %70 = vector.extract_strided_slice %63 {offsets = [0, 48], sizes = [32, 8], strides = [1, 1]} : vector<32x72xf32> to vector<32x8xf32>
    %71 = vector.extract_strided_slice %63 {offsets = [0, 56], sizes = [32, 8], strides = [1, 1]} : vector<32x72xf32> to vector<32x8xf32>
    %72 = vector.extract_strided_slice %63 {offsets = [0, 64], sizes = [32, 8], strides = [1, 1]} : vector<32x72xf32> to vector<32x8xf32>
    %73 = tpu.concatenate %64, %65, %66, %67, %68, %69, %70, %71, %72 in 0 : vector<32x8xf32>, vector<32x8xf32>, vector<32x8xf32>, vector<32x8xf32>, vector<32x8xf32>, vector<32x8xf32>, vector<32x8xf32>, vector<32x8xf32>, vector<32x8xf32> -> vector<288x8xf32>
    %c0_97 = arith.constant 0 : index
    %c0_98 = arith.constant 0 : index
    %74 = vector.load %arg3[%c0_97, %c0_98] : memref<32x288xf32, #tpu.memory_space<vmem>>, vector<32x288xf32>
    %cst_99 = arith.constant dense<0.000000e+00> : vector<32x8xf32>
    %75 = tpu.matmul %74, %73, %cst_99 {dimension_numbers = #tpu.dot_dimension_numbers<[1], [0], [0], [1], [0, 0, 1, 1], [], []>} : vector<32x288xf32>, vector<288x8xf32>, vector<32x8xf32> -> vector<32x8xf32>
    %c0_100 = arith.constant 0 : index
    %c0_101 = arith.constant 0 : index
    %76 = vector.load %arg11[%c0_100, %c0_101] : memref<1x8xf32, #tpu.memory_space<vmem>>, vector<1x8xf32>
    %77 = vector.broadcast %76 : vector<1x8xf32> to vector<32x8xf32>
    %78 = arith.addf %75, %77 : vector<32x8xf32>
    %cst_102 = arith.constant dense<0.000000e+00> : vector<8xf32>
    %79 = vector.multi_reduction <add>, %78, %cst_102 [0] : vector<32x8xf32> to vector<8xf32>
    %80 = vector.shape_cast %79 : vector<8xf32> to vector<1x8xf32>
    %cst_103 = arith.constant 3.200000e+01 : f32
    %81 = vector.broadcast %cst_103 : f32 to vector<1x8xf32>
    %82 = arith.divf %80, %81 : vector<1x8xf32>
    %83 = arith.mulf %78, %78 : vector<32x8xf32>
    %cst_104 = arith.constant dense<0.000000e+00> : vector<8xf32>
    %84 = vector.multi_reduction <add>, %83, %cst_104 [0] : vector<32x8xf32> to vector<8xf32>
    %85 = vector.shape_cast %84 : vector<8xf32> to vector<1x8xf32>
    %cst_105 = arith.constant 3.200000e+01 : f32
    %86 = vector.broadcast %cst_105 : f32 to vector<1x8xf32>
    %87 = arith.divf %85, %86 : vector<1x8xf32>
    %88 = arith.mulf %82, %82 : vector<1x8xf32>
    %89 = arith.subf %87, %88 : vector<1x8xf32>
    %90 = vector.broadcast %82 : vector<1x8xf32> to vector<32x8xf32>
    %91 = arith.subf %78, %90 : vector<32x8xf32>
    %cst_106 = arith.constant 9.99999974E-6 : f32
    %92 = vector.broadcast %cst_106 : f32 to vector<1x8xf32>
    %93 = arith.addf %89, %92 : vector<1x8xf32>
    %94 = math.rsqrt %93 : vector<1x8xf32>
    %95 = vector.broadcast %94 : vector<1x8xf32> to vector<32x8xf32>
    %96 = arith.mulf %91, %95 : vector<32x8xf32>
    %c0_107 = arith.constant 0 : index
    %c0_108 = arith.constant 0 : index
    %97 = vector.load %arg12[%c0_107, %c0_108] : memref<1x8xf32, #tpu.memory_space<vmem>>, vector<1x8xf32>
    %98 = vector.broadcast %97 : vector<1x8xf32> to vector<32x8xf32>
    %99 = arith.mulf %96, %98 : vector<32x8xf32>
    %c0_109 = arith.constant 0 : index
    %c0_110 = arith.constant 0 : index
    %100 = vector.load %arg13[%c0_109, %c0_110] : memref<1x8xf32, #tpu.memory_space<vmem>>, vector<1x8xf32>
    %101 = vector.broadcast %100 : vector<1x8xf32> to vector<32x8xf32>
    %102 = arith.addf %99, %101 : vector<32x8xf32>
    %cst_111 = arith.constant 0.000000e+00 : f32
    %103 = vector.broadcast %cst_111 : f32 to vector<32x8xf32>
    %104 = arith.cmpf ogt, %102, %103 : vector<32x8xf32>
    %cst_112 = arith.constant 2.000000e-01 : f32
    %105 = vector.broadcast %cst_112 : f32 to vector<32x8xf32>
    %106 = arith.mulf %105, %102 : vector<32x8xf32>
    %107 = arith.select %104, %102, %106 : vector<32x8xi1>, vector<32x8xf32>
    %c0_113 = arith.constant 0 : index
    %c0_114 = arith.constant 0 : index
    %108 = vector.load %arg14[%c0_113, %c0_114] : memref<32x8xf32, #tpu.memory_space<vmem>>, vector<32x8xf32>
    %109 = arith.mulf %107, %108 : vector<32x8xf32>
    %cst_115 = arith.constant dense<0.000000e+00> : vector<32xf32>
    %110 = vector.multi_reduction <add>, %109, %cst_115 [1] : vector<32x8xf32> to vector<32xf32>
    %111 = vector.shape_cast %110 : vector<32xf32> to vector<32x1xf32>
    %c0_116 = arith.constant 0 : index
    %c0_117 = arith.constant 0 : index
    %112 = vector.load %arg4[%c0_116, %c0_117] : memref<2x32xf32, #tpu.memory_space<vmem>>, vector<2x32xf32>
    %cst_118 = arith.constant dense<0.000000e+00> : vector<2x1xf32>
    %113 = tpu.matmul %112, %111, %cst_118 {dimension_numbers = #tpu.dot_dimension_numbers<[1], [0], [0], [1], [0, 0, 1, 1], [], []>} : vector<2x32xf32>, vector<32x1xf32>, vector<2x1xf32> -> vector<2x1xf32>
    %c0_119 = arith.constant 0 : index
    %c0_120 = arith.constant 0 : index
    %114 = vector.load %arg15[%c0_119, %c0_120] : memref<2x1xf32, #tpu.memory_space<vmem>>, vector<2x1xf32>
    tpu.vector_store %arg15[%c0_119, %c0_120], %113 {strides = array<i32>} : memref<2x1xf32, #tpu.memory_space<vmem>>, vector<2x1xf32>,
    return
  }
}

</mosaic_0001>

<llo_original>
// kernel: text_image_matcher.1
$region0: #{text_image_matcher.1}
  #allocation0 [shape = 'u32[]', space=smem, size = 0x4, offset = 0x4, fixed_abs, tag = 'smem constant byte address 0x4 - core index']
  #allocation1 [shape = 'u32[144,128]{1,0:T(1,128)}', space=vmem, size = 0x12000, scoped, tag = 'internal scratch']
  #allocation2 [shape = 'f32[2,16,16,144]{3,2,1,0:T(8,128)}', space=vmem, size = 0x80000, scoped, tag = 'scratch operand']
  %s0 = inlined_call_operand.vmem [shape: f32[2,16,16,16], index: 0, kind: input, shape index: {}]
  %s1 = inlined_call_operand.vmem [shape: f32[32,8], index: 1, kind: input, shape index: {}]
  %s2 = inlined_call_operand.vmem [shape: f32[32,512], index: 2, kind: input, shape index: {}]
  %s3 = inlined_call_operand.vmem [shape: f32[32,288], index: 3, kind: input, shape index: {}]
  %s4 = inlined_call_operand.vmem [shape: f32[2,32], index: 4, kind: input, shape index: {}]
  %s5 = inlined_call_operand.vmem [shape: f32[144,8], index: 5, kind: input, shape index: {}]
  %s6 = inlined_call_operand.vmem [shape: f32[1,8], index: 6, kind: input, shape index: {}]
  %s7 = inlined_call_operand.vmem [shape: f32[1,8], index: 7, kind: input, shape index: {}]
  %s8 = inlined_call_operand.vmem [shape: f32[1,8], index: 8, kind: input, shape index: {}]
  %s9 = inlined_call_operand.vmem [shape: f32[8,72], index: 9, kind: input, shape index: {}]
  %s10 = inlined_call_operand.vmem [shape: f32[8,72], index: 10, kind: input, shape index: {}]
  %s11 = inlined_call_operand.vmem [shape: f32[1,8], index: 11, kind: input, shape index: {}]
  %s12 = inlined_call_operand.vmem [shape: f32[1,8], index: 12, kind: input, shape index: {}]
  %s13 = inlined_call_operand.vmem [shape: f32[1,8], index: 13, kind: input, shape index: {}]
  %s14 = inlined_call_operand.vmem [shape: f32[32,8], index: 14, kind: input, shape index: {}]
  %s15 = inlined_call_operand.vmem [shape: f32[2,1], index: 15, kind: output, shape index: {}]
  %s16 = sld [smem:[#allocation0]]
  $region70: #{text_image_matcher.1} parent=0
    _
  %s18 = ssub.s32 1, %s16
  %s19 = scalar_select 0, %s18, %s16
  // Predicated region
  $region2: #{text_image_matcher.1} parent=0 // pred_check
    _
  $region3: #{text_image_matcher.1} parent=0 // pred_check_branch
    %21 = sbr.rel (0) target = $region5
  $region4: #{text_image_matcher.1} parent=0 // pred_region
    _
  $region5: #{text_image_matcher.1} parent=0 // pred_fallthru
    _
  // Predicated region
  $region6: #{text_image_matcher.1} parent=0 // pred_check
    _
  $region7: #{text_image_matcher.1} parent=0 // pred_check_branch
    %23 = sbr.rel (0) target = $region9
  $region8: #{text_image_matcher.1} parent=0 // pred_region
    _
  $region9: #{text_image_matcher.1} parent=0 // pred_fallthru
    _
  // Predicated region
  $region10: #{text_image_matcher.1} parent=0 // pred_check
    _
  $region11: #{text_image_matcher.1} parent=0 // pred_check_branch
    %25 = sbr.rel (0) target = $region13
  $region12: #{text_image_matcher.1} parent=0 // pred_region
    _
  $region13: #{text_image_matcher.1} parent=0 // pred_fallthru
    _
  // Predicated region
  $region14: #{text_image_matcher.1} parent=0 // pred_check
    _
  $region15: #{text_image_matcher.1} parent=0 // pred_check_branch
    %27 = sbr.rel (0) target = $region17
  $region16: #{text_image_matcher.1} parent=0 // pred_region
    _
  $region17: #{text_image_matcher.1} parent=0 // pred_fallthru
    _
  // Predicated region
  $region18: #{text_image_matcher.1} parent=0 // pred_check
    _
  $region19: #{text_image_matcher.1} parent=0 // pred_check_branch
    %29 = sbr.rel (0) target = $region21
  $region20: #{text_image_matcher.1} parent=0 // pred_region
    _
  $region21: #{text_image_matcher.1} parent=0 // pred_fallthru
    _
  // Predicated region
  $region22: #{text_image_matcher.1} parent=0 // pred_check
    _
  $region23: #{text_image_matcher.1} parent=0 // pred_check_branch
    %31 = sbr.rel (0) target = $region25
  $region24: #{text_image_matcher.1} parent=0 // pred_region
    _
  $region25: #{text_image_matcher.1} parent=0 // pred_fallthru
    _
  // Predicated region
  $region26: #{text_image_matcher.1} parent=0 // pred_check
    _
  $region27: #{text_image_matcher.1} parent=0 // pred_check_branch
    %33 = sbr.rel (0) target = $region29
  $region28: #{text_image_matcher.1} parent=0 // pred_region
    _
  $region29: #{text_image_matcher.1} parent=0 // pred_fallthru
    _
  // Predicated region
  $region30: #{text_image_matcher.1} parent=0 // pred_check
    _
  $region31: #{text_image_matcher.1} parent=0 // pred_check_branch
    %35 = sbr.rel (0) target = $region33
  $region32: #{text_image_matcher.1} parent=0 // pred_region
    _
  $region33: #{text_image_matcher.1} parent=0 // pred_fallthru
    _
  // Predicated region
  $region34: #{text_image_matcher.1} parent=0 // pred_check
    _
  $region35: #{text_image_matcher.1} parent=0 // pred_check_branch
    %37 = sbr.rel (0) target = $region37
  $region36: #{text_image_matcher.1} parent=0 // pred_region
    _
  $region37: #{text_image_matcher.1} parent=0 // pred_fallthru
    _
  // Predicated region
  $region38: #{text_image_matcher.1} parent=0 // pred_check
    _
  $region39: #{text_image_matcher.1} parent=0 // pred_check_branch
    %39 = sbr.rel (0) target = $region41
  $region40: #{text_image_matcher.1} parent=0 // pred_region
    _
  $region41: #{text_image_matcher.1} parent=0 // pred_fallthru
    _
  // Predicated region
  $region42: #{text_image_matcher.1} parent=0 // pred_check
    _
  $region43: #{text_image_matcher.1} parent=0 // pred_check_branch
    %41 = sbr.rel (0) target = $region45
  $region44: #{text_image_matcher.1} parent=0 // pred_region
    _
  $region45: #{text_image_matcher.1} parent=0 // pred_fallthru
    _
  // Predicated region
  $region46: #{text_image_matcher.1} parent=0 // pred_check
    _
  $region47: #{text_image_matcher.1} parent=0 // pred_check_branch
    %43 = sbr.rel (0) target = $region49
  $region48: #{text_image_matcher.1} parent=0 // pred_region
    _
  $region49: #{text_image_matcher.1} parent=0 // pred_fallthru
    _
  // Predicated region
  $region50: #{text_image_matcher.1} parent=0 // pred_check
    _
  $region51: #{text_image_matcher.1} parent=0 // pred_check_branch
    %45 = sbr.rel (0) target = $region53
  $region52: #{text_image_matcher.1} parent=0 // pred_region
    _
  $region53: #{text_image_matcher.1} parent=0 // pred_fallthru
    _
  // Predicated region
  $region54: #{text_image_matcher.1} parent=0 // pred_check
    _
  $region55: #{text_image_matcher.1} parent=0 // pred_check_branch
    %47 = sbr.rel (0) target = $region57
  $region56: #{text_image_matcher.1} parent=0 // pred_region
    _
  $region57: #{text_image_matcher.1} parent=0 // pred_fallthru
    _
  // Predicated region
  $region58: #{text_image_matcher.1} parent=0 // pred_check
    _
  $region59: #{text_image_matcher.1} parent=0 // pred_check_branch
    %49 = sbr.rel (0) target = $region61
  $region60: #{text_image_matcher.1} parent=0 // pred_region
    _
  $region61: #{text_image_matcher.1} parent=0 // pred_fallthru
    _
  %50 = vst [vmem:[#allocation2] sm:$0xff] 0.0
  %vm51 = vcmask 130048
  %52 = vst.msk [vmem:[#allocation2 + $0x8] sm:$0xff] %vm51, 0.0
  %53 = vst [vmem:[#allocation2 + $0x10] sm:$0xff] 0.0
  %54 = vst.msk [vmem:[#allocation2 + $0x18] sm:$0xff] %vm51, 0.0
  %55 = vst [vmem:[#allocation2 + $0x20] sm:$0xff] 0.0
  %56 = vst.msk [vmem:[#allocation2 + $0x28] sm:$0xff] %vm51, 0.0
  %57 = vst [vmem:[#allocation2 + $0x30] sm:$0xff] 0.0
  %58 = vst.msk [vmem:[#allocation2 + $0x38] sm:$0xff] %vm51, 0.0
  %59 = vst [vmem:[#allocation2 + $0x40] sm:$0xff] 0.0
  %60 = vst.msk [vmem:[#allocation2 + $0x48] sm:$0xff] %vm51, 0.0
  %61 = vst [vmem:[#allocation2 + $0x50] sm:$0xff] 0.0
  %62 = vst.msk [vmem:[#allocation2 + $0x58] sm:$0xff] %vm51, 0.0
  %63 = vst [vmem:[#allocation2 + $0x60] sm:$0xff] 0.0
  %64 = vst.msk [vmem:[#allocation2 + $0x68] sm:$0xff] %vm51, 0.0
  %65 = vst [vmem:[#allocation2 + $0x70] sm:$0xff] 0.0
  %66 = vst.msk [vmem:[#allocation2 + $0x78] sm:$0xff] %vm51, 0.0
  %67 = vst [vmem:[#allocation2 + $0x80] sm:$0xff] 0.0
  %68 = vst.msk [vmem:[#allocation2 + $0x88] sm:$0xff] %vm51, 0.0
  %69 = vst [vmem:[#allocation2 + $0x90] sm:$0xff] 0.0
  %70 = vst.msk [vmem:[#allocation2 + $0x98] sm:$0xff] %vm51, 0.0
  %71 = vst [vmem:[#allocation2 + $0xa0] sm:$0xff] 0.0
  %72 = vst.msk [vmem:[#allocation2 + $0xa8] sm:$0xff] %vm51, 0.0
  %73 = vst [vmem:[#allocation2 + $0xb0] sm:$0xff] 0.0
  %74 = vst.msk [vmem:[#allocation2 + $0xb8] sm:$0xff] %vm51, 0.0
  %75 = vst [vmem:[#allocation2 + $0xc0] sm:$0xff] 0.0
  %76 = vst.msk [vmem:[#allocation2 + $0xc8] sm:$0xff] %vm51, 0.0
  %77 = vst [vmem:[#allocation2 + $0xd0] sm:$0xff] 0.0
  %78 = vst.msk [vmem:[#allocation2 + $0xd8] sm:$0xff] %vm51, 0.0
  %79 = vst [vmem:[#allocation2 + $0xe0] sm:$0xff] 0.0
  %80 = vst.msk [vmem:[#allocation2 + $0xe8] sm:$0xff] %vm51, 0.0
  %81 = vst [vmem:[#allocation2 + $0xf0] sm:$0xff] 0.0
  %82 = vst.msk [vmem:[#allocation2 + $0xf8] sm:$0xff] %vm51, 0.0
  %83 = vst [vmem:[#allocation2 + $0x100] sm:$0xff] 0.0
  %84 = vst.msk [vmem:[#allocation2 + $0x108] sm:$0xff] %vm51, 0.0
  %85 = vst [vmem:[#allocation2 + $0x110] sm:$0xff] 0.0
  %86 = vst.msk [vmem:[#allocation2 + $0x118] sm:$0xff] %vm51, 0.0
  %87 = vst [vmem:[#allocation2 + $0x120] sm:$0xff] 0.0
  %88 = vst.msk [vmem:[#allocation2 + $0x128] sm:$0xff] %vm51, 0.0
  %89 = vst [vmem:[#allocation2 + $0x130] sm:$0xff] 0.0
  %90 = vst.msk [vmem:[#allocation2 + $0x138] sm:$0xff] %vm51, 0.0
  %91 = vst [vmem:[#allocation2 + $0x140] sm:$0xff] 0.0
  %92 = vst.msk [vmem:[#allocation2 + $0x148] sm:$0xff] %vm51, 0.0
  %93 = vst [vmem:[#allocation2 + $0x150] sm:$0xff] 0.0
  %94 = vst.msk [vmem:[#allocation2 + $0x158] sm:$0xff] %vm51, 0.0
  %95 = vst [vmem:[#allocation2 + $0x160] sm:$0xff] 0.0
  %96 = vst.msk [vmem:[#allocation2 + $0x168] sm:$0xff] %vm51, 0.0
  %97 = vst [vmem:[#allocation2 + $0x170] sm:$0xff] 0.0
  %98 = vst.msk [vmem:[#allocation2 + $0x178] sm:$0xff] %vm51, 0.0
  %99 = vst [vmem:[#allocation2 + $0x180] sm:$0xff] 0.0
  %100 = vst.msk [vmem:[#allocation2 + $0x188] sm:$0xff] %vm51, 0.0
  %101 = vst [vmem:[#allocation2 + $0x190] sm:$0xff] 0.0
  %102 = vst.msk [vmem:[#allocation2 + $0x198] sm:$0xff] %vm51, 0.0
  %103 = vst [vmem:[#allocation2 + $0x1a0] sm:$0xff] 0.0
  %104 = vst.msk [vmem:[#allocation2 + $0x1a8] sm:$0xff] %vm51, 0.0
  %105 = vst [vmem:[#allocation2 + $0x1b0] sm:$0xff] 0.0
  %106 = vst.msk [vmem:[#allocation2 + $0x1b8] sm:$0xff] %vm51, 0.0
  %107 = vst [vmem:[#allocation2 + $0x1c0] sm:$0xff] 0.0
  %108 = vst.msk [vmem:[#allocation2 + $0x1c8] sm:$0xff] %vm51, 0.0
  %109 = vst [vmem:[#allocation2 + $0x1d0] sm:$0xff] 0.0
  %110 = vst.msk [vmem:[#allocation2 + $0x1d8] sm:$0xff] %vm51, 0.0
  %111 = vst [vmem:[#allocation2 + $0x1e0] sm:$0xff] 0.0
  %112 = vst.msk [vmem:[#allocation2 + $0x1e8] sm:$0xff] %vm51, 0.0
  %113 = vst [vmem:[#allocation2 + $0x1f0] sm:$0xff] 0.0
  %114 = vst.msk [vmem:[#allocation2 + $0x1f8] sm:$0xff] %vm51, 0.0
  %115 = vst [vmem:[#allocation2 + $0x200] sm:$0xff] 0.0
  %116 = vst.msk [vmem:[#allocation2 + $0x208] sm:$0xff] %vm51, 0.0
  %117 = vst [vmem:[#allocation2 + $0x210] sm:$0xff] 0.0
  %118 = vst.msk [vmem:[#allocation2 + $0x218] sm:$0xff] %vm51, 0.0
  %119 = vst [vmem:[#allocation2 + $0x220] sm:$0xff] 0.0
  %120 = vst.msk [vmem:[#allocation2 + $0x228] sm:$0xff] %vm51, 0.0
  %121 = vst [vmem:[#allocation2 + $0x230] sm:$0xff] 0.0
  %122 = vst.msk [vmem:[#allocation2 + $0x238] sm:$0xff] %vm51, 0.0
  %123 = vst [vmem:[#allocation2 + $0x240] sm:$0xff] 0.0
  %124 = vst.msk [vmem:[#allocation2 + $0x248] sm:$0xff] %vm51, 0.0
  %125 = vst [vmem:[#allocation2 + $0x250] sm:$0xff] 0.0
  %126 = vst.msk [vmem:[#allocation2 + $0x258] sm:$0xff] %vm51, 0.0
  %127 = vst [vmem:[#allocation2 + $0x260] sm:$0xff] 0.0
  %128 = vst.msk [vmem:[#allocation2 + $0x268] sm:$0xff] %vm51, 0.0
  %129 = vst [vmem:[#allocation2 + $0x270] sm:$0xff] 0.0
  %130 = vst.msk [vmem:[#allocation2 + $0x278] sm:$0xff] %vm51, 0.0
  %131 = vst [vmem:[#allocation2 + $0x280] sm:$0xff] 0.0
  %132 = vst.msk [vmem:[#allocation2 + $0x288] sm:$0xff] %vm51, 0.0
  %133 = vst [vmem:[#allocation2 + $0x290] sm:$0xff] 0.0
  %134 = vst.msk [vmem:[#allocation2 + $0x298] sm:$0xff] %vm51, 0.0
  %135 = vst [vmem:[#allocation2 + $0x2a0] sm:$0xff] 0.0
  %136 = vst.msk [vmem:[#allocation2 + $0x2a8] sm:$0xff] %vm51, 0.0
  %137 = vst [vmem:[#allocation2 + $0x2b0] sm:$0xff] 0.0
  %138 = vst.msk [vmem:[#allocation2 + $0x2b8] sm:$0xff] %vm51, 0.0
  %139 = vst [vmem:[#allocation2 + $0x2c0] sm:$0xff] 0.0
  %140 = vst.msk [vmem:[#allocation2 + $0x2c8] sm:$0xff] %vm51, 0.0
  %141 = vst [vmem:[#allocation2 + $0x2d0] sm:$0xff] 0.0
  %142 = vst.msk [vmem:[#allocation2 + $0x2d8] sm:$0xff] %vm51, 0.0
  %143 = vst [vmem:[#allocation2 + $0x2e0] sm:$0xff] 0.0
  %144 = vst.msk [vmem:[#allocation2 + $0x2e8] sm:$0xff] %vm51, 0.0
  %145 = vst [vmem:[#allocation2 + $0x2f0] sm:$0xff] 0.0
  %146 = vst.msk [vmem:[#allocation2 + $0x2f8] sm:$0xff] %vm51, 0.0
  %147 = vst [vmem:[#allocation2 + $0x300] sm:$0xff] 0.0
  %148 = vst.msk [vmem:[#allocation2 + $0x308] sm:$0xff] %vm51, 0.0
  %149 = vst [vmem:[#allocation2 + $0x310] sm:$0xff] 0.0
  %150 = vst.msk [vmem:[#allocation2 + $0x318] sm:$0xff] %vm51, 0.0
  %151 = vst [vmem:[#allocation2 + $0x320] sm:$0xff] 0.0
  %152 = vst.msk [vmem:[#allocation2 + $0x328] sm:$0xff] %vm51, 0.0
  %153 = vst [vmem:[#allocation2 + $0x330] sm:$0xff] 0.0
  %154 = vst.msk [vmem:[#allocation2 + $0x338] sm:$0xff] %vm51, 0.0
  %155 = vst [vmem:[#allocation2 + $0x340] sm:$0xff] 0.0
  %156 = vst.msk [vmem:[#allocation2 + $0x348] sm:$0xff] %vm51, 0.0
  %157 = vst [vmem:[#allocation2 + $0x350] sm:$0xff] 0.0
  %158 = vst.msk [vmem:[#allocation2 + $0x358] sm:$0xff] %vm51, 0.0
  %159 = vst [vmem:[#allocation2 + $0x360] sm:$0xff] 0.0
  %160 = vst.msk [vmem:[#allocation2 + $0x368] sm:$0xff] %vm51, 0.0
  %161 = vst [vmem:[#allocation2 + $0x370] sm:$0xff] 0.0
  %162 = vst.msk [vmem:[#allocation2 + $0x378] sm:$0xff] %vm51, 0.0
  %163 = vst [vmem:[#allocation2 + $0x380] sm:$0xff] 0.0
  %164 = vst.msk [vmem:[#allocation2 + $0x388] sm:$0xff] %vm51, 0.0
  %165 = vst [vmem:[#allocation2 + $0x390] sm:$0xff] 0.0
  %166 = vst.msk [vmem:[#allocation2 + $0x398] sm:$0xff] %vm51, 0.0
  %167 = vst [vmem:[#allocation2 + $0x3a0] sm:$0xff] 0.0
  %168 = vst.msk [vmem:[#allocation2 + $0x3a8] sm:$0xff] %vm51, 0.0
  %169 = vst [vmem:[#allocation2 + $0x3b0] sm:$0xff] 0.0
  %170 = vst.msk [vmem:[#allocation2 + $0x3b8] sm:$0xff] %vm51, 0.0
  %171 = vst [vmem:[#allocation2 + $0x3c0] sm:$0xff] 0.0
  %172 = vst.msk [vmem:[#allocation2 + $0x3c8] sm:$0xff] %vm51, 0.0
  %173 = vst [vmem:[#allocation2 + $0x3d0] sm:$0xff] 0.0
  %174 = vst.msk [vmem:[#allocation2 + $0x3d8] sm:$0xff] %vm51, 0.0
  %175 = vst [vmem:[#allocation2 + $0x3e0] sm:$0xff] 0.0
  %176 = vst.msk [vmem:[#allocation2 + $0x3e8] sm:$0xff] %vm51, 0.0
  %177 = vst [vmem:[#allocation2 + $0x3f0] sm:$0xff] 0.0
  %178 = vst.msk [vmem:[#allocation2 + $0x3f8] sm:$0xff] %vm51, 0.0
  %v179 = vld [vmem:[%s0] sm:$0xff]
  %v180 = vld [vmem:[%s0 + $0x8] sm:$0x7f]
  %v181 = vld [vmem:[%s0 + $0x10] sm:$0xff]
  %v182 = vld [vmem:[%s0 + $0x18] sm:$0x7f]
  %v183 = vld [vmem:[%s0 + $0x20] sm:$0xff]
  %v184 = vld [vmem:[%s0 + $0x28] sm:$0x7f]
  %v185 = vld [vmem:[%s0 + $0x30] sm:$0xff]
  %v186 = vld [vmem:[%s0 + $0x38] sm:$0x7f]
  %v187 = vld [vmem:[%s0 + $0x40] sm:$0xff]
  %v188 = vld [vmem:[%s0 + $0x48] sm:$0x7f]
  %v189 = vld [vmem:[%s0 + $0x50] sm:$0xff]
  %v190 = vld [vmem:[%s0 + $0x58] sm:$0x7f]
  %v191 = vld [vmem:[%s0 + $0x60] sm:$0xff]
  %v192 = vld [vmem:[%s0 + $0x68] sm:$0x7f]
  %v193 = vld [vmem:[%s0 + $0x70] sm:$0xff]
  %v194 = vld [vmem:[%s0 + $0x78] sm:$0x7f]
  %v195 = vld [vmem:[%s0 + $0x80] sm:$0xff]
  %v196 = vld [vmem:[%s0 + $0x88] sm:$0x7f]
  %v197 = vld [vmem:[%s0 + $0x90] sm:$0xff]
  %v198 = vld [vmem:[%s0 + $0x98] sm:$0x7f]
  %v199 = vld [vmem:[%s0 + $0xa0] sm:$0xff]
  %v200 = vld [vmem:[%s0 + $0xa8] sm:$0x7f]
  %v201 = vld [vmem:[%s0 + $0xb0] sm:$0xff]
  %v202 = vld [vmem:[%s0 + $0xb8] sm:$0x7f]
  %v203 = vld [vmem:[%s0 + $0xc0] sm:$0xff]
  %v204 = vld [vmem:[%s0 + $0xc8] sm:$0x7f]
  %v205 = vld [vmem:[%s0 + $0xd0] sm:$0xff]
  %v206 = vld [vmem:[%s0 + $0xd8] sm:$0x7f]
  %v207 = vld [vmem:[%s0 + $0xe0] sm:$0xff]
  %v208 = vld [vmem:[%s0 + $0xe8] sm:$0x7f]
  %v209 = vld [vmem:[%s0 + $0x100] sm:$0xff]
  %v210 = vld [vmem:[%s0 + $0x108] sm:$0x7f]
  %v211 = vld [vmem:[%s0 + $0x110] sm:$0xff]
  %v212 = vld [vmem:[%s0 + $0x118] sm:$0x7f]
  %v213 = vld [vmem:[%s0 + $0x120] sm:$0xff]
  %v214 = vld [vmem:[%s0 + $0x128] sm:$0x7f]
  %v215 = vld [vmem:[%s0 + $0x130] sm:$0xff]
  %v216 = vld [vmem:[%s0 + $0x138] sm:$0x7f]
  %v217 = vld [vmem:[%s0 + $0x140] sm:$0xff]
  %v218 = vld [vmem:[%s0 + $0x148] sm:$0x7f]
  %v219 = vld [vmem:[%s0 + $0x150] sm:$0xff]
  %v220 = vld [vmem:[%s0 + $0x158] sm:$0x7f]
  %v221 = vld [vmem:[%s0 + $0x160] sm:$0xff]
  %v222 = vld [vmem:[%s0 + $0x168] sm:$0x7f]
  %v223 = vld [vmem:[%s0 + $0x170] sm:$0xff]
  %v224 = vld [vmem:[%s0 + $0x178] sm:$0x7f]
  %v225 = vld [vmem:[%s0 + $0x180] sm:$0xff]
  %v226 = vld [vmem:[%s0 + $0x188] sm:$0x7f]
  %v227 = vld [vmem:[%s0 + $0x190] sm:$0xff]
  %v228 = vld [vmem:[%s0 + $0x198] sm:$0x7f]
  %v229 = vld [vmem:[%s0 + $0x1a0] sm:$0xff]
  %v230 = vld [vmem:[%s0 + $0x1a8] sm:$0x7f]
  %v231 = vld [vmem:[%s0 + $0x1b0] sm:$0xff]
  %v232 = vld [vmem:[%s0 + $0x1b8] sm:$0x7f]
  %v233 = vld [vmem:[%s0 + $0x1c0] sm:$0xff]
  %v234 = vld [vmem:[%s0 + $0x1c8] sm:$0x7f]
  %v235 = vld [vmem:[%s0 + $0x1d0] sm:$0xff]
  %v236 = vld [vmem:[%s0 + $0x1d8] sm:$0x7f]
  %v237 = vld [vmem:[%s0 + $0x1e0] sm:$0xff]
  %v238 = vld [vmem:[%s0 + $0x1e8] sm:$0x7f]
  %vm299 = vcmask 1040384
  %v300 = vrot.slane %v179, 7
  %v301 = vrot.slane %v180, 7
  %v302 = vsel %vm299, %v300, %v301
  %v303 = vrot.slane %v181, 7
  %v304 = vrot.slane %v182, 7
  %v305 = vsel %vm299, %v303, %v304
  %v306 = vrot.slane %v183, 7
  %v307 = vrot.slane %v184, 7
  %v308 = vsel %vm299, %v306, %v307
  %v309 = vrot.slane %v185, 7
  %v310 = vrot.slane %v186, 7
  %v311 = vsel %vm299, %v309, %v310
  %v312 = vrot.slane %v187, 7
  %v313 = vrot.slane %v188, 7
  %v314 = vsel %vm299, %v312, %v313
  %v315 = vrot.slane %v189, 7
  %v316 = vrot.slane %v190, 7
  %v317 = vsel %vm299, %v315, %v316
  %v318 = vrot.slane %v191, 7
  %v319 = vrot.slane %v192, 7
  %v320 = vsel %vm299, %v318, %v319
  %v321 = vrot.slane %v193, 7
  %v322 = vrot.slane %v194, 7
  %v323 = vsel %vm299, %v321, %v322
  %v324 = vrot.slane %v195, 7
  %v325 = vrot.slane %v196, 7
  %v326 = vsel %vm299, %v324, %v325
  %v327 = vrot.slane %v197, 7
  %v328 = vrot.slane %v198, 7
  %v329 = vsel %vm299, %v327, %v328
  %v330 = vrot.slane %v199, 7
  %v331 = vrot.slane %v200, 7
  %v332 = vsel %vm299, %v330, %v331
  %v333 = vrot.slane %v201, 7
  %v334 = vrot.slane %v202, 7
  %v335 = vsel %vm299, %v333, %v334
  %v336 = vrot.slane %v203, 7
  %v337 = vrot.slane %v204, 7
  %v338 = vsel %vm299, %v336, %v337
  %v339 = vrot.slane %v205, 7
  %v340 = vrot.slane %v206, 7
  %v341 = vsel %vm299, %v339, %v340
  %v342 = vrot.slane %v207, 7
  %v343 = vrot.slane %v208, 7
  %v344 = vsel %vm299, %v342, %v343
  %v345 = vrot.slane %v209, 7
  %v346 = vrot.slane %v210, 7
  %v347 = vsel %vm299, %v345, %v346
  %v348 = vrot.slane %v211, 7
  %v349 = vrot.slane %v212, 7
  %v350 = vsel %vm299, %v348, %v349
  %v351 = vrot.slane %v213, 7
  %v352 = vrot.slane %v214, 7
  %v353 = vsel %vm299, %v351, %v352
  %v354 = vrot.slane %v215, 7
  %v355 = vrot.slane %v216, 7
  %v356 = vsel %vm299, %v354, %v355
  %v357 = vrot.slane %v217, 7
  %v358 = vrot.slane %v218, 7
  %v359 = vsel %vm299, %v357, %v358
  %v360 = vrot.slane %v219, 7
  %v361 = vrot.slane %v220, 7
  %v362 = vsel %vm299, %v360, %v361
  %v363 = vrot.slane %v221, 7
  %v364 = vrot.slane %v222, 7
  %v365 = vsel %vm299, %v363, %v364
  %v366 = vrot.slane %v223, 7
  %v367 = vrot.slane %v224, 7
  %v368 = vsel %vm299, %v366, %v367
  %v369 = vrot.slane %v225, 7
  %v370 = vrot.slane %v226, 7
  %v371 = vsel %vm299, %v369, %v370
  %v372 = vrot.slane %v227, 7
  %v373 = vrot.slane %v228, 7
  %v374 = vsel %vm299, %v372, %v373
  %v375 = vrot.slane %v229, 7
  %v376 = vrot.slane %v230, 7
  %v377 = vsel %vm299, %v375, %v376
  %v378 = vrot.slane %v231, 7
  %v379 = vrot.slane %v232, 7
  %v380 = vsel %vm299, %v378, %v379
  %v381 = vrot.slane %v233, 7
  %v382 = vrot.slane %v234, 7
  %v383 = vsel %vm299, %v381, %v382
  %v384 = vrot.slane %v235, 7
  %v385 = vrot.slane %v236, 7
  %v386 = vsel %vm299, %v384, %v385
  %v387 = vrot.slane %v237, 7
  %v388 = vrot.slane %v238, 7
  %v389 = vsel %vm299, %v387, %v388
  %s450 = scalar_lea.vmem [#allocation2], 32
  %vm451 = vcmask 130049
  %452 = vst.msk [vmem:[%s450] sm:$0xfe] %vm451, %v300
  %453 = vst.msk [vmem:[%s450 + $0x10] sm:$0xff] %vm51, %v302
  %454 = vst.msk [vmem:[%s450 + $0x20] sm:$0xfe] %vm451, %v303
  %455 = vst.msk [vmem:[%s450 + $0x30] sm:$0xff] %vm51, %v305
  %456 = vst.msk [vmem:[%s450 + $0x40] sm:$0xfe] %vm451, %v306
  %457 = vst.msk [vmem:[%s450 + $0x50] sm:$0xff] %vm51, %v308
  %458 = vst.msk [vmem:[%s450 + $0x60] sm:$0xfe] %vm451, %v309
  %459 = vst.msk [vmem:[%s450 + $0x70] sm:$0xff] %vm51, %v311
  %460 = vst.msk [vmem:[%s450 + $0x80] sm:$0xfe] %vm451, %v312
  %461 = vst.msk [vmem:[%s450 + $0x90] sm:$0xff] %vm51, %v314
  %462 = vst.msk [vmem:[%s450 + $0xa0] sm:$0xfe] %vm451, %v315
  %463 = vst.msk [vmem:[%s450 + $0xb0] sm:$0xff] %vm51, %v317
  %464 = vst.msk [vmem:[%s450 + $0xc0] sm:$0xfe] %vm451, %v318
  %465 = vst.msk [vmem:[%s450 + $0xd0] sm:$0xff] %vm51, %v320
  %466 = vst.msk [vmem:[%s450 + $0xe0] sm:$0xfe] %vm451, %v321
  %467 = vst.msk [vmem:[%s450 + $0xf0] sm:$0xff] %vm51, %v323
  %468 = vst.msk [vmem:[%s450 + $0x100] sm:$0xfe] %vm451, %v324
  %469 = vst.msk [vmem:[%s450 + $0x110] sm:$0xff] %vm51, %v326
  %470 = vst.msk [vmem:[%s450 + $0x120] sm:$0xfe] %vm451, %v327
  %471 = vst.msk [vmem:[%s450 + $0x130] sm:$0xff] %vm51, %v329
  %472 = vst.msk [vmem:[%s450 + $0x140] sm:$0xfe] %vm451, %v330
  %473 = vst.msk [vmem:[%s450 + $0x150] sm:$0xff] %vm51, %v332
  %474 = vst.msk [vmem:[%s450 + $0x160] sm:$0xfe] %vm451, %v333
  %475 = vst.msk [vmem:[%s450 + $0x170] sm:$0xff] %vm51, %v335
  %476 = vst.msk [vmem:[%s450 + $0x180] sm:$0xfe] %vm451, %v336
  %477 = vst.msk [vmem:[%s450 + $0x190] sm:$0xff] %vm51, %v338
  %478 = vst.msk [vmem:[%s450 + $0x1a0] sm:$0xfe] %vm451, %v339
  %479 = vst.msk [vmem:[%s450 + $0x1b0] sm:$0xff] %vm51, %v341
  %480 = vst.msk [vmem:[%s450 + $0x1c0] sm:$0xfe] %vm451, %v342
  %481 = vst.msk [vmem:[%s450 + $0x1d0] sm:$0xff] %vm51, %v344
  %482 = vst.msk [vmem:[%s450 + $0x200] sm:$0xfe] %vm451, %v345
  %483 = vst.msk [vmem:[%s450 + $0x210] sm:$0xff] %vm51, %v347
  %484 = vst.msk [vmem:[%s450 + $0x220] sm:$0xfe] %vm451, %v348
  %485 = vst.msk [vmem:[%s450 + $0x230] sm:$0xff] %vm51, %v350
  %486 = vst.msk [vmem:[%s450 + $0x240] sm:$0xfe] %vm451, %v351
  %487 = vst.msk [vmem:[%s450 + $0x250] sm:$0xff] %vm51, %v353
  %488 = vst.msk [vmem:[%s450 + $0x260] sm:$0xfe] %vm451, %v354
  %489 = vst.msk [vmem:[%s450 + $0x270] sm:$0xff] %vm51, %v356
  %490 = vst.msk [vmem:[%s450 + $0x280] sm:$0xfe] %vm451, %v357
  %491 = vst.msk [vmem:[%s450 + $0x290] sm:$0xff] %vm51, %v359
  %492 = vst.msk [vmem:[%s450 + $0x2a0] sm:$0xfe] %vm451, %v360
  %493 = vst.msk [vmem:[%s450 + $0x2b0] sm:$0xff] %vm51, %v362
  %494 = vst.msk [vmem:[%s450 + $0x2c0] sm:$0xfe] %vm451, %v363
  %495 = vst.msk [vmem:[%s450 + $0x2d0] sm:$0xff] %vm51, %v365
  %496 = vst.msk [vmem:[%s450 + $0x2e0] sm:$0xfe] %vm451, %v366
  %497 = vst.msk [vmem:[%s450 + $0x2f0] sm:$0xff] %vm51, %v368
  %498 = vst.msk [vmem:[%s450 + $0x300] sm:$0xfe] %vm451, %v369
  %499 = vst.msk [vmem:[%s450 + $0x310] sm:$0xff] %vm51, %v371
  %500 = vst.msk [vmem:[%s450 + $0x320] sm:$0xfe] %vm451, %v372
  %501 = vst.msk [vmem:[%s450 + $0x330] sm:$0xff] %vm51, %v374
  %502 = vst.msk [vmem:[%s450 + $0x340] sm:$0xfe] %vm451, %v375
  %503 = vst.msk [vmem:[%s450 + $0x350] sm:$0xff] %vm51, %v377
  %504 = vst.msk [vmem:[%s450 + $0x360] sm:$0xfe] %vm451, %v378
  %505 = vst.msk [vmem:[%s450 + $0x370] sm:$0xff] %vm51, %v380
  %506 = vst.msk [vmem:[%s450 + $0x380] sm:$0xfe] %vm451, %v381
  %507 = vst.msk [vmem:[%s450 + $0x390] sm:$0xff] %vm51, %v383
  %508 = vst.msk [vmem:[%s450 + $0x3a0] sm:$0xfe] %vm451, %v384
  %509 = vst.msk [vmem:[%s450 + $0x3b0] sm:$0xff] %vm51, %v386
  %510 = vst.msk [vmem:[%s450 + $0x3c0] sm:$0xfe] %vm451, %v387
  %511 = vst.msk [vmem:[%s450 + $0x3d0] sm:$0xff] %vm51, %v389
  %v512 = vld [vmem:[%s0] sm:$0xff]
  %v513 = vld [vmem:[%s0 + $0x8] sm:$0xff]
  %v514 = vld [vmem:[%s0 + $0x10] sm:$0xff]
  %v515 = vld [vmem:[%s0 + $0x18] sm:$0xff]
  %v516 = vld [vmem:[%s0 + $0x20] sm:$0xff]
  %v517 = vld [vmem:[%s0 + $0x28] sm:$0xff]
  %v518 = vld [vmem:[%s0 + $0x30] sm:$0xff]
  %v519 = vld [vmem:[%s0 + $0x38] sm:$0xff]
  %v520 = vld [vmem:[%s0 + $0x40] sm:$0xff]
  %v521 = vld [vmem:[%s0 + $0x48] sm:$0xff]
  %v522 = vld [vmem:[%s0 + $0x50] sm:$0xff]
  %v523 = vld [vmem:[%s0 + $0x58] sm:$0xff]
  %v524 = vld [vmem:[%s0 + $0x60] sm:$0xff]
  %v525 = vld [vmem:[%s0 + $0x68] sm:$0xff]
  %v526 = vld [vmem:[%s0 + $0x70] sm:$0xff]
  %v527 = vld [vmem:[%s0 + $0x78] sm:$0xff]
  %v528 = vld [vmem:[%s0 + $0x80] sm:$0xff]
  %v529 = vld [vmem:[%s0 + $0x88] sm:$0xff]
  %v530 = vld [vmem:[%s0 + $0x90] sm:$0xff]
  %v531 = vld [vmem:[%s0 + $0x98] sm:$0xff]
  %v532 = vld [vmem:[%s0 + $0xa0] sm:$0xff]
  %v533 = vld [vmem:[%s0 + $0xa8] sm:$0xff]
  %v534 = vld [vmem:[%s0 + $0xb0] sm:$0xff]
  %v535 = vld [vmem:[%s0 + $0xb8] sm:$0xff]
  %v536 = vld [vmem:[%s0 + $0xc0] sm:$0xff]
  %v537 = vld [vmem:[%s0 + $0xc8] sm:$0xff]
  %v538 = vld [vmem:[%s0 + $0xd0] sm:$0xff]
  %v539 = vld [vmem:[%s0 + $0xd8] sm:$0xff]
  %v540 = vld [vmem:[%s0 + $0xe0] sm:$0xff]
  %v541 = vld [vmem:[%s0 + $0xe8] sm:$0xff]
  %v542 = vld [vmem:[%s0 + $0x100] sm:$0xff]
  %v543 = vld [vmem:[%s0 + $0x108] sm:$0xff]
  %v544 = vld [vmem:[%s0 + $0x110] sm:$0xff]
  %v545 = vld [vmem:[%s0 + $0x118] sm:$0xff]
  %v546 = vld [vmem:[%s0 + $0x120] sm:$0xff]
  %v547 = vld [vmem:[%s0 + $0x128] sm:$0xff]
  %v548 = vld [vmem:[%s0 + $0x130] sm:$0xff]
  %v549 = vld [vmem:[%s0 + $0x138] sm:$0xff]
  %v550 = vld [vmem:[%s0 + $0x140] sm:$0xff]
  %v551 = vld [vmem:[%s0 + $0x148] sm:$0xff]
  %v552 = vld [vmem:[%s0 + $0x150] sm:$0xff]
  %v553 = vld [vmem:[%s0 + $0x158] sm:$0xff]
  %v554 = vld [vmem:[%s0 + $0x160] sm:$0xff]
  %v555 = vld [vmem:[%s0 + $0x168] sm:$0xff]
  %v556 = vld [vmem:[%s0 + $0x170] sm:$0xff]
  %v557 = vld [vmem:[%s0 + $0x178] sm:$0xff]
  %v558 = vld [vmem:[%s0 + $0x180] sm:$0xff]
  %v559 = vld [vmem:[%s0 + $0x188] sm:$0xff]
  %v560 = vld [vmem:[%s0 + $0x190] sm:$0xff]
  %v561 = vld [vmem:[%s0 + $0x198] sm:$0xff]
  %v562 = vld [vmem:[%s0 + $0x1a0] sm:$0xff]
  %v563 = vld [vmem:[%s0 + $0x1a8] sm:$0xff]
  %v564 = vld [vmem:[%s0 + $0x1b0] sm:$0xff]
  %v565 = vld [vmem:[%s0 + $0x1b8] sm:$0xff]
  %v566 = vld [vmem:[%s0 + $0x1c0] sm:$0xff]
  %v567 = vld [vmem:[%s0 + $0x1c8] sm:$0xff]
  %v568 = vld [vmem:[%s0 + $0x1d0] sm:$0xff]
  %v569 = vld [vmem:[%s0 + $0x1d8] sm:$0xff]
  %v570 = vld [vmem:[%s0 + $0x1e0] sm:$0xff]
  %v571 = vld [vmem:[%s0 + $0x1e8] sm:$0xff]
  %632 = vrot.lane.b32.xlu0 %v512, 16
  %v633 = vpop.permute.xlu0 %632
  %634 = vrot.lane.b32.xlu0 %v513, 16
  %v635 = vpop.permute.xlu0 %634
  %636 = vrot.lane.b32.xlu0 %v514, 16
  %v637 = vpop.permute.xlu0 %636
  %638 = vrot.lane.b32.xlu0 %v515, 16
  %v639 = vpop.permute.xlu0 %638
  %640 = vrot.lane.b32.xlu0 %v516, 16
  %v641 = vpop.permute.xlu0 %640
  %642 = vrot.lane.b32.xlu0 %v517, 16
  %v643 = vpop.permute.xlu0 %642
  %644 = vrot.lane.b32.xlu0 %v518, 16
  %v645 = vpop.permute.xlu0 %644
  %646 = vrot.lane.b32.xlu0 %v519, 16
  %v647 = vpop.permute.xlu0 %646
  %648 = vrot.lane.b32.xlu0 %v520, 16
  %v649 = vpop.permute.xlu0 %648
  %650 = vrot.lane.b32.xlu0 %v521, 16
  %v651 = vpop.permute.xlu0 %650
  %652 = vrot.lane.b32.xlu0 %v522, 16
  %v653 = vpop.permute.xlu0 %652
  %654 = vrot.lane.b32.xlu0 %v523, 16
  %v655 = vpop.permute.xlu0 %654
  %656 = vrot.lane.b32.xlu0 %v524, 16
  %v657 = vpop.permute.xlu0 %656
  %658 = vrot.lane.b32.xlu0 %v525, 16
  %v659 = vpop.permute.xlu0 %658
  %660 = vrot.lane.b32.xlu0 %v526, 16
  %v661 = vpop.permute.xlu0 %660
  %662 = vrot.lane.b32.xlu0 %v527, 16
  %v663 = vpop.permute.xlu0 %662
  %664 = vrot.lane.b32.xlu0 %v528, 16
  %v665 = vpop.permute.xlu0 %664
  %666 = vrot.lane.b32.xlu0 %v529, 16
  %v667 = vpop.permute.xlu0 %666
  %668 = vrot.lane.b32.xlu0 %v530, 16
  %v669 = vpop.permute.xlu0 %668
  %670 = vrot.lane.b32.xlu0 %v531, 16
  %v671 = vpop.permute.xlu0 %670
  %672 = vrot.lane.b32.xlu0 %v532, 16
  %v673 = vpop.permute.xlu0 %672
  %674 = vrot.lane.b32.xlu0 %v533, 16
  %v675 = vpop.permute.xlu0 %674
  %676 = vrot.lane.b32.xlu0 %v534, 16
  %v677 = vpop.permute.xlu0 %676
  %678 = vrot.lane.b32.xlu0 %v535, 16
  %v679 = vpop.permute.xlu0 %678
  %680 = vrot.lane.b32.xlu0 %v536, 16
  %v681 = vpop.permute.xlu0 %680
  %682 = vrot.lane.b32.xlu0 %v537, 16
  %v683 = vpop.permute.xlu0 %682
  %684 = vrot.lane.b32.xlu0 %v538, 16
  %v685 = vpop.permute.xlu0 %684
  %686 = vrot.lane.b32.xlu0 %v539, 16
  %v687 = vpop.permute.xlu0 %686
  %688 = vrot.lane.b32.xlu0 %v540, 16
  %v689 = vpop.permute.xlu0 %688
  %690 = vrot.lane.b32.xlu0 %v541, 16
  %v691 = vpop.permute.xlu0 %690
  %692 = vrot.lane.b32.xlu0 %v542, 16
  %v693 = vpop.permute.xlu0 %692
  %694 = vrot.lane.b32.xlu0 %v543, 16
  %v695 = vpop.permute.xlu0 %694
  %696 = vrot.lane.b32.xlu0 %v544, 16
  %v697 = vpop.permute.xlu0 %696
  %698 = vrot.lane.b32.xlu0 %v545, 16
  %v699 = vpop.permute.xlu0 %698
  %700 = vrot.lane.b32.xlu0 %v546, 16
  %v701 = vpop.permute.xlu0 %700
  %702 = vrot.lane.b32.xlu0 %v547, 16
  %v703 = vpop.permute.xlu0 %702
  %704 = vrot.lane.b32.xlu0 %v548, 16
  %v705 = vpop.permute.xlu0 %704
  %706 = vrot.lane.b32.xlu0 %v549, 16
  %v707 = vpop.permute.xlu0 %706
  %708 = vrot.lane.b32.xlu0 %v550, 16
  %v709 = vpop.permute.xlu0 %708
  %710 = vrot.lane.b32.xlu0 %v551, 16
  %v711 = vpop.permute.xlu0 %710
  %712 = vrot.lane.b32.xlu0 %v552, 16
  %v713 = vpop.permute.xlu0 %712
  %714 = vrot.lane.b32.xlu0 %v553, 16
  %v715 = vpop.permute.xlu0 %714
  %716 = vrot.lane.b32.xlu0 %v554, 16
  %v717 = vpop.permute.xlu0 %716
  %718 = vrot.lane.b32.xlu0 %v555, 16
  %v719 = vpop.permute.xlu0 %718
  %720 = vrot.lane.b32.xlu0 %v556, 16
  %v721 = vpop.permute.xlu0 %720
  %722 = vrot.lane.b32.xlu0 %v557, 16
  %v723 = vpop.permute.xlu0 %722
  %724 = vrot.lane.b32.xlu0 %v558, 16
  %v725 = vpop.permute.xlu0 %724
  %726 = vrot.lane.b32.xlu0 %v559, 16
  %v727 = vpop.permute.xlu0 %726
  %728 = vrot.lane.b32.xlu0 %v560, 16
  %v729 = vpop.permute.xlu0 %728
  %730 = vrot.lane.b32.xlu0 %v561, 16
  %v731 = vpop.permute.xlu0 %730
  %732 = vrot.lane.b32.xlu0 %v562, 16
  %v733 = vpop.permute.xlu0 %732
  %734 = vrot.lane.b32.xlu0 %v563, 16
  %v735 = vpop.permute.xlu0 %734
  %736 = vrot.lane.b32.xlu0 %v564, 16
  %v737 = vpop.permute.xlu0 %736
  %738 = vrot.lane.b32.xlu0 %v565, 16
  %v739 = vpop.permute.xlu0 %738
  %740 = vrot.lane.b32.xlu0 %v566, 16
  %v741 = vpop.permute.xlu0 %740
  %742 = vrot.lane.b32.xlu0 %v567, 16
  %v743 = vpop.permute.xlu0 %742
  %744 = vrot.lane.b32.xlu0 %v568, 16
  %v745 = vpop.permute.xlu0 %744
  %746 = vrot.lane.b32.xlu0 %v569, 16
  %v747 = vpop.permute.xlu0 %746
  %748 = vrot.lane.b32.xlu0 %v570, 16
  %v749 = vpop.permute.xlu0 %748
  %750 = vrot.lane.b32.xlu0 %v571, 16
  %v751 = vpop.permute.xlu0 %750
  %vm812 = vcmask 261248
  %813 = vst.msk [vmem:[%s450] sm:$0xff] %vm812, %v633
  %814 = vst.msk [vmem:[%s450 + $0x10] sm:$0xff] %vm812, %v635
  %815 = vst.msk [vmem:[%s450 + $0x20] sm:$0xff] %vm812, %v637
  %816 = vst.msk [vmem:[%s450 + $0x30] sm:$0xff] %vm812, %v639
  %817 = vst.msk [vmem:[%s450 + $0x40] sm:$0xff] %vm812, %v641
  %818 = vst.msk [vmem:[%s450 + $0x50] sm:$0xff] %vm812, %v643
  %819 = vst.msk [vmem:[%s450 + $0x60] sm:$0xff] %vm812, %v645
  %820 = vst.msk [vmem:[%s450 + $0x70] sm:$0xff] %vm812, %v647
  %821 = vst.msk [vmem:[%s450 + $0x80] sm:$0xff] %vm812, %v649
  %822 = vst.msk [vmem:[%s450 + $0x90] sm:$0xff] %vm812, %v651
  %823 = vst.msk [vmem:[%s450 + $0xa0] sm:$0xff] %vm812, %v653
  %824 = vst.msk [vmem:[%s450 + $0xb0] sm:$0xff] %vm812, %v655
  %825 = vst.msk [vmem:[%s450 + $0xc0] sm:$0xff] %vm812, %v657
  %826 = vst.msk [vmem:[%s450 + $0xd0] sm:$0xff] %vm812, %v659
  %827 = vst.msk [vmem:[%s450 + $0xe0] sm:$0xff] %vm812, %v661
  %828 = vst.msk [vmem:[%s450 + $0xf0] sm:$0xff] %vm812, %v663
  %829 = vst.msk [vmem:[%s450 + $0x100] sm:$0xff] %vm812, %v665
  %830 = vst.msk [vmem:[%s450 + $0x110] sm:$0xff] %vm812, %v667
  %831 = vst.msk [vmem:[%s450 + $0x120] sm:$0xff] %vm812, %v669
  %832 = vst.msk [vmem:[%s450 + $0x130] sm:$0xff] %vm812, %v671
  %833 = vst.msk [vmem:[%s450 + $0x140] sm:$0xff] %vm812, %v673
  %834 = vst.msk [vmem:[%s450 + $0x150] sm:$0xff] %vm812, %v675
  %835 = vst.msk [vmem:[%s450 + $0x160] sm:$0xff] %vm812, %v677
  %836 = vst.msk [vmem:[%s450 + $0x170] sm:$0xff] %vm812, %v679
  %837 = vst.msk [vmem:[%s450 + $0x180] sm:$0xff] %vm812, %v681
  %838 = vst.msk [vmem:[%s450 + $0x190] sm:$0xff] %vm812, %v683
  %839 = vst.msk [vmem:[%s450 + $0x1a0] sm:$0xff] %vm812, %v685
  %840 = vst.msk [vmem:[%s450 + $0x1b0] sm:$0xff] %vm812, %v687
  %841 = vst.msk [vmem:[%s450 + $0x1c0] sm:$0xff] %vm812, %v689
  %842 = vst.msk [vmem:[%s450 + $0x1d0] sm:$0xff] %vm812, %v691
  %843 = vst.msk [vmem:[%s450 + $0x200] sm:$0xff] %vm812, %v693
  %844 = vst.msk [vmem:[%s450 + $0x210] sm:$0xff] %vm812, %v695
  %845 = vst.msk [vmem:[%s450 + $0x220] sm:$0xff] %vm812, %v697
  %846 = vst.msk [vmem:[%s450 + $0x230] sm:$0xff] %vm812, %v699
  %847 = vst.msk [vmem:[%s450 + $0x240] sm:$0xff] %vm812, %v701
  %848 = vst.msk [vmem:[%s450 + $0x250] sm:$0xff] %vm812, %v703
  %849 = vst.msk [vmem:[%s450 + $0x260] sm:$0xff] %vm812, %v705
  %850 = vst.msk [vmem:[%s450 + $0x270] sm:$0xff] %vm812, %v707
  %851 = vst.msk [vmem:[%s450 + $0x280] sm:$0xff] %vm812, %v709
  %852 = vst.msk [vmem:[%s450 + $0x290] sm:$0xff] %vm812, %v711
  %853 = vst.msk [vmem:[%s450 + $0x2a0] sm:$0xff] %vm812, %v713
  %854 = vst.msk [vmem:[%s450 + $0x2b0] sm:$0xff] %vm812, %v715
  %855 = vst.msk [vmem:[%s450 + $0x2c0] sm:$0xff] %vm812, %v717
  %856 = vst.msk [vmem:[%s450 + $0x2d0] sm:$0xff] %vm812, %v719
  %857 = vst.msk [vmem:[%s450 + $0x2e0] sm:$0xff] %vm812, %v721
  %858 = vst.msk [vmem:[%s450 + $0x2f0] sm:$0xff] %vm812, %v723
  %859 = vst.msk [vmem:[%s450 + $0x300] sm:$0xff] %vm812, %v725
  %860 = vst.msk [vmem:[%s450 + $0x310] sm:$0xff] %vm812, %v727
  %861 = vst.msk [vmem:[%s450 + $0x320] sm:$0xff] %vm812, %v729
  %862 = vst.msk [vmem:[%s450 + $0x330] sm:$0xff] %vm812, %v731
  %863 = vst.msk [vmem:[%s450 + $0x340] sm:$0xff] %vm812, %v733
  %864 = vst.msk [vmem:[%s450 + $0x350] sm:$0xff] %vm812, %v735
  %865 = vst.msk [vmem:[%s450 + $0x360] sm:$0xff] %vm812, %v737
  %866 = vst.msk [vmem:[%s450 + $0x370] sm:$0xff] %vm812, %v739
  %867 = vst.msk [vmem:[%s450 + $0x380] sm:$0xff] %vm812, %v741
  %868 = vst.msk [vmem:[%s450 + $0x390] sm:$0xff] %vm812, %v743
  %869 = vst.msk [vmem:[%s450 + $0x3a0] sm:$0xff] %vm812, %v745
  %870 = vst.msk [vmem:[%s450 + $0x3b0] sm:$0xff] %vm812, %v747
  %871 = vst.msk [vmem:[%s450 + $0x3c0] sm:$0xff] %vm812, %v749
  %872 = vst.msk [vmem:[%s450 + $0x3d0] sm:$0xff] %vm812, %v751
  %v873 = vld [vmem:[%s0 + $0x1] sm:$0xff]
  %v874 = vld [vmem:[%s0 + $0x9] sm:$0x7f]
  %v875 = vld [vmem:[%s0 + $0x11] sm:$0xff]
  %v876 = vld [vmem:[%s0 + $0x19] sm:$0x7f]
  %v877 = vld [vmem:[%s0 + $0x21] sm:$0xff]
  %v878 = vld [vmem:[%s0 + $0x29] sm:$0x7f]
  %v879 = vld [vmem:[%s0 + $0x31] sm:$0xff]
  %v880 = vld [vmem:[%s0 + $0x39] sm:$0x7f]
  %v881 = vld [vmem:[%s0 + $0x41] sm:$0xff]
  %v882 = vld [vmem:[%s0 + $0x49] sm:$0x7f]
  %v883 = vld [vmem:[%s0 + $0x51] sm:$0xff]
  %v884 = vld [vmem:[%s0 + $0x59] sm:$0x7f]
  %v885 = vld [vmem:[%s0 + $0x61] sm:$0xff]
  %v886 = vld [vmem:[%s0 + $0x69] sm:$0x7f]
  %v887 = vld [vmem:[%s0 + $0x71] sm:$0xff]
  %v888 = vld [vmem:[%s0 + $0x79] sm:$0x7f]
  %v889 = vld [vmem:[%s0 + $0x81] sm:$0xff]
  %v890 = vld [vmem:[%s0 + $0x89] sm:$0x7f]
  %v891 = vld [vmem:[%s0 + $0x91] sm:$0xff]
  %v892 = vld [vmem:[%s0 + $0x99] sm:$0x7f]
  %v893 = vld [vmem:[%s0 + $0xa1] sm:$0xff]
  %v894 = vld [vmem:[%s0 + $0xa9] sm:$0x7f]
  %v895 = vld [vmem:[%s0 + $0xb1] sm:$0xff]
  %v896 = vld [vmem:[%s0 + $0xb9] sm:$0x7f]
  %v897 = vld [vmem:[%s0 + $0xc1] sm:$0xff]
  %v898 = vld [vmem:[%s0 + $0xc9] sm:$0x7f]
  %v899 = vld [vmem:[%s0 + $0xd1] sm:$0xff]
  %v900 = vld [vmem:[%s0 + $0xd9] sm:$0x7f]
  %v901 = vld [vmem:[%s0 + $0xe1] sm:$0xff]
  %v902 = vld [vmem:[%s0 + $0xe9] sm:$0x7f]
  %v903 = vld [vmem:[%s0 + $0x101] sm:$0xff]
  %v904 = vld [vmem:[%s0 + $0x109] sm:$0x7f]
  %v905 = vld [vmem:[%s0 + $0x111] sm:$0xff]
  %v906 = vld [vmem:[%s0 + $0x119] sm:$0x7f]
  %v907 = vld [vmem:[%s0 + $0x121] sm:$0xff]
  %v908 = vld [vmem:[%s0 + $0x129] sm:$0x7f]
  %v909 = vld [vmem:[%s0 + $0x131] sm:$0xff]
  %v910 = vld [vmem:[%s0 + $0x139] sm:$0x7f]
  %v911 = vld [vmem:[%s0 + $0x141] sm:$0xff]
  %v912 = vld [vmem:[%s0 + $0x149] sm:$0x7f]
  %v913 = vld [vmem:[%s0 + $0x151] sm:$0xff]
  %v914 = vld [vmem:[%s0 + $0x159] sm:$0x7f]
  %v915 = vld [vmem:[%s0 + $0x161] sm:$0xff]
  %v916 = vld [vmem:[%s0 + $0x169] sm:$0x7f]
  %v917 = vld [vmem:[%s0 + $0x171] sm:$0xff]
  %v918 = vld [vmem:[%s0 + $0x179] sm:$0x7f]
  %v919 = vld [vmem:[%s0 + $0x181] sm:$0xff]
  %v920 = vld [vmem:[%s0 + $0x189] sm:$0x7f]
  %v921 = vld [vmem:[%s0 + $0x191] sm:$0xff]
  %v922 = vld [vmem:[%s0 + $0x199] sm:$0x7f]
  %v923 = vld [vmem:[%s0 + $0x1a1] sm:$0xff]
  %v924 = vld [vmem:[%s0 + $0x1a9] sm:$0x7f]
  %v925 = vld [vmem:[%s0 + $0x1b1] sm:$0xff]
  %v926 = vld [vmem:[%s0 + $0x1b9] sm:$0x7f]
  %v927 = vld [vmem:[%s0 + $0x1c1] sm:$0xff]
  %v928 = vld [vmem:[%s0 + $0x1c9] sm:$0x7f]
  %v929 = vld [vmem:[%s0 + $0x1d1] sm:$0xff]
  %v930 = vld [vmem:[%s0 + $0x1d9] sm:$0x7f]
  %v931 = vld [vmem:[%s0 + $0x1e1] sm:$0xff]
  %v932 = vld [vmem:[%s0 + $0x1e9] sm:$0x7f]
  %993 = vrot.lane.b32.xlu0 %v873, 32
  %v994 = vpop.permute.xlu0 %993
  %995 = vrot.lane.b32.xlu0 %v874, 32
  %v996 = vpop.permute.xlu0 %995
  %997 = vrot.lane.b32.xlu0 %v875, 32
  %v998 = vpop.permute.xlu0 %997
  %999 = vrot.lane.b32.xlu0 %v876, 32
  %v1000 = vpop.permute.xlu0 %999
  %1001 = vrot.lane.b32.xlu0 %v877, 32
  %v1002 = vpop.permute.xlu0 %1001
  %1003 = vrot.lane.b32.xlu0 %v878, 32
  %v1004 = vpop.permute.xlu0 %1003
  %1005 = vrot.lane.b32.xlu0 %v879, 32
  %v1006 = vpop.permute.xlu0 %1005
  %1007 = vrot.lane.b32.xlu0 %v880, 32
  %v1008 = vpop.permute.xlu0 %1007
  %1009 = vrot.lane.b32.xlu0 %v881, 32
  %v1010 = vpop.permute.xlu0 %1009
  %1011 = vrot.lane.b32.xlu0 %v882, 32
  %v1012 = vpop.permute.xlu0 %1011
  %1013 = vrot.lane.b32.xlu0 %v883, 32
  %v1014 = vpop.permute.xlu0 %1013
  %1015 = vrot.lane.b32.xlu0 %v884, 32
  %v1016 = vpop.permute.xlu0 %1015
  %1017 = vrot.lane.b32.xlu0 %v885, 32
  %v1018 = vpop.permute.xlu0 %1017
  %1019 = vrot.lane.b32.xlu0 %v886, 32
  %v1020 = vpop.permute.xlu0 %1019
  %1021 = vrot.lane.b32.xlu0 %v887, 32
  %v1022 = vpop.permute.xlu0 %1021
  %1023 = vrot.lane.b32.xlu0 %v888, 32
  %v1024 = vpop.permute.xlu0 %1023
  %1025 = vrot.lane.b32.xlu0 %v889, 32
  %v1026 = vpop.permute.xlu0 %1025
  %1027 = vrot.lane.b32.xlu0 %v890, 32
  %v1028 = vpop.permute.xlu0 %1027
  %1029 = vrot.lane.b32.xlu0 %v891, 32
  %v1030 = vpop.permute.xlu0 %1029
  %1031 = vrot.lane.b32.xlu0 %v892, 32
  %v1032 = vpop.permute.xlu0 %1031
  %1033 = vrot.lane.b32.xlu0 %v893, 32
  %v1034 = vpop.permute.xlu0 %1033
  %1035 = vrot.lane.b32.xlu0 %v894, 32
  %v1036 = vpop.permute.xlu0 %1035
  %1037 = vrot.lane.b32.xlu0 %v895, 32
  %v1038 = vpop.permute.xlu0 %1037
  %1039 = vrot.lane.b32.xlu0 %v896, 32
  %v1040 = vpop.permute.xlu0 %1039
  %1041 = vrot.lane.b32.xlu0 %v897, 32
  %v1042 = vpop.permute.xlu0 %1041
  %1043 = vrot.lane.b32.xlu0 %v898, 32
  %v1044 = vpop.permute.xlu0 %1043
  %1045 = vrot.lane.b32.xlu0 %v899, 32
  %v1046 = vpop.permute.xlu0 %1045
  %1047 = vrot.lane.b32.xlu0 %v900, 32
  %v1048 = vpop.permute.xlu0 %1047
  %1049 = vrot.lane.b32.xlu0 %v901, 32
  %v1050 = vpop.permute.xlu0 %1049
  %1051 = vrot.lane.b32.xlu0 %v902, 32
  %v1052 = vpop.permute.xlu0 %1051
  %1053 = vrot.lane.b32.xlu0 %v903, 32
  %v1054 = vpop.permute.xlu0 %1053
  %1055 = vrot.lane.b32.xlu0 %v904, 32
  %v1056 = vpop.permute.xlu0 %1055
  %1057 = vrot.lane.b32.xlu0 %v905, 32
  %v1058 = vpop.permute.xlu0 %1057
  %1059 = vrot.lane.b32.xlu0 %v906, 32
  %v1060 = vpop.permute.xlu0 %1059
  %1061 = vrot.lane.b32.xlu0 %v907, 32
  %v1062 = vpop.permute.xlu0 %1061
  %1063 = vrot.lane.b32.xlu0 %v908, 32
  %v1064 = vpop.permute.xlu0 %1063
  %1065 = vrot.lane.b32.xlu0 %v909, 32
  %v1066 = vpop.permute.xlu0 %1065
  %1067 = vrot.lane.b32.xlu0 %v910, 32
  %v1068 = vpop.permute.xlu0 %1067
  %1069 = vrot.lane.b32.xlu0 %v911, 32
  %v1070 = vpop.permute.xlu0 %1069
  %1071 = vrot.lane.b32.xlu0 %v912, 32
  %v1072 = vpop.permute.xlu0 %1071
  %1073 = vrot.lane.b32.xlu0 %v913, 32
  %v1074 = vpop.permute.xlu0 %1073
  %1075 = vrot.lane.b32.xlu0 %v914, 32
  %v1076 = vpop.permute.xlu0 %1075
  %1077 = vrot.lane.b32.xlu0 %v915, 32
  %v1078 = vpop.permute.xlu0 %1077
  %1079 = vrot.lane.b32.xlu0 %v916, 32
  %v1080 = vpop.permute.xlu0 %1079
  %1081 = vrot.lane.b32.xlu0 %v917, 32
  %v1082 = vpop.permute.xlu0 %1081
  %1083 = vrot.lane.b32.xlu0 %v918, 32
  %v1084 = vpop.permute.xlu0 %1083
  %1085 = vrot.lane.b32.xlu0 %v919, 32
  %v1086 = vpop.permute.xlu0 %1085
  %1087 = vrot.lane.b32.xlu0 %v920, 32
  %v1088 = vpop.permute.xlu0 %1087
  %1089 = vrot.lane.b32.xlu0 %v921, 32
  %v1090 = vpop.permute.xlu0 %1089
  %1091 = vrot.lane.b32.xlu0 %v922, 32
  %v1092 = vpop.permute.xlu0 %1091
  %1093 = vrot.lane.b32.xlu0 %v923, 32
  %v1094 = vpop.permute.xlu0 %1093
  %1095 = vrot.lane.b32.xlu0 %v924, 32
  %v1096 = vpop.permute.xlu0 %1095
  %1097 = vrot.lane.b32.xlu0 %v925, 32
  %v1098 = vpop.permute.xlu0 %1097
  %1099 = vrot.lane.b32.xlu0 %v926, 32
  %v1100 = vpop.permute.xlu0 %1099
  %1101 = vrot.lane.b32.xlu0 %v927, 32
  %v1102 = vpop.permute.xlu0 %1101
  %1103 = vrot.lane.b32.xlu0 %v928, 32
  %v1104 = vpop.permute.xlu0 %1103
  %1105 = vrot.lane.b32.xlu0 %v929, 32
  %v1106 = vpop.permute.xlu0 %1105
  %1107 = vrot.lane.b32.xlu0 %v930, 32
  %v1108 = vpop.permute.xlu0 %1107
  %1109 = vrot.lane.b32.xlu0 %v931, 32
  %v1110 = vpop.permute.xlu0 %1109
  %1111 = vrot.lane.b32.xlu0 %v932, 32
  %v1112 = vpop.permute.xlu0 %1111
  %vm1173 = vcmask 392448
  %1174 = vst.msk [vmem:[%s450] sm:$0xff] %vm1173, %v994
  %vm1175 = vcmask 391424
  %1176 = vst.msk [vmem:[%s450 + $0x10] sm:$0x7f] %vm1175, %v996
  %1177 = vst.msk [vmem:[%s450 + $0x20] sm:$0xff] %vm1173, %v998
  %1178 = vst.msk [vmem:[%s450 + $0x30] sm:$0x7f] %vm1175, %v1000
  %1179 = vst.msk [vmem:[%s450 + $0x40] sm:$0xff] %vm1173, %v1002
  %1180 = vst.msk [vmem:[%s450 + $0x50] sm:$0x7f] %vm1175, %v1004
  %1181 = vst.msk [vmem:[%s450 + $0x60] sm:$0xff] %vm1173, %v1006
  %1182 = vst.msk [vmem:[%s450 + $0x70] sm:$0x7f] %vm1175, %v1008
  %1183 = vst.msk [vmem:[%s450 + $0x80] sm:$0xff] %vm1173, %v1010
  %1184 = vst.msk [vmem:[%s450 + $0x90] sm:$0x7f] %vm1175, %v1012
  %1185 = vst.msk [vmem:[%s450 + $0xa0] sm:$0xff] %vm1173, %v1014
  %1186 = vst.msk [vmem:[%s450 + $0xb0] sm:$0x7f] %vm1175, %v1016
  %1187 = vst.msk [vmem:[%s450 + $0xc0] sm:$0xff] %vm1173, %v1018
  %1188 = vst.msk [vmem:[%s450 + $0xd0] sm:$0x7f] %vm1175, %v1020
  %1189 = vst.msk [vmem:[%s450 + $0xe0] sm:$0xff] %vm1173, %v1022
  %1190 = vst.msk [vmem:[%s450 + $0xf0] sm:$0x7f] %vm1175, %v1024
  %1191 = vst.msk [vmem:[%s450 + $0x100] sm:$0xff] %vm1173, %v1026
  %1192 = vst.msk [vmem:[%s450 + $0x110] sm:$0x7f] %vm1175, %v1028
  %1193 = vst.msk [vmem:[%s450 + $0x120] sm:$0xff] %vm1173, %v1030
  %1194 = vst.msk [vmem:[%s450 + $0x130] sm:$0x7f] %vm1175, %v1032
  %1195 = vst.msk [vmem:[%s450 + $0x140] sm:$0xff] %vm1173, %v1034
  %1196 = vst.msk [vmem:[%s450 + $0x150] sm:$0x7f] %vm1175, %v1036
  %1197 = vst.msk [vmem:[%s450 + $0x160] sm:$0xff] %vm1173, %v1038
  %1198 = vst.msk [vmem:[%s450 + $0x170] sm:$0x7f] %vm1175, %v1040
  %1199 = vst.msk [vmem:[%s450 + $0x180] sm:$0xff] %vm1173, %v1042
  %1200 = vst.msk [vmem:[%s450 + $0x190] sm:$0x7f] %vm1175, %v1044
  %1201 = vst.msk [vmem:[%s450 + $0x1a0] sm:$0xff] %vm1173, %v1046
  %1202 = vst.msk [vmem:[%s450 + $0x1b0] sm:$0x7f] %vm1175, %v1048
  %1203 = vst.msk [vmem:[%s450 + $0x1c0] sm:$0xff] %vm1173, %v1050
  %1204 = vst.msk [vmem:[%s450 + $0x1d0] sm:$0x7f] %vm1175, %v1052
  %1205 = vst.msk [vmem:[%s450 + $0x200] sm:$0xff] %vm1173, %v1054
  %1206 = vst.msk [vmem:[%s450 + $0x210] sm:$0x7f] %vm1175, %v1056
  %1207 = vst.msk [vmem:[%s450 + $0x220] sm:$0xff] %vm1173, %v1058
  %1208 = vst.msk [vmem:[%s450 + $0x230] sm:$0x7f] %vm1175, %v1060
  %1209 = vst.msk [vmem:[%s450 + $0x240] sm:$0xff] %vm1173, %v1062
  %1210 = vst.msk [vmem:[%s450 + $0x250] sm:$0x7f] %vm1175, %v1064
  %1211 = vst.msk [vmem:[%s450 + $0x260] sm:$0xff] %vm1173, %v1066
  %1212 = vst.msk [vmem:[%s450 + $0x270] sm:$0x7f] %vm1175, %v1068
  %1213 = vst.msk [vmem:[%s450 + $0x280] sm:$0xff] %vm1173, %v1070
  %1214 = vst.msk [vmem:[%s450 + $0x290] sm:$0x7f] %vm1175, %v1072
  %1215 = vst.msk [vmem:[%s450 + $0x2a0] sm:$0xff] %vm1173, %v1074
  %1216 = vst.msk [vmem:[%s450 + $0x2b0] sm:$0x7f] %vm1175, %v1076
  %1217 = vst.msk [vmem:[%s450 + $0x2c0] sm:$0xff] %vm1173, %v1078
  %1218 = vst.msk [vmem:[%s450 + $0x2d0] sm:$0x7f] %vm1175, %v1080
  %1219 = vst.msk [vmem:[%s450 + $0x2e0] sm:$0xff] %vm1173, %v1082
  %1220 = vst.msk [vmem:[%s450 + $0x2f0] sm:$0x7f] %vm1175, %v1084
  %1221 = vst.msk [vmem:[%s450 + $0x300] sm:$0xff] %vm1173, %v1086
  %1222 = vst.msk [vmem:[%s450 + $0x310] sm:$0x7f] %vm1175, %v1088
  %1223 = vst.msk [vmem:[%s450 + $0x320] sm:$0xff] %vm1173, %v1090
  %1224 = vst.msk [vmem:[%s450 + $0x330] sm:$0x7f] %vm1175, %v1092
  %1225 = vst.msk [vmem:[%s450 + $0x340] sm:$0xff] %vm1173, %v1094
  %1226 = vst.msk [vmem:[%s450 + $0x350] sm:$0x7f] %vm1175, %v1096
  %1227 = vst.msk [vmem:[%s450 + $0x360] sm:$0xff] %vm1173, %v1098
  %1228 = vst.msk [vmem:[%s450 + $0x370] sm:$0x7f] %vm1175, %v1100
  %1229 = vst.msk [vmem:[%s450 + $0x380] sm:$0xff] %vm1173, %v1102
  %1230 = vst.msk [vmem:[%s450 + $0x390] sm:$0x7f] %vm1175, %v1104
  %1231 = vst.msk [vmem:[%s450 + $0x3a0] sm:$0xff] %vm1173, %v1106
  %1232 = vst.msk [vmem:[%s450 + $0x3b0] sm:$0x7f] %vm1175, %v1108
  %1233 = vst.msk [vmem:[%s450 + $0x3c0] sm:$0xff] %vm1173, %v1110
  %1234 = vst.msk [vmem:[%s450 + $0x3d0] sm:$0x7f] %vm1175, %v1112
  %v1235 = vld [vmem:[%s0] sm:$0xff]
  %v1236 = vld [vmem:[%s0 + $0x8] sm:$0x7f]
  %v1237 = vld [vmem:[%s0 + $0x10] sm:$0xff]
  %v1238 = vld [vmem:[%s0 + $0x18] sm:$0x7f]
  %v1239 = vld [vmem:[%s0 + $0x20] sm:$0xff]
  %v1240 = vld [vmem:[%s0 + $0x28] sm:$0x7f]
  %v1241 = vld [vmem:[%s0 + $0x30] sm:$0xff]
  %v1242 = vld [vmem:[%s0 + $0x38] sm:$0x7f]
  %v1243 = vld [vmem:[%s0 + $0x40] sm:$0xff]
  %v1244 = vld [vmem:[%s0 + $0x48] sm:$0x7f]
  %v1245 = vld [vmem:[%s0 + $0x50] sm:$0xff]
  %v1246 = vld [vmem:[%s0 + $0x58] sm:$0x7f]
  %v1247 = vld [vmem:[%s0 + $0x60] sm:$0xff]
  %v1248 = vld [vmem:[%s0 + $0x68] sm:$0x7f]
  %v1249 = vld [vmem:[%s0 + $0x70] sm:$0xff]
  %v1250 = vld [vmem:[%s0 + $0x78] sm:$0x7f]
  %v1251 = vld [vmem:[%s0 + $0x80] sm:$0xff]
  %v1252 = vld [vmem:[%s0 + $0x88] sm:$0x7f]
  %v1253 = vld [vmem:[%s0 + $0x90] sm:$0xff]
  %v1254 = vld [vmem:[%s0 + $0x98] sm:$0x7f]
  %v1255 = vld [vmem:[%s0 + $0xa0] sm:$0xff]
  %v1256 = vld [vmem:[%s0 + $0xa8] sm:$0x7f]
  %v1257 = vld [vmem:[%s0 + $0xb0] sm:$0xff]
  %v1258 = vld [vmem:[%s0 + $0xb8] sm:$0x7f]
  %v1259 = vld [vmem:[%s0 + $0xc0] sm:$0xff]
  %v1260 = vld [vmem:[%s0 + $0xc8] sm:$0x7f]
  %v1261 = vld [vmem:[%s0 + $0xd0] sm:$0xff]
  %v1262 = vld [vmem:[%s0 + $0xd8] sm:$0x7f]
  %v1263 = vld [vmem:[%s0 + $0xe0] sm:$0xff]
  %v1264 = vld [vmem:[%s0 + $0xe8] sm:$0x7f]
  %v1265 = vld [vmem:[%s0 + $0xf0] sm:$0xff]
  %v1266 = vld [vmem:[%s0 + $0xf8] sm:$0x7f]
  %v1267 = vld [vmem:[%s0 + $0x100] sm:$0xff]
  %v1268 = vld [vmem:[%s0 + $0x108] sm:$0x7f]
  %v1269 = vld [vmem:[%s0 + $0x110] sm:$0xff]
  %v1270 = vld [vmem:[%s0 + $0x118] sm:$0x7f]
  %v1271 = vld [vmem:[%s0 + $0x120] sm:$0xff]
  %v1272 = vld [vmem:[%s0 + $0x128] sm:$0x7f]
  %v1273 = vld [vmem:[%s0 + $0x130] sm:$0xff]
  %v1274 = vld [vmem:[%s0 + $0x138] sm:$0x7f]
  %v1275 = vld [vmem:[%s0 + $0x140] sm:$0xff]
  %v1276 = vld [vmem:[%s0 + $0x148] sm:$0x7f]
  %v1277 = vld [vmem:[%s0 + $0x150] sm:$0xff]
  %v1278 = vld [vmem:[%s0 + $0x158] sm:$0x7f]
  %v1279 = vld [vmem:[%s0 + $0x160] sm:$0xff]
  %v1280 = vld [vmem:[%s0 + $0x168] sm:$0x7f]
  %v1281 = vld [vmem:[%s0 + $0x170] sm:$0xff]
  %v1282 = vld [vmem:[%s0 + $0x178] sm:$0x7f]
  %v1283 = vld [vmem:[%s0 + $0x180] sm:$0xff]
  %v1284 = vld [vmem:[%s0 + $0x188] sm:$0x7f]
  %v1285 = vld [vmem:[%s0 + $0x190] sm:$0xff]
  %v1286 = vld [vmem:[%s0 + $0x198] sm:$0x7f]
  %v1287 = vld [vmem:[%s0 + $0x1a0] sm:$0xff]
  %v1288 = vld [vmem:[%s0 + $0x1a8] sm:$0x7f]
  %v1289 = vld [vmem:[%s0 + $0x1b0] sm:$0xff]
  %v1290 = vld [vmem:[%s0 + $0x1b8] sm:$0x7f]
  %v1291 = vld [vmem:[%s0 + $0x1c0] sm:$0xff]
  %v1292 = vld [vmem:[%s0 + $0x1c8] sm:$0x7f]
  %v1293 = vld [vmem:[%s0 + $0x1d0] sm:$0xff]
  %v1294 = vld [vmem:[%s0 + $0x1d8] sm:$0x7f]
  %v1295 = vld [vmem:[%s0 + $0x1e0] sm:$0xff]
  %v1296 = vld [vmem:[%s0 + $0x1e8] sm:$0x7f]
  %v1297 = vld [vmem:[%s0 + $0x1f0] sm:$0xff]
  %v1298 = vld [vmem:[%s0 + $0x1f8] sm:$0x7f]
  %v1363 = vrot.slane %v1235, 7
  %v1364 = vrot.slane %v1236, 7
  %v1365 = vsel %vm299, %v1363, %v1364
  %v1366 = vrot.slane %v1237, 7
  %v1367 = vrot.slane %v1238, 7
  %v1368 = vsel %vm299, %v1366, %v1367
  %v1369 = vrot.slane %v1239, 7
  %v1370 = vrot.slane %v1240, 7
  %v1371 = vsel %vm299, %v1369, %v1370
  %v1372 = vrot.slane %v1241, 7
  %v1373 = vrot.slane %v1242, 7
  %v1374 = vsel %vm299, %v1372, %v1373
  %v1375 = vrot.slane %v1243, 7
  %v1376 = vrot.slane %v1244, 7
  %v1377 = vsel %vm299, %v1375, %v1376
  %v1378 = vrot.slane %v1245, 7
  %v1379 = vrot.slane %v1246, 7
  %v1380 = vsel %vm299, %v1378, %v1379
  %v1381 = vrot.slane %v1247, 7
  %v1382 = vrot.slane %v1248, 7
  %v1383 = vsel %vm299, %v1381, %v1382
  %v1384 = vrot.slane %v1249, 7
  %v1385 = vrot.slane %v1250, 7
  %v1386 = vsel %vm299, %v1384, %v1385
  %v1387 = vrot.slane %v1251, 7
  %v1388 = vrot.slane %v1252, 7
  %v1389 = vsel %vm299, %v1387, %v1388
  %v1390 = vrot.slane %v1253, 7
  %v1391 = vrot.slane %v1254, 7
  %v1392 = vsel %vm299, %v1390, %v1391
  %v1393 = vrot.slane %v1255, 7
  %v1394 = vrot.slane %v1256, 7
  %v1395 = vsel %vm299, %v1393, %v1394
  %v1396 = vrot.slane %v1257, 7
  %v1397 = vrot.slane %v1258, 7
  %v1398 = vsel %vm299, %v1396, %v1397
  %v1399 = vrot.slane %v1259, 7
  %v1400 = vrot.slane %v1260, 7
  %v1401 = vsel %vm299, %v1399, %v1400
  %v1402 = vrot.slane %v1261, 7
  %v1403 = vrot.slane %v1262, 7
  %v1404 = vsel %vm299, %v1402, %v1403
  %v1405 = vrot.slane %v1263, 7
  %v1406 = vrot.slane %v1264, 7
  %v1407 = vsel %vm299, %v1405, %v1406
  %v1408 = vrot.slane %v1265, 7
  %v1409 = vrot.slane %v1266, 7
  %v1410 = vsel %vm299, %v1408, %v1409
  %v1411 = vrot.slane %v1267, 7
  %v1412 = vrot.slane %v1268, 7
  %v1413 = vsel %vm299, %v1411, %v1412
  %v1414 = vrot.slane %v1269, 7
  %v1415 = vrot.slane %v1270, 7
  %v1416 = vsel %vm299, %v1414, %v1415
  %v1417 = vrot.slane %v1271, 7
  %v1418 = vrot.slane %v1272, 7
  %v1419 = vsel %vm299, %v1417, %v1418
  %v1420 = vrot.slane %v1273, 7
  %v1421 = vrot.slane %v1274, 7
  %v1422 = vsel %vm299, %v1420, %v1421
  %v1423 = vrot.slane %v1275, 7
  %v1424 = vrot.slane %v1276, 7
  %v1425 = vsel %vm299, %v1423, %v1424
  %v1426 = vrot.slane %v1277, 7
  %v1427 = vrot.slane %v1278, 7
  %v1428 = vsel %vm299, %v1426, %v1427
  %v1429 = vrot.slane %v1279, 7
  %v1430 = vrot.slane %v1280, 7
  %v1431 = vsel %vm299, %v1429, %v1430
  %v1432 = vrot.slane %v1281, 7
  %v1433 = vrot.slane %v1282, 7
  %v1434 = vsel %vm299, %v1432, %v1433
  %v1435 = vrot.slane %v1283, 7
  %v1436 = vrot.slane %v1284, 7
  %v1437 = vsel %vm299, %v1435, %v1436
  %v1438 = vrot.slane %v1285, 7
  %v1439 = vrot.slane %v1286, 7
  %v1440 = vsel %vm299, %v1438, %v1439
  %v1441 = vrot.slane %v1287, 7
  %v1442 = vrot.slane %v1288, 7
  %v1443 = vsel %vm299, %v1441, %v1442
  %v1444 = vrot.slane %v1289, 7
  %v1445 = vrot.slane %v1290, 7
  %v1446 = vsel %vm299, %v1444, %v1445
  %v1447 = vrot.slane %v1291, 7
  %v1448 = vrot.slane %v1292, 7
  %v1449 = vsel %vm299, %v1447, %v1448
  %v1450 = vrot.slane %v1293, 7
  %v1451 = vrot.slane %v1294, 7
  %v1452 = vsel %vm299, %v1450, %v1451
  %v1453 = vrot.slane %v1295, 7
  %v1454 = vrot.slane %v1296, 7
  %v1455 = vsel %vm299, %v1453, %v1454
  %v1456 = vrot.slane %v1297, 7
  %v1457 = vrot.slane %v1298, 7
  %v1458 = vsel %vm299, %v1456, %v1457
  %1459 = vrot.lane.b32.xlu0 %v1363, 48
  %v1460 = vpop.permute.xlu0 %1459
  %1461 = vrot.lane.b32.xlu0 %v1365, 48
  %v1462 = vpop.permute.xlu0 %1461
  %1463 = vrot.lane.b32.xlu0 %v1366, 48
  %v1464 = vpop.permute.xlu0 %1463
  %1465 = vrot.lane.b32.xlu0 %v1368, 48
  %v1466 = vpop.permute.xlu0 %1465
  %1467 = vrot.lane.b32.xlu0 %v1369, 48
  %v1468 = vpop.permute.xlu0 %1467
  %1469 = vrot.lane.b32.xlu0 %v1371, 48
  %v1470 = vpop.permute.xlu0 %1469
  %1471 = vrot.lane.b32.xlu0 %v1372, 48
  %v1472 = vpop.permute.xlu0 %1471
  %1473 = vrot.lane.b32.xlu0 %v1374, 48
  %v1474 = vpop.permute.xlu0 %1473
  %1475 = vrot.lane.b32.xlu0 %v1375, 48
  %v1476 = vpop.permute.xlu0 %1475
  %1477 = vrot.lane.b32.xlu0 %v1377, 48
  %v1478 = vpop.permute.xlu0 %1477
  %1479 = vrot.lane.b32.xlu0 %v1378, 48
  %v1480 = vpop.permute.xlu0 %1479
  %1481 = vrot.lane.b32.xlu0 %v1380, 48
  %v1482 = vpop.permute.xlu0 %1481
  %1483 = vrot.lane.b32.xlu0 %v1381, 48
  %v1484 = vpop.permute.xlu0 %1483
  %1485 = vrot.lane.b32.xlu0 %v1383, 48
  %v1486 = vpop.permute.xlu0 %1485
  %1487 = vrot.lane.b32.xlu0 %v1384, 48
  %v1488 = vpop.permute.xlu0 %1487
  %1489 = vrot.lane.b32.xlu0 %v1386, 48
  %v1490 = vpop.permute.xlu0 %1489
  %1491 = vrot.lane.b32.xlu0 %v1387, 48
  %v1492 = vpop.permute.xlu0 %1491
  %1493 = vrot.lane.b32.xlu0 %v1389, 48
  %v1494 = vpop.permute.xlu0 %1493
  %1495 = vrot.lane.b32.xlu0 %v1390, 48
  %v1496 = vpop.permute.xlu0 %1495
  %1497 = vrot.lane.b32.xlu0 %v1392, 48
  %v1498 = vpop.permute.xlu0 %1497
  %1499 = vrot.lane.b32.xlu0 %v1393, 48
  %v1500 = vpop.permute.xlu0 %1499
  %1501 = vrot.lane.b32.xlu0 %v1395, 48
  %v1502 = vpop.permute.xlu0 %1501
  %1503 = vrot.lane.b32.xlu0 %v1396, 48
  %v1504 = vpop.permute.xlu0 %1503
  %1505 = vrot.lane.b32.xlu0 %v1398, 48
  %v1506 = vpop.permute.xlu0 %1505
  %1507 = vrot.lane.b32.xlu0 %v1399, 48
  %v1508 = vpop.permute.xlu0 %1507
  %1509 = vrot.lane.b32.xlu0 %v1401, 48
  %v1510 = vpop.permute.xlu0 %1509
  %1511 = vrot.lane.b32.xlu0 %v1402, 48
  %v1512 = vpop.permute.xlu0 %1511
  %1513 = vrot.lane.b32.xlu0 %v1404, 48
  %v1514 = vpop.permute.xlu0 %1513
  %1515 = vrot.lane.b32.xlu0 %v1405, 48
  %v1516 = vpop.permute.xlu0 %1515
  %1517 = vrot.lane.b32.xlu0 %v1407, 48
  %v1518 = vpop.permute.xlu0 %1517
  %1519 = vrot.lane.b32.xlu0 %v1408, 48
  %v1520 = vpop.permute.xlu0 %1519
  %1521 = vrot.lane.b32.xlu0 %v1410, 48
  %v1522 = vpop.permute.xlu0 %1521
  %1523 = vrot.lane.b32.xlu0 %v1411, 48
  %v1524 = vpop.permute.xlu0 %1523
  %1525 = vrot.lane.b32.xlu0 %v1413, 48
  %v1526 = vpop.permute.xlu0 %1525
  %1527 = vrot.lane.b32.xlu0 %v1414, 48
  %v1528 = vpop.permute.xlu0 %1527
  %1529 = vrot.lane.b32.xlu0 %v1416, 48
  %v1530 = vpop.permute.xlu0 %1529
  %1531 = vrot.lane.b32.xlu0 %v1417, 48
  %v1532 = vpop.permute.xlu0 %1531
  %1533 = vrot.lane.b32.xlu0 %v1419, 48
  %v1534 = vpop.permute.xlu0 %1533
  %1535 = vrot.lane.b32.xlu0 %v1420, 48
  %v1536 = vpop.permute.xlu0 %1535
  %1537 = vrot.lane.b32.xlu0 %v1422, 48
  %v1538 = vpop.permute.xlu0 %1537
  %1539 = vrot.lane.b32.xlu0 %v1423, 48
  %v1540 = vpop.permute.xlu0 %1539
  %1541 = vrot.lane.b32.xlu0 %v1425, 48
  %v1542 = vpop.permute.xlu0 %1541
  %1543 = vrot.lane.b32.xlu0 %v1426, 48
  %v1544 = vpop.permute.xlu0 %1543
  %1545 = vrot.lane.b32.xlu0 %v1428, 48
  %v1546 = vpop.permute.xlu0 %1545
  %1547 = vrot.lane.b32.xlu0 %v1429, 48
  %v1548 = vpop.permute.xlu0 %1547
  %1549 = vrot.lane.b32.xlu0 %v1431, 48
  %v1550 = vpop.permute.xlu0 %1549
  %1551 = vrot.lane.b32.xlu0 %v1432, 48
  %v1552 = vpop.permute.xlu0 %1551
  %1553 = vrot.lane.b32.xlu0 %v1434, 48
  %v1554 = vpop.permute.xlu0 %1553
  %1555 = vrot.lane.b32.xlu0 %v1435, 48
  %v1556 = vpop.permute.xlu0 %1555
  %1557 = vrot.lane.b32.xlu0 %v1437, 48
  %v1558 = vpop.permute.xlu0 %1557
  %1559 = vrot.lane.b32.xlu0 %v1438, 48
  %v1560 = vpop.permute.xlu0 %1559
  %1561 = vrot.lane.b32.xlu0 %v1440, 48
  %v1562 = vpop.permute.xlu0 %1561
  %1563 = vrot.lane.b32.xlu0 %v1441, 48
  %v1564 = vpop.permute.xlu0 %1563
  %1565 = vrot.lane.b32.xlu0 %v1443, 48
  %v1566 = vpop.permute.xlu0 %1565
  %1567 = vrot.lane.b32.xlu0 %v1444, 48
  %v1568 = vpop.permute.xlu0 %1567
  %1569 = vrot.lane.b32.xlu0 %v1446, 48
  %v1570 = vpop.permute.xlu0 %1569
  %1571 = vrot.lane.b32.xlu0 %v1447, 48
  %v1572 = vpop.permute.xlu0 %1571
  %1573 = vrot.lane.b32.xlu0 %v1449, 48
  %v1574 = vpop.permute.xlu0 %1573
  %1575 = vrot.lane.b32.xlu0 %v1450, 48
  %v1576 = vpop.permute.xlu0 %1575
  %1577 = vrot.lane.b32.xlu0 %v1452, 48
  %v1578 = vpop.permute.xlu0 %1577
  %1579 = vrot.lane.b32.xlu0 %v1453, 48
  %v1580 = vpop.permute.xlu0 %1579
  %1581 = vrot.lane.b32.xlu0 %v1455, 48
  %v1582 = vpop.permute.xlu0 %1581
  %1583 = vrot.lane.b32.xlu0 %v1456, 48
  %v1584 = vpop.permute.xlu0 %1583
  %1585 = vrot.lane.b32.xlu0 %v1458, 48
  %v1586 = vpop.permute.xlu0 %1585
  %vm1651 = vcmask 523649
  %1652 = vst.msk [vmem:[#allocation2] sm:$0xfe] %vm1651, %v1460
  %vm1653 = vcmask 523648
  %1654 = vst.msk [vmem:[#allocation2 + $0x10] sm:$0xff] %vm1653, %v1462
  %1655 = vst.msk [vmem:[#allocation2 + $0x20] sm:$0xfe] %vm1651, %v1464
  %1656 = vst.msk [vmem:[#allocation2 + $0x30] sm:$0xff] %vm1653, %v1466
  %1657 = vst.msk [vmem:[#allocation2 + $0x40] sm:$0xfe] %vm1651, %v1468
  %1658 = vst.msk [vmem:[#allocation2 + $0x50] sm:$0xff] %vm1653, %v1470
  %1659 = vst.msk [vmem:[#allocation2 + $0x60] sm:$0xfe] %vm1651, %v1472
  %1660 = vst.msk [vmem:[#allocation2 + $0x70] sm:$0xff] %vm1653, %v1474
  %1661 = vst.msk [vmem:[#allocation2 + $0x80] sm:$0xfe] %vm1651, %v1476
  %1662 = vst.msk [vmem:[#allocation2 + $0x90] sm:$0xff] %vm1653, %v1478
  %1663 = vst.msk [vmem:[#allocation2 + $0xa0] sm:$0xfe] %vm1651, %v1480
  %1664 = vst.msk [vmem:[#allocation2 + $0xb0] sm:$0xff] %vm1653, %v1482
  %1665 = vst.msk [vmem:[#allocation2 + $0xc0] sm:$0xfe] %vm1651, %v1484
  %1666 = vst.msk [vmem:[#allocation2 + $0xd0] sm:$0xff] %vm1653, %v1486
  %1667 = vst.msk [vmem:[#allocation2 + $0xe0] sm:$0xfe] %vm1651, %v1488
  %1668 = vst.msk [vmem:[#allocation2 + $0xf0] sm:$0xff] %vm1653, %v1490
  %1669 = vst.msk [vmem:[#allocation2 + $0x100] sm:$0xfe] %vm1651, %v1492
  %1670 = vst.msk [vmem:[#allocation2 + $0x110] sm:$0xff] %vm1653, %v1494
  %1671 = vst.msk [vmem:[#allocation2 + $0x120] sm:$0xfe] %vm1651, %v1496
  %1672 = vst.msk [vmem:[#allocation2 + $0x130] sm:$0xff] %vm1653, %v1498
  %1673 = vst.msk [vmem:[#allocation2 + $0x140] sm:$0xfe] %vm1651, %v1500
  %1674 = vst.msk [vmem:[#allocation2 + $0x150] sm:$0xff] %vm1653, %v1502
  %1675 = vst.msk [vmem:[#allocation2 + $0x160] sm:$0xfe] %vm1651, %v1504
  %1676 = vst.msk [vmem:[#allocation2 + $0x170] sm:$0xff] %vm1653, %v1506
  %1677 = vst.msk [vmem:[#allocation2 + $0x180] sm:$0xfe] %vm1651, %v1508
  %1678 = vst.msk [vmem:[#allocation2 + $0x190] sm:$0xff] %vm1653, %v1510
  %1679 = vst.msk [vmem:[#allocation2 + $0x1a0] sm:$0xfe] %vm1651, %v1512
  %1680 = vst.msk [vmem:[#allocation2 + $0x1b0] sm:$0xff] %vm1653, %v1514
  %1681 = vst.msk [vmem:[#allocation2 + $0x1c0] sm:$0xfe] %vm1651, %v1516
  %1682 = vst.msk [vmem:[#allocation2 + $0x1d0] sm:$0xff] %vm1653, %v1518
  %1683 = vst.msk [vmem:[#allocation2 + $0x1e0] sm:$0xfe] %vm1651, %v1520
  %1684 = vst.msk [vmem:[#allocation2 + $0x1f0] sm:$0xff] %vm1653, %v1522
  %1685 = vst.msk [vmem:[#allocation2 + $0x200] sm:$0xfe] %vm1651, %v1524
  %1686 = vst.msk [vmem:[#allocation2 + $0x210] sm:$0xff] %vm1653, %v1526
  %1687 = vst.msk [vmem:[#allocation2 + $0x220] sm:$0xfe] %vm1651, %v1528
  %1688 = vst.msk [vmem:[#allocation2 + $0x230] sm:$0xff] %vm1653, %v1530
  %1689 = vst.msk [vmem:[#allocation2 + $0x240] sm:$0xfe] %vm1651, %v1532
  %1690 = vst.msk [vmem:[#allocation2 + $0x250] sm:$0xff] %vm1653, %v1534
  %1691 = vst.msk [vmem:[#allocation2 + $0x260] sm:$0xfe] %vm1651, %v1536
  %1692 = vst.msk [vmem:[#allocation2 + $0x270] sm:$0xff] %vm1653, %v1538
  %1693 = vst.msk [vmem:[#allocation2 + $0x280] sm:$0xfe] %vm1651, %v1540
  %1694 = vst.msk [vmem:[#allocation2 + $0x290] sm:$0xff] %vm1653, %v1542
  %1695 = vst.msk [vmem:[#allocation2 + $0x2a0] sm:$0xfe] %vm1651, %v1544
  %1696 = vst.msk [vmem:[#allocation2 + $0x2b0] sm:$0xff] %vm1653, %v1546
  %1697 = vst.msk [vmem:[#allocation2 + $0x2c0] sm:$0xfe] %vm1651, %v1548
  %1698 = vst.msk [vmem:[#allocation2 + $0x2d0] sm:$0xff] %vm1653, %v1550
  %1699 = vst.msk [vmem:[#allocation2 + $0x2e0] sm:$0xfe] %vm1651, %v1552
  %1700 = vst.msk [vmem:[#allocation2 + $0x2f0] sm:$0xff] %vm1653, %v1554
  %1701 = vst.msk [vmem:[#allocation2 + $0x300] sm:$0xfe] %vm1651, %v1556
  %1702 = vst.msk [vmem:[#allocation2 + $0x310] sm:$0xff] %vm1653, %v1558
  %1703 = vst.msk [vmem:[#allocation2 + $0x320] sm:$0xfe] %vm1651, %v1560
  %1704 = vst.msk [vmem:[#allocation2 + $0x330] sm:$0xff] %vm1653, %v1562
  %1705 = vst.msk [vmem:[#allocation2 + $0x340] sm:$0xfe] %vm1651, %v1564
  %1706 = vst.msk [vmem:[#allocation2 + $0x350] sm:$0xff] %vm1653, %v1566
  %1707 = vst.msk [vmem:[#allocation2 + $0x360] sm:$0xfe] %vm1651, %v1568
  %1708 = vst.msk [vmem:[#allocation2 + $0x370] sm:$0xff] %vm1653, %v1570
  %1709 = vst.msk [vmem:[#allocation2 + $0x380] sm:$0xfe] %vm1651, %v1572
  %1710 = vst.msk [vmem:[#allocation2 + $0x390] sm:$0xff] %vm1653, %v1574
  %1711 = vst.msk [vmem:[#allocation2 + $0x3a0] sm:$0xfe] %vm1651, %v1576
  %1712 = vst.msk [vmem:[#allocation2 + $0x3b0] sm:$0xff] %vm1653, %v1578
  %1713 = vst.msk [vmem:[#allocation2 + $0x3c0] sm:$0xfe] %vm1651, %v1580
  %1714 = vst.msk [vmem:[#allocation2 + $0x3d0] sm:$0xff] %vm1653, %v1582
  %1715 = vst.msk [vmem:[#allocation2 + $0x3e0] sm:$0xfe] %vm1651, %v1584
  %1716 = vst.msk [vmem:[#allocation2 + $0x3f0] sm:$0xff] %vm1653, %v1586
  %v1717 = vld [vmem:[%s0] sm:$0xff]
  %v1718 = vld [vmem:[%s0 + $0x8] sm:$0xff]
  %v1719 = vld [vmem:[%s0 + $0x10] sm:$0xff]
  %v1720 = vld [vmem:[%s0 + $0x18] sm:$0xff]
  %v1721 = vld [vmem:[%s0 + $0x20] sm:$0xff]
  %v1722 = vld [vmem:[%s0 + $0x28] sm:$0xff]
  %v1723 = vld [vmem:[%s0 + $0x30] sm:$0xff]
  %v1724 = vld [vmem:[%s0 + $0x38] sm:$0xff]
  %v1725 = vld [vmem:[%s0 + $0x40] sm:$0xff]
  %v1726 = vld [vmem:[%s0 + $0x48] sm:$0xff]
  %v1727 = vld [vmem:[%s0 + $0x50] sm:$0xff]
  %v1728 = vld [vmem:[%s0 + $0x58] sm:$0xff]
  %v1729 = vld [vmem:[%s0 + $0x60] sm:$0xff]
  %v1730 = vld [vmem:[%s0 + $0x68] sm:$0xff]
  %v1731 = vld [vmem:[%s0 + $0x70] sm:$0xff]
  %v1732 = vld [vmem:[%s0 + $0x78] sm:$0xff]
  %v1733 = vld [vmem:[%s0 + $0x80] sm:$0xff]
  %v1734 = vld [vmem:[%s0 + $0x88] sm:$0xff]
  %v1735 = vld [vmem:[%s0 + $0x90] sm:$0xff]
  %v1736 = vld [vmem:[%s0 + $0x98] sm:$0xff]
  %v1737 = vld [vmem:[%s0 + $0xa0] sm:$0xff]
  %v1738 = vld [vmem:[%s0 + $0xa8] sm:$0xff]
  %v1739 = vld [vmem:[%s0 + $0xb0] sm:$0xff]
  %v1740 = vld [vmem:[%s0 + $0xb8] sm:$0xff]
  %v1741 = vld [vmem:[%s0 + $0xc0] sm:$0xff]
  %v1742 = vld [vmem:[%s0 + $0xc8] sm:$0xff]
  %v1743 = vld [vmem:[%s0 + $0xd0] sm:$0xff]
  %v1744 = vld [vmem:[%s0 + $0xd8] sm:$0xff]
  %v1745 = vld [vmem:[%s0 + $0xe0] sm:$0xff]
  %v1746 = vld [vmem:[%s0 + $0xe8] sm:$0xff]
  %v1747 = vld [vmem:[%s0 + $0xf0] sm:$0xff]
  %v1748 = vld [vmem:[%s0 + $0xf8] sm:$0xff]
  %v1749 = vld [vmem:[%s0 + $0x100] sm:$0xff]
  %v1750 = vld [vmem:[%s0 + $0x108] sm:$0xff]
  %v1751 = vld [vmem:[%s0 + $0x110] sm:$0xff]
  %v1752 = vld [vmem:[%s0 + $0x118] sm:$0xff]
  %v1753 = vld [vmem:[%s0 + $0x120] sm:$0xff]
  %v1754 = vld [vmem:[%s0 + $0x128] sm:$0xff]
  %v1755 = vld [vmem:[%s0 + $0x130] sm:$0xff]
  %v1756 = vld [vmem:[%s0 + $0x138] sm:$0xff]
  %v1757 = vld [vmem:[%s0 + $0x140] sm:$0xff]
  %v1758 = vld [vmem:[%s0 + $0x148] sm:$0xff]
  %v1759 = vld [vmem:[%s0 + $0x150] sm:$0xff]
  %v1760 = vld [vmem:[%s0 + $0x158] sm:$0xff]
  %v1761 = vld [vmem:[%s0 + $0x160] sm:$0xff]
  %v1762 = vld [vmem:[%s0 + $0x168] sm:$0xff]
  %v1763 = vld [vmem:[%s0 + $0x170] sm:$0xff]
  %v1764 = vld [vmem:[%s0 + $0x178] sm:$0xff]
  %v1765 = vld [vmem:[%s0 + $0x180] sm:$0xff]
  %v1766 = vld [vmem:[%s0 + $0x188] sm:$0xff]
  %v1767 = vld [vmem:[%s0 + $0x190] sm:$0xff]
  %v1768 = vld [vmem:[%s0 + $0x198] sm:$0xff]
  %v1769 = vld [vmem:[%s0 + $0x1a0] sm:$0xff]
  %v1770 = vld [vmem:[%s0 + $0x1a8] sm:$0xff]
  %v1771 = vld [vmem:[%s0 + $0x1b0] sm:$0xff]
  %v1772 = vld [vmem:[%s0 + $0x1b8] sm:$0xff]
  %v1773 = vld [vmem:[%s0 + $0x1c0] sm:$0xff]
  %v1774 = vld [vmem:[%s0 + $0x1c8] sm:$0xff]
  %v1775 = vld [vmem:[%s0 + $0x1d0] sm:$0xff]
  %v1776 = vld [vmem:[%s0 + $0x1d8] sm:$0xff]
  %v1777 = vld [vmem:[%s0 + $0x1e0] sm:$0xff]
  %v1778 = vld [vmem:[%s0 + $0x1e8] sm:$0xff]
  %v1779 = vld [vmem:[%s0 + $0x1f0] sm:$0xff]
  %v1780 = vld [vmem:[%s0 + $0x1f8] sm:$0xff]
  %1845 = vrot.lane.b32.xlu0 %v1717, 64
  %v1846 = vpop.permute.xlu0 %1845
  %1847 = vrot.lane.b32.xlu0 %v1718, 64
  %v1848 = vpop.permute.xlu0 %1847
  %1849 = vrot.lane.b32.xlu0 %v1719, 64
  %v1850 = vpop.permute.xlu0 %1849
  %1851 = vrot.lane.b32.xlu0 %v1720, 64
  %v1852 = vpop.permute.xlu0 %1851
  %1853 = vrot.lane.b32.xlu0 %v1721, 64
  %v1854 = vpop.permute.xlu0 %1853
  %1855 = vrot.lane.b32.xlu0 %v1722, 64
  %v1856 = vpop.permute.xlu0 %1855
  %1857 = vrot.lane.b32.xlu0 %v1723, 64
  %v1858 = vpop.permute.xlu0 %1857
  %1859 = vrot.lane.b32.xlu0 %v1724, 64
  %v1860 = vpop.permute.xlu0 %1859
  %1861 = vrot.lane.b32.xlu0 %v1725, 64
  %v1862 = vpop.permute.xlu0 %1861
  %1863 = vrot.lane.b32.xlu0 %v1726, 64
  %v1864 = vpop.permute.xlu0 %1863
  %1865 = vrot.lane.b32.xlu0 %v1727, 64
  %v1866 = vpop.permute.xlu0 %1865
  %1867 = vrot.lane.b32.xlu0 %v1728, 64
  %v1868 = vpop.permute.xlu0 %1867
  %1869 = vrot.lane.b32.xlu0 %v1729, 64
  %v1870 = vpop.permute.xlu0 %1869
  %1871 = vrot.lane.b32.xlu0 %v1730, 64
  %v1872 = vpop.permute.xlu0 %1871
  %1873 = vrot.lane.b32.xlu0 %v1731, 64
  %v1874 = vpop.permute.xlu0 %1873
  %1875 = vrot.lane.b32.xlu0 %v1732, 64
  %v1876 = vpop.permute.xlu0 %1875
  %1877 = vrot.lane.b32.xlu0 %v1733, 64
  %v1878 = vpop.permute.xlu0 %1877
  %1879 = vrot.lane.b32.xlu0 %v1734, 64
  %v1880 = vpop.permute.xlu0 %1879
  %1881 = vrot.lane.b32.xlu0 %v1735, 64
  %v1882 = vpop.permute.xlu0 %1881
  %1883 = vrot.lane.b32.xlu0 %v1736, 64
  %v1884 = vpop.permute.xlu0 %1883
  %1885 = vrot.lane.b32.xlu0 %v1737, 64
  %v1886 = vpop.permute.xlu0 %1885
  %1887 = vrot.lane.b32.xlu0 %v1738, 64
  %v1888 = vpop.permute.xlu0 %1887
  %1889 = vrot.lane.b32.xlu0 %v1739, 64
  %v1890 = vpop.permute.xlu0 %1889
  %1891 = vrot.lane.b32.xlu0 %v1740, 64
  %v1892 = vpop.permute.xlu0 %1891
  %1893 = vrot.lane.b32.xlu0 %v1741, 64
  %v1894 = vpop.permute.xlu0 %1893
  %1895 = vrot.lane.b32.xlu0 %v1742, 64
  %v1896 = vpop.permute.xlu0 %1895
  %1897 = vrot.lane.b32.xlu0 %v1743, 64
  %v1898 = vpop.permute.xlu0 %1897
  %1899 = vrot.lane.b32.xlu0 %v1744, 64
  %v1900 = vpop.permute.xlu0 %1899
  %1901 = vrot.lane.b32.xlu0 %v1745, 64
  %v1902 = vpop.permute.xlu0 %1901
  %1903 = vrot.lane.b32.xlu0 %v1746, 64
  %v1904 = vpop.permute.xlu0 %1903
  %1905 = vrot.lane.b32.xlu0 %v1747, 64
  %v1906 = vpop.permute.xlu0 %1905
  %1907 = vrot.lane.b32.xlu0 %v1748, 64
  %v1908 = vpop.permute.xlu0 %1907
  %1909 = vrot.lane.b32.xlu0 %v1749, 64
  %v1910 = vpop.permute.xlu0 %1909
  %1911 = vrot.lane.b32.xlu0 %v1750, 64
  %v1912 = vpop.permute.xlu0 %1911
  %1913 = vrot.lane.b32.xlu0 %v1751, 64
  %v1914 = vpop.permute.xlu0 %1913
  %1915 = vrot.lane.b32.xlu0 %v1752, 64
  %v1916 = vpop.permute.xlu0 %1915
  %1917 = vrot.lane.b32.xlu0 %v1753, 64
  %v1918 = vpop.permute.xlu0 %1917
  %1919 = vrot.lane.b32.xlu0 %v1754, 64
  %v1920 = vpop.permute.xlu0 %1919
  %1921 = vrot.lane.b32.xlu0 %v1755, 64
  %v1922 = vpop.permute.xlu0 %1921
  %1923 = vrot.lane.b32.xlu0 %v1756, 64
  %v1924 = vpop.permute.xlu0 %1923
  %1925 = vrot.lane.b32.xlu0 %v1757, 64
  %v1926 = vpop.permute.xlu0 %1925
  %1927 = vrot.lane.b32.xlu0 %v1758, 64
  %v1928 = vpop.permute.xlu0 %1927
  %1929 = vrot.lane.b32.xlu0 %v1759, 64
  %v1930 = vpop.permute.xlu0 %1929
  %1931 = vrot.lane.b32.xlu0 %v1760, 64
  %v1932 = vpop.permute.xlu0 %1931
  %1933 = vrot.lane.b32.xlu0 %v1761, 64
  %v1934 = vpop.permute.xlu0 %1933
  %1935 = vrot.lane.b32.xlu0 %v1762, 64
  %v1936 = vpop.permute.xlu0 %1935
  %1937 = vrot.lane.b32.xlu0 %v1763, 64
  %v1938 = vpop.permute.xlu0 %1937
  %1939 = vrot.lane.b32.xlu0 %v1764, 64
  %v1940 = vpop.permute.xlu0 %1939
  %1941 = vrot.lane.b32.xlu0 %v1765, 64
  %v1942 = vpop.permute.xlu0 %1941
  %1943 = vrot.lane.b32.xlu0 %v1766, 64
  %v1944 = vpop.permute.xlu0 %1943
  %1945 = vrot.lane.b32.xlu0 %v1767, 64
  %v1946 = vpop.permute.xlu0 %1945
  %1947 = vrot.lane.b32.xlu0 %v1768, 64
  %v1948 = vpop.permute.xlu0 %1947
  %1949 = vrot.lane.b32.xlu0 %v1769, 64
  %v1950 = vpop.permute.xlu0 %1949
  %1951 = vrot.lane.b32.xlu0 %v1770, 64
  %v1952 = vpop.permute.xlu0 %1951
  %1953 = vrot.lane.b32.xlu0 %v1771, 64
  %v1954 = vpop.permute.xlu0 %1953
  %1955 = vrot.lane.b32.xlu0 %v1772, 64
  %v1956 = vpop.permute.xlu0 %1955
  %1957 = vrot.lane.b32.xlu0 %v1773, 64
  %v1958 = vpop.permute.xlu0 %1957
  %1959 = vrot.lane.b32.xlu0 %v1774, 64
  %v1960 = vpop.permute.xlu0 %1959
  %1961 = vrot.lane.b32.xlu0 %v1775, 64
  %v1962 = vpop.permute.xlu0 %1961
  %1963 = vrot.lane.b32.xlu0 %v1776, 64
  %v1964 = vpop.permute.xlu0 %1963
  %1965 = vrot.lane.b32.xlu0 %v1777, 64
  %v1966 = vpop.permute.xlu0 %1965
  %1967 = vrot.lane.b32.xlu0 %v1778, 64
  %v1968 = vpop.permute.xlu0 %1967
  %1969 = vrot.lane.b32.xlu0 %v1779, 64
  %v1970 = vpop.permute.xlu0 %1969
  %1971 = vrot.lane.b32.xlu0 %v1780, 64
  %v1972 = vpop.permute.xlu0 %1971
  %vm2037 = vcmask 654848
  %2038 = vst.msk [vmem:[#allocation2] sm:$0xff] %vm2037, %v1846
  %2039 = vst.msk [vmem:[#allocation2 + $0x10] sm:$0xff] %vm2037, %v1848
  %2040 = vst.msk [vmem:[#allocation2 + $0x20] sm:$0xff] %vm2037, %v1850
  %2041 = vst.msk [vmem:[#allocation2 + $0x30] sm:$0xff] %vm2037, %v1852
  %2042 = vst.msk [vmem:[#allocation2 + $0x40] sm:$0xff] %vm2037, %v1854
  %2043 = vst.msk [vmem:[#allocation2 + $0x50] sm:$0xff] %vm2037, %v1856
  %2044 = vst.msk [vmem:[#allocation2 + $0x60] sm:$0xff] %vm2037, %v1858
  %2045 = vst.msk [vmem:[#allocation2 + $0x70] sm:$0xff] %vm2037, %v1860
  %2046 = vst.msk [vmem:[#allocation2 + $0x80] sm:$0xff] %vm2037, %v1862
  %2047 = vst.msk [vmem:[#allocation2 + $0x90] sm:$0xff] %vm2037, %v1864
  %2048 = vst.msk [vmem:[#allocation2 + $0xa0] sm:$0xff] %vm2037, %v1866
  %2049 = vst.msk [vmem:[#allocation2 + $0xb0] sm:$0xff] %vm2037, %v1868
  %2050 = vst.msk [vmem:[#allocation2 + $0xc0] sm:$0xff] %vm2037, %v1870
  %2051 = vst.msk [vmem:[#allocation2 + $0xd0] sm:$0xff] %vm2037, %v1872
  %2052 = vst.msk [vmem:[#allocation2 + $0xe0] sm:$0xff] %vm2037, %v1874
  %2053 = vst.msk [vmem:[#allocation2 + $0xf0] sm:$0xff] %vm2037, %v1876
  %2054 = vst.msk [vmem:[#allocation2 + $0x100] sm:$0xff] %vm2037, %v1878
  %2055 = vst.msk [vmem:[#allocation2 + $0x110] sm:$0xff] %vm2037, %v1880
  %2056 = vst.msk [vmem:[#allocation2 + $0x120] sm:$0xff] %vm2037, %v1882
  %2057 = vst.msk [vmem:[#allocation2 + $0x130] sm:$0xff] %vm2037, %v1884
  %2058 = vst.msk [vmem:[#allocation2 + $0x140] sm:$0xff] %vm2037, %v1886
  %2059 = vst.msk [vmem:[#allocation2 + $0x150] sm:$0xff] %vm2037, %v1888
  %2060 = vst.msk [vmem:[#allocation2 + $0x160] sm:$0xff] %vm2037, %v1890
  %2061 = vst.msk [vmem:[#allocation2 + $0x170] sm:$0xff] %vm2037, %v1892
  %2062 = vst.msk [vmem:[#allocation2 + $0x180] sm:$0xff] %vm2037, %v1894
  %2063 = vst.msk [vmem:[#allocation2 + $0x190] sm:$0xff] %vm2037, %v1896
  %2064 = vst.msk [vmem:[#allocation2 + $0x1a0] sm:$0xff] %vm2037, %v1898
  %2065 = vst.msk [vmem:[#allocation2 + $0x1b0] sm:$0xff] %vm2037, %v1900
  %2066 = vst.msk [vmem:[#allocation2 + $0x1c0] sm:$0xff] %vm2037, %v1902
  %2067 = vst.msk [vmem:[#allocation2 + $0x1d0] sm:$0xff] %vm2037, %v1904
  %2068 = vst.msk [vmem:[#allocation2 + $0x1e0] sm:$0xff] %vm2037, %v1906
  %2069 = vst.msk [vmem:[#allocation2 + $0x1f0] sm:$0xff] %vm2037, %v1908
  %2070 = vst.msk [vmem:[#allocation2 + $0x200] sm:$0xff] %vm2037, %v1910
  %2071 = vst.msk [vmem:[#allocation2 + $0x210] sm:$0xff] %vm2037, %v1912
  %2072 = vst.msk [vmem:[#allocation2 + $0x220] sm:$0xff] %vm2037, %v1914
  %2073 = vst.msk [vmem:[#allocation2 + $0x230] sm:$0xff] %vm2037, %v1916
  %2074 = vst.msk [vmem:[#allocation2 + $0x240] sm:$0xff] %vm2037, %v1918
  %2075 = vst.msk [vmem:[#allocation2 + $0x250] sm:$0xff] %vm2037, %v1920
  %2076 = vst.msk [vmem:[#allocation2 + $0x260] sm:$0xff] %vm2037, %v1922
  %2077 = vst.msk [vmem:[#allocation2 + $0x270] sm:$0xff] %vm2037, %v1924
  %2078 = vst.msk [vmem:[#allocation2 + $0x280] sm:$0xff] %vm2037, %v1926
  %2079 = vst.msk [vmem:[#allocation2 + $0x290] sm:$0xff] %vm2037, %v1928
  %2080 = vst.msk [vmem:[#allocation2 + $0x2a0] sm:$0xff] %vm2037, %v1930
  %2081 = vst.msk [vmem:[#allocation2 + $0x2b0] sm:$0xff] %vm2037, %v1932
  %2082 = vst.msk [vmem:[#allocation2 + $0x2c0] sm:$0xff] %vm2037, %v1934
  %2083 = vst.msk [vmem:[#allocation2 + $0x2d0] sm:$0xff] %vm2037, %v1936
  %2084 = vst.msk [vmem:[#allocation2 + $0x2e0] sm:$0xff] %vm2037, %v1938
  %2085 = vst.msk [vmem:[#allocation2 + $0x2f0] sm:$0xff] %vm2037, %v1940
  %2086 = vst.msk [vmem:[#allocation2 + $0x300] sm:$0xff] %vm2037, %v1942
  %2087 = vst.msk [vmem:[#allocation2 + $0x310] sm:$0xff] %vm2037, %v1944
  %2088 = vst.msk [vmem:[#allocation2 + $0x320] sm:$0xff] %vm2037, %v1946
  %2089 = vst.msk [vmem:[#allocation2 + $0x330] sm:$0xff] %vm2037, %v1948
  %2090 = vst.msk [vmem:[#allocation2 + $0x340] sm:$0xff] %vm2037, %v1950
  %2091 = vst.msk [vmem:[#allocation2 + $0x350] sm:$0xff] %vm2037, %v1952
  %2092 = vst.msk [vmem:[#allocation2 + $0x360] sm:$0xff] %vm2037, %v1954
  %2093 = vst.msk [vmem:[#allocation2 + $0x370] sm:$0xff] %vm2037, %v1956
  %2094 = vst.msk [vmem:[#allocation2 + $0x380] sm:$0xff] %vm2037, %v1958
  %2095 = vst.msk [vmem:[#allocation2 + $0x390] sm:$0xff] %vm2037, %v1960
  %2096 = vst.msk [vmem:[#allocation2 + $0x3a0] sm:$0xff] %vm2037, %v1962
  %2097 = vst.msk [vmem:[#allocation2 + $0x3b0] sm:$0xff] %vm2037, %v1964
  %2098 = vst.msk [vmem:[#allocation2 + $0x3c0] sm:$0xff] %vm2037, %v1966
  %2099 = vst.msk [vmem:[#allocation2 + $0x3d0] sm:$0xff] %vm2037, %v1968
  %2100 = vst.msk [vmem:[#allocation2 + $0x3e0] sm:$0xff] %vm2037, %v1970
  %2101 = vst.msk [vmem:[#allocation2 + $0x3f0] sm:$0xff] %vm2037, %v1972
  %v2102 = vld [vmem:[%s0 + $0x1] sm:$0xff]
  %v2103 = vld [vmem:[%s0 + $0x9] sm:$0x7f]
  %v2104 = vld [vmem:[%s0 + $0x11] sm:$0xff]
  %v2105 = vld [vmem:[%s0 + $0x19] sm:$0x7f]
  %v2106 = vld [vmem:[%s0 + $0x21] sm:$0xff]
  %v2107 = vld [vmem:[%s0 + $0x29] sm:$0x7f]
  %v2108 = vld [vmem:[%s0 + $0x31] sm:$0xff]
  %v2109 = vld [vmem:[%s0 + $0x39] sm:$0x7f]
  %v2110 = vld [vmem:[%s0 + $0x41] sm:$0xff]
  %v2111 = vld [vmem:[%s0 + $0x49] sm:$0x7f]
  %v2112 = vld [vmem:[%s0 + $0x51] sm:$0xff]
  %v2113 = vld [vmem:[%s0 + $0x59] sm:$0x7f]
  %v2114 = vld [vmem:[%s0 + $0x61] sm:$0xff]
  %v2115 = vld [vmem:[%s0 + $0x69] sm:$0x7f]
  %v2116 = vld [vmem:[%s0 + $0x71] sm:$0xff]
  %v2117 = vld [vmem:[%s0 + $0x79] sm:$0x7f]
  %v2118 = vld [vmem:[%s0 + $0x81] sm:$0xff]
  %v2119 = vld [vmem:[%s0 + $0x89] sm:$0x7f]
  %v2120 = vld [vmem:[%s0 + $0x91] sm:$0xff]
  %v2121 = vld [vmem:[%s0 + $0x99] sm:$0x7f]
  %v2122 = vld [vmem:[%s0 + $0xa1] sm:$0xff]
  %v2123 = vld [vmem:[%s0 + $0xa9] sm:$0x7f]
  %v2124 = vld [vmem:[%s0 + $0xb1] sm:$0xff]
  %v2125 = vld [vmem:[%s0 + $0xb9] sm:$0x7f]
  %v2126 = vld [vmem:[%s0 + $0xc1] sm:$0xff]
  %v2127 = vld [vmem:[%s0 + $0xc9] sm:$0x7f]
  %v2128 = vld [vmem:[%s0 + $0xd1] sm:$0xff]
  %v2129 = vld [vmem:[%s0 + $0xd9] sm:$0x7f]
  %v2130 = vld [vmem:[%s0 + $0xe1] sm:$0xff]
  %v2131 = vld [vmem:[%s0 + $0xe9] sm:$0x7f]
  %v2132 = vld [vmem:[%s0 + $0xf1] sm:$0xff]
  %v2133 = vld [vmem:[%s0 + $0xf9] sm:$0x7f]
  %v2134 = vld [vmem:[%s0 + $0x101] sm:$0xff]
  %v2135 = vld [vmem:[%s0 + $0x109] sm:$0x7f]
  %v2136 = vld [vmem:[%s0 + $0x111] sm:$0xff]
  %v2137 = vld [vmem:[%s0 + $0x119] sm:$0x7f]
  %v2138 = vld [vmem:[%s0 + $0x121] sm:$0xff]
  %v2139 = vld [vmem:[%s0 + $0x129] sm:$0x7f]
  %v2140 = vld [vmem:[%s0 + $0x131] sm:$0xff]
  %v2141 = vld [vmem:[%s0 + $0x139] sm:$0x7f]
  %v2142 = vld [vmem:[%s0 + $0x141] sm:$0xff]
  %v2143 = vld [vmem:[%s0 + $0x149] sm:$0x7f]
  %v2144 = vld [vmem:[%s0 + $0x151] sm:$0xff]
  %v2145 = vld [vmem:[%s0 + $0x159] sm:$0x7f]
  %v2146 = vld [vmem:[%s0 + $0x161] sm:$0xff]
  %v2147 = vld [vmem:[%s0 + $0x169] sm:$0x7f]
  %v2148 = vld [vmem:[%s0 + $0x171] sm:$0xff]
  %v2149 = vld [vmem:[%s0 + $0x179] sm:$0x7f]
  %v2150 = vld [vmem:[%s0 + $0x181] sm:$0xff]
  %v2151 = vld [vmem:[%s0 + $0x189] sm:$0x7f]
  %v2152 = vld [vmem:[%s0 + $0x191] sm:$0xff]
  %v2153 = vld [vmem:[%s0 + $0x199] sm:$0x7f]
  %v2154 = vld [vmem:[%s0 + $0x1a1] sm:$0xff]
  %v2155 = vld [vmem:[%s0 + $0x1a9] sm:$0x7f]
  %v2156 = vld [vmem:[%s0 + $0x1b1] sm:$0xff]
  %v2157 = vld [vmem:[%s0 + $0x1b9] sm:$0x7f]
  %v2158 = vld [vmem:[%s0 + $0x1c1] sm:$0xff]
  %v2159 = vld [vmem:[%s0 + $0x1c9] sm:$0x7f]
  %v2160 = vld [vmem:[%s0 + $0x1d1] sm:$0xff]
  %v2161 = vld [vmem:[%s0 + $0x1d9] sm:$0x7f]
  %v2162 = vld [vmem:[%s0 + $0x1e1] sm:$0xff]
  %v2163 = vld [vmem:[%s0 + $0x1e9] sm:$0x7f]
  %v2164 = vld [vmem:[%s0 + $0x1f1] sm:$0xff]
  %v2165 = vld [vmem:[%s0 + $0x1f9] sm:$0x7f]
  %2230 = vrot.lane.b32.xlu0 %v2102, 80
  %v2231 = vpop.permute.xlu0 %2230
  %2232 = vrot.lane.b32.xlu0 %v2103, 80
  %v2233 = vpop.permute.xlu0 %2232
  %2234 = vrot.lane.b32.xlu0 %v2104, 80
  %v2235 = vpop.permute.xlu0 %2234
  %2236 = vrot.lane.b32.xlu0 %v2105, 80
  %v2237 = vpop.permute.xlu0 %2236
  %2238 = vrot.lane.b32.xlu0 %v2106, 80
  %v2239 = vpop.permute.xlu0 %2238
  %2240 = vrot.lane.b32.xlu0 %v2107, 80
  %v2241 = vpop.permute.xlu0 %2240
  %2242 = vrot.lane.b32.xlu0 %v2108, 80
  %v2243 = vpop.permute.xlu0 %2242
  %2244 = vrot.lane.b32.xlu0 %v2109, 80
  %v2245 = vpop.permute.xlu0 %2244
  %2246 = vrot.lane.b32.xlu0 %v2110, 80
  %v2247 = vpop.permute.xlu0 %2246
  %2248 = vrot.lane.b32.xlu0 %v2111, 80
  %v2249 = vpop.permute.xlu0 %2248
  %2250 = vrot.lane.b32.xlu0 %v2112, 80
  %v2251 = vpop.permute.xlu0 %2250
  %2252 = vrot.lane.b32.xlu0 %v2113, 80
  %v2253 = vpop.permute.xlu0 %2252
  %2254 = vrot.lane.b32.xlu0 %v2114, 80
  %v2255 = vpop.permute.xlu0 %2254
  %2256 = vrot.lane.b32.xlu0 %v2115, 80
  %v2257 = vpop.permute.xlu0 %2256
  %2258 = vrot.lane.b32.xlu0 %v2116, 80
  %v2259 = vpop.permute.xlu0 %2258
  %2260 = vrot.lane.b32.xlu0 %v2117, 80
  %v2261 = vpop.permute.xlu0 %2260
  %2262 = vrot.lane.b32.xlu0 %v2118, 80
  %v2263 = vpop.permute.xlu0 %2262
  %2264 = vrot.lane.b32.xlu0 %v2119, 80
  %v2265 = vpop.permute.xlu0 %2264
  %2266 = vrot.lane.b32.xlu0 %v2120, 80
  %v2267 = vpop.permute.xlu0 %2266
  %2268 = vrot.lane.b32.xlu0 %v2121, 80
  %v2269 = vpop.permute.xlu0 %2268
  %2270 = vrot.lane.b32.xlu0 %v2122, 80
  %v2271 = vpop.permute.xlu0 %2270
  %2272 = vrot.lane.b32.xlu0 %v2123, 80
  %v2273 = vpop.permute.xlu0 %2272
  %2274 = vrot.lane.b32.xlu0 %v2124, 80
  %v2275 = vpop.permute.xlu0 %2274
  %2276 = vrot.lane.b32.xlu0 %v2125, 80
  %v2277 = vpop.permute.xlu0 %2276
  %2278 = vrot.lane.b32.xlu0 %v2126, 80
  %v2279 = vpop.permute.xlu0 %2278
  %2280 = vrot.lane.b32.xlu0 %v2127, 80
  %v2281 = vpop.permute.xlu0 %2280
  %2282 = vrot.lane.b32.xlu0 %v2128, 80
  %v2283 = vpop.permute.xlu0 %2282
  %2284 = vrot.lane.b32.xlu0 %v2129, 80
  %v2285 = vpop.permute.xlu0 %2284
  %2286 = vrot.lane.b32.xlu0 %v2130, 80
  %v2287 = vpop.permute.xlu0 %2286
  %2288 = vrot.lane.b32.xlu0 %v2131, 80
  %v2289 = vpop.permute.xlu0 %2288
  %2290 = vrot.lane.b32.xlu0 %v2132, 80
  %v2291 = vpop.permute.xlu0 %2290
  %2292 = vrot.lane.b32.xlu0 %v2133, 80
  %v2293 = vpop.permute.xlu0 %2292
  %2294 = vrot.lane.b32.xlu0 %v2134, 80
  %v2295 = vpop.permute.xlu0 %2294
  %2296 = vrot.lane.b32.xlu0 %v2135, 80
  %v2297 = vpop.permute.xlu0 %2296
  %2298 = vrot.lane.b32.xlu0 %v2136, 80
  %v2299 = vpop.permute.xlu0 %2298
  %2300 = vrot.lane.b32.xlu0 %v2137, 80
  %v2301 = vpop.permute.xlu0 %2300
  %2302 = vrot.lane.b32.xlu0 %v2138, 80
  %v2303 = vpop.permute.xlu0 %2302
  %2304 = vrot.lane.b32.xlu0 %v2139, 80
  %v2305 = vpop.permute.xlu0 %2304
  %2306 = vrot.lane.b32.xlu0 %v2140, 80
  %v2307 = vpop.permute.xlu0 %2306
  %2308 = vrot.lane.b32.xlu0 %v2141, 80
  %v2309 = vpop.permute.xlu0 %2308
  %2310 = vrot.lane.b32.xlu0 %v2142, 80
  %v2311 = vpop.permute.xlu0 %2310
  %2312 = vrot.lane.b32.xlu0 %v2143, 80
  %v2313 = vpop.permute.xlu0 %2312
  %2314 = vrot.lane.b32.xlu0 %v2144, 80
  %v2315 = vpop.permute.xlu0 %2314
  %2316 = vrot.lane.b32.xlu0 %v2145, 80
  %v2317 = vpop.permute.xlu0 %2316
  %2318 = vrot.lane.b32.xlu0 %v2146, 80
  %v2319 = vpop.permute.xlu0 %2318
  %2320 = vrot.lane.b32.xlu0 %v2147, 80
  %v2321 = vpop.permute.xlu0 %2320
  %2322 = vrot.lane.b32.xlu0 %v2148, 80
  %v2323 = vpop.permute.xlu0 %2322
  %2324 = vrot.lane.b32.xlu0 %v2149, 80
  %v2325 = vpop.permute.xlu0 %2324
  %2326 = vrot.lane.b32.xlu0 %v2150, 80
  %v2327 = vpop.permute.xlu0 %2326
  %2328 = vrot.lane.b32.xlu0 %v2151, 80
  %v2329 = vpop.permute.xlu0 %2328
  %2330 = vrot.lane.b32.xlu0 %v2152, 80
  %v2331 = vpop.permute.xlu0 %2330
  %2332 = vrot.lane.b32.xlu0 %v2153, 80
  %v2333 = vpop.permute.xlu0 %2332
  %2334 = vrot.lane.b32.xlu0 %v2154, 80
  %v2335 = vpop.permute.xlu0 %2334
  %2336 = vrot.lane.b32.xlu0 %v2155, 80
  %v2337 = vpop.permute.xlu0 %2336
  %2338 = vrot.lane.b32.xlu0 %v2156, 80
  %v2339 = vpop.permute.xlu0 %2338
  %2340 = vrot.lane.b32.xlu0 %v2157, 80
  %v2341 = vpop.permute.xlu0 %2340
  %2342 = vrot.lane.b32.xlu0 %v2158, 80
  %v2343 = vpop.permute.xlu0 %2342
  %2344 = vrot.lane.b32.xlu0 %v2159, 80
  %v2345 = vpop.permute.xlu0 %2344
  %2346 = vrot.lane.b32.xlu0 %v2160, 80
  %v2347 = vpop.permute.xlu0 %2346
  %2348 = vrot.lane.b32.xlu0 %v2161, 80
  %v2349 = vpop.permute.xlu0 %2348
  %2350 = vrot.lane.b32.xlu0 %v2162, 80
  %v2351 = vpop.permute.xlu0 %2350
  %2352 = vrot.lane.b32.xlu0 %v2163, 80
  %v2353 = vpop.permute.xlu0 %2352
  %2354 = vrot.lane.b32.xlu0 %v2164, 80
  %v2355 = vpop.permute.xlu0 %2354
  %2356 = vrot.lane.b32.xlu0 %v2165, 80
  %v2357 = vpop.permute.xlu0 %2356
  %vm2422 = vcmask 786048
  %2423 = vst.msk [vmem:[#allocation2] sm:$0xff] %vm2422, %v2231
  %vm2424 = vcmask 785024
  %2425 = vst.msk [vmem:[#allocation2 + $0x10] sm:$0x7f] %vm2424, %v2233
  %2426 = vst.msk [vmem:[#allocation2 + $0x20] sm:$0xff] %vm2422, %v2235
  %2427 = vst.msk [vmem:[#allocation2 + $0x30] sm:$0x7f] %vm2424, %v2237
  %2428 = vst.msk [vmem:[#allocation2 + $0x40] sm:$0xff] %vm2422, %v2239
  %2429 = vst.msk [vmem:[#allocation2 + $0x50] sm:$0x7f] %vm2424, %v2241
  %2430 = vst.msk [vmem:[#allocation2 + $0x60] sm:$0xff] %vm2422, %v2243
  %2431 = vst.msk [vmem:[#allocation2 + $0x70] sm:$0x7f] %vm2424, %v2245
  %2432 = vst.msk [vmem:[#allocation2 + $0x80] sm:$0xff] %vm2422, %v2247
  %2433 = vst.msk [vmem:[#allocation2 + $0x90] sm:$0x7f] %vm2424, %v2249
  %2434 = vst.msk [vmem:[#allocation2 + $0xa0] sm:$0xff] %vm2422, %v2251
  %2435 = vst.msk [vmem:[#allocation2 + $0xb0] sm:$0x7f] %vm2424, %v2253
  %2436 = vst.msk [vmem:[#allocation2 + $0xc0] sm:$0xff] %vm2422, %v2255
  %2437 = vst.msk [vmem:[#allocation2 + $0xd0] sm:$0x7f] %vm2424, %v2257
  %2438 = vst.msk [vmem:[#allocation2 + $0xe0] sm:$0xff] %vm2422, %v2259
  %2439 = vst.msk [vmem:[#allocation2 + $0xf0] sm:$0x7f] %vm2424, %v2261
  %2440 = vst.msk [vmem:[#allocation2 + $0x100] sm:$0xff] %vm2422, %v2263
  %2441 = vst.msk [vmem:[#allocation2 + $0x110] sm:$0x7f] %vm2424, %v2265
  %2442 = vst.msk [vmem:[#allocation2 + $0x120] sm:$0xff] %vm2422, %v2267
  %2443 = vst.msk [vmem:[#allocation2 + $0x130] sm:$0x7f] %vm2424, %v2269
  %2444 = vst.msk [vmem:[#allocation2 + $0x140] sm:$0xff] %vm2422, %v2271
  %2445 = vst.msk [vmem:[#allocation2 + $0x150] sm:$0x7f] %vm2424, %v2273
  %2446 = vst.msk [vmem:[#allocation2 + $0x160] sm:$0xff] %vm2422, %v2275
  %2447 = vst.msk [vmem:[#allocation2 + $0x170] sm:$0x7f] %vm2424, %v2277
  %2448 = vst.msk [vmem:[#allocation2 + $0x180] sm:$0xff] %vm2422, %v2279
  %2449 = vst.msk [vmem:[#allocation2 + $0x190] sm:$0x7f] %vm2424, %v2281
  %2450 = vst.msk [vmem:[#allocation2 + $0x1a0] sm:$0xff] %vm2422, %v2283
  %2451 = vst.msk [vmem:[#allocation2 + $0x1b0] sm:$0x7f] %vm2424, %v2285
  %2452 = vst.msk [vmem:[#allocation2 + $0x1c0] sm:$0xff] %vm2422, %v2287
  %2453 = vst.msk [vmem:[#allocation2 + $0x1d0] sm:$0x7f] %vm2424, %v2289
  %2454 = vst.msk [vmem:[#allocation2 + $0x1e0] sm:$0xff] %vm2422, %v2291
  %2455 = vst.msk [vmem:[#allocation2 + $0x1f0] sm:$0x7f] %vm2424, %v2293
  %2456 = vst.msk [vmem:[#allocation2 + $0x200] sm:$0xff] %vm2422, %v2295
  %2457 = vst.msk [vmem:[#allocation2 + $0x210] sm:$0x7f] %vm2424, %v2297
  %2458 = vst.msk [vmem:[#allocation2 + $0x220] sm:$0xff] %vm2422, %v2299
  %2459 = vst.msk [vmem:[#allocation2 + $0x230] sm:$0x7f] %vm2424, %v2301
  %2460 = vst.msk [vmem:[#allocation2 + $0x240] sm:$0xff] %vm2422, %v2303
  %2461 = vst.msk [vmem:[#allocation2 + $0x250] sm:$0x7f] %vm2424, %v2305
  %2462 = vst.msk [vmem:[#allocation2 + $0x260] sm:$0xff] %vm2422, %v2307
  %2463 = vst.msk [vmem:[#allocation2 + $0x270] sm:$0x7f] %vm2424, %v2309
  %2464 = vst.msk [vmem:[#allocation2 + $0x280] sm:$0xff] %vm2422, %v2311
  %2465 = vst.msk [vmem:[#allocation2 + $0x290] sm:$0x7f] %vm2424, %v2313
  %2466 = vst.msk [vmem:[#allocation2 + $0x2a0] sm:$0xff] %vm2422, %v2315
  %2467 = vst.msk [vmem:[#allocation2 + $0x2b0] sm:$0x7f] %vm2424, %v2317
  %2468 = vst.msk [vmem:[#allocation2 + $0x2c0] sm:$0xff] %vm2422, %v2319
  %2469 = vst.msk [vmem:[#allocation2 + $0x2d0] sm:$0x7f] %vm2424, %v2321
  %2470 = vst.msk [vmem:[#allocation2 + $0x2e0] sm:$0xff] %vm2422, %v2323
  %2471 = vst.msk [vmem:[#allocation2 + $0x2f0] sm:$0x7f] %vm2424, %v2325
  %2472 = vst.msk [vmem:[#allocation2 + $0x300] sm:$0xff] %vm2422, %v2327
  %2473 = vst.msk [vmem:[#allocation2 + $0x310] sm:$0x7f] %vm2424, %v2329
  %2474 = vst.msk [vmem:[#allocation2 + $0x320] sm:$0xff] %vm2422, %v2331
  %2475 = vst.msk [vmem:[#allocation2 + $0x330] sm:$0x7f] %vm2424, %v2333
  %2476 = vst.msk [vmem:[#allocation2 + $0x340] sm:$0xff] %vm2422, %v2335
  %2477 = vst.msk [vmem:[#allocation2 + $0x350] sm:$0x7f] %vm2424, %v2337
  %2478 = vst.msk [vmem:[#allocation2 + $0x360] sm:$0xff] %vm2422, %v2339
  %2479 = vst.msk [vmem:[#allocation2 + $0x370] sm:$0x7f] %vm2424, %v2341
  %2480 = vst.msk [vmem:[#allocation2 + $0x380] sm:$0xff] %vm2422, %v2343
  %2481 = vst.msk [vmem:[#allocation2 + $0x390] sm:$0x7f] %vm2424, %v2345
  %2482 = vst.msk [vmem:[#allocation2 + $0x3a0] sm:$0xff] %vm2422, %v2347
  %2483 = vst.msk [vmem:[#allocation2 + $0x3b0] sm:$0x7f] %vm2424, %v2349
  %2484 = vst.msk [vmem:[#allocation2 + $0x3c0] sm:$0xff] %vm2422, %v2351
  %2485 = vst.msk [vmem:[#allocation2 + $0x3d0] sm:$0x7f] %vm2424, %v2353
  %2486 = vst.msk [vmem:[#allocation2 + $0x3e0] sm:$0xff] %vm2422, %v2355
  %2487 = vst.msk [vmem:[#allocation2 + $0x3f0] sm:$0x7f] %vm2424, %v2357
  %s2488 = scalar_lea.vmem %s0, 16
  %v2489 = vld [vmem:[%s2488] sm:$0xff]
  %v2490 = vld [vmem:[%s2488 + $0x8] sm:$0x7f]
  %v2491 = vld [vmem:[%s2488 + $0x10] sm:$0xff]
  %v2492 = vld [vmem:[%s2488 + $0x18] sm:$0x7f]
  %v2493 = vld [vmem:[%s2488 + $0x20] sm:$0xff]
  %v2494 = vld [vmem:[%s2488 + $0x28] sm:$0x7f]
  %v2495 = vld [vmem:[%s2488 + $0x30] sm:$0xff]
  %v2496 = vld [vmem:[%s2488 + $0x38] sm:$0x7f]
  %v2497 = vld [vmem:[%s2488 + $0x40] sm:$0xff]
  %v2498 = vld [vmem:[%s2488 + $0x48] sm:$0x7f]
  %v2499 = vld [vmem:[%s2488 + $0x50] sm:$0xff]
  %v2500 = vld [vmem:[%s2488 + $0x58] sm:$0x7f]
  %v2501 = vld [vmem:[%s2488 + $0x60] sm:$0xff]
  %v2502 = vld [vmem:[%s2488 + $0x68] sm:$0x7f]
  %v2503 = vld [vmem:[%s2488 + $0x70] sm:$0xff]
  %v2504 = vld [vmem:[%s2488 + $0x78] sm:$0x7f]
  %v2505 = vld [vmem:[%s2488 + $0x80] sm:$0xff]
  %v2506 = vld [vmem:[%s2488 + $0x88] sm:$0x7f]
  %v2507 = vld [vmem:[%s2488 + $0x90] sm:$0xff]
  %v2508 = vld [vmem:[%s2488 + $0x98] sm:$0x7f]
  %v2509 = vld [vmem:[%s2488 + $0xa0] sm:$0xff]
  %v2510 = vld [vmem:[%s2488 + $0xa8] sm:$0x7f]
  %v2511 = vld [vmem:[%s2488 + $0xb0] sm:$0xff]
  %v2512 = vld [vmem:[%s2488 + $0xb8] sm:$0x7f]
  %v2513 = vld [vmem:[%s2488 + $0xc0] sm:$0xff]
  %v2514 = vld [vmem:[%s2488 + $0xc8] sm:$0x7f]
  %v2515 = vld [vmem:[%s2488 + $0xd0] sm:$0xff]
  %v2516 = vld [vmem:[%s2488 + $0xd8] sm:$0x7f]
  %v2517 = vld [vmem:[%s2488 + $0xe0] sm:$0xff]
  %v2518 = vld [vmem:[%s2488 + $0xe8] sm:$0x7f]
  %v2519 = vld [vmem:[%s2488 + $0x100] sm:$0xff]
  %v2520 = vld [vmem:[%s2488 + $0x108] sm:$0x7f]
  %v2521 = vld [vmem:[%s2488 + $0x110] sm:$0xff]
  %v2522 = vld [vmem:[%s2488 + $0x118] sm:$0x7f]
  %v2523 = vld [vmem:[%s2488 + $0x120] sm:$0xff]
  %v2524 = vld [vmem:[%s2488 + $0x128] sm:$0x7f]
  %v2525 = vld [vmem:[%s2488 + $0x130] sm:$0xff]
  %v2526 = vld [vmem:[%s2488 + $0x138] sm:$0x7f]
  %v2527 = vld [vmem:[%s2488 + $0x140] sm:$0xff]
  %v2528 = vld [vmem:[%s2488 + $0x148] sm:$0x7f]
  %v2529 = vld [vmem:[%s2488 + $0x150] sm:$0xff]
  %v2530 = vld [vmem:[%s2488 + $0x158] sm:$0x7f]
  %v2531 = vld [vmem:[%s2488 + $0x160] sm:$0xff]
  %v2532 = vld [vmem:[%s2488 + $0x168] sm:$0x7f]
  %v2533 = vld [vmem:[%s2488 + $0x170] sm:$0xff]
  %v2534 = vld [vmem:[%s2488 + $0x178] sm:$0x7f]
  %v2535 = vld [vmem:[%s2488 + $0x180] sm:$0xff]
  %v2536 = vld [vmem:[%s2488 + $0x188] sm:$0x7f]
  %v2537 = vld [vmem:[%s2488 + $0x190] sm:$0xff]
  %v2538 = vld [vmem:[%s2488 + $0x198] sm:$0x7f]
  %v2539 = vld [vmem:[%s2488 + $0x1a0] sm:$0xff]
  %v2540 = vld [vmem:[%s2488 + $0x1a8] sm:$0x7f]
  %v2541 = vld [vmem:[%s2488 + $0x1b0] sm:$0xff]
  %v2542 = vld [vmem:[%s2488 + $0x1b8] sm:$0x7f]
  %v2543 = vld [vmem:[%s2488 + $0x1c0] sm:$0xff]
  %v2544 = vld [vmem:[%s2488 + $0x1c8] sm:$0x7f]
  %v2545 = vld [vmem:[%s2488 + $0x1d0] sm:$0xff]
  %v2546 = vld [vmem:[%s2488 + $0x1d8] sm:$0x7f]
  %v2547 = vld [vmem:[%s2488 + $0x1e0] sm:$0xff]
  %v2548 = vld [vmem:[%s2488 + $0x1e8] sm:$0x7f]
  %v2609 = vrot.slane %v2489, 7
  %v2610 = vrot.slane %v2490, 7
  %v2611 = vsel %vm299, %v2609, %v2610
  %v2612 = vrot.slane %v2491, 7
  %v2613 = vrot.slane %v2492, 7
  %v2614 = vsel %vm299, %v2612, %v2613
  %v2615 = vrot.slane %v2493, 7
  %v2616 = vrot.slane %v2494, 7
  %v2617 = vsel %vm299, %v2615, %v2616
  %v2618 = vrot.slane %v2495, 7
  %v2619 = vrot.slane %v2496, 7
  %v2620 = vsel %vm299, %v2618, %v2619
  %v2621 = vrot.slane %v2497, 7
  %v2622 = vrot.slane %v2498, 7
  %v2623 = vsel %vm299, %v2621, %v2622
  %v2624 = vrot.slane %v2499, 7
  %v2625 = vrot.slane %v2500, 7
  %v2626 = vsel %vm299, %v2624, %v2625
  %v2627 = vrot.slane %v2501, 7
  %v2628 = vrot.slane %v2502, 7
  %v2629 = vsel %vm299, %v2627, %v2628
  %v2630 = vrot.slane %v2503, 7
  %v2631 = vrot.slane %v2504, 7
  %v2632 = vsel %vm299, %v2630, %v2631
  %v2633 = vrot.slane %v2505, 7
  %v2634 = vrot.slane %v2506, 7
  %v2635 = vsel %vm299, %v2633, %v2634
  %v2636 = vrot.slane %v2507, 7
  %v2637 = vrot.slane %v2508, 7
  %v2638 = vsel %vm299, %v2636, %v2637
  %v2639 = vrot.slane %v2509, 7
  %v2640 = vrot.slane %v2510, 7
  %v2641 = vsel %vm299, %v2639, %v2640
  %v2642 = vrot.slane %v2511, 7
  %v2643 = vrot.slane %v2512, 7
  %v2644 = vsel %vm299, %v2642, %v2643
  %v2645 = vrot.slane %v2513, 7
  %v2646 = vrot.slane %v2514, 7
  %v2647 = vsel %vm299, %v2645, %v2646
  %v2648 = vrot.slane %v2515, 7
  %v2649 = vrot.slane %v2516, 7
  %v2650 = vsel %vm299, %v2648, %v2649
  %v2651 = vrot.slane %v2517, 7
  %v2652 = vrot.slane %v2518, 7
  %v2653 = vsel %vm299, %v2651, %v2652
  %v2654 = vrot.slane %v2519, 7
  %v2655 = vrot.slane %v2520, 7
  %v2656 = vsel %vm299, %v2654, %v2655
  %v2657 = vrot.slane %v2521, 7
  %v2658 = vrot.slane %v2522, 7
  %v2659 = vsel %vm299, %v2657, %v2658
  %v2660 = vrot.slane %v2523, 7
  %v2661 = vrot.slane %v2524, 7
  %v2662 = vsel %vm299, %v2660, %v2661
  %v2663 = vrot.slane %v2525, 7
  %v2664 = vrot.slane %v2526, 7
  %v2665 = vsel %vm299, %v2663, %v2664
  %v2666 = vrot.slane %v2527, 7
  %v2667 = vrot.slane %v2528, 7
  %v2668 = vsel %vm299, %v2666, %v2667
  %v2669 = vrot.slane %v2529, 7
  %v2670 = vrot.slane %v2530, 7
  %v2671 = vsel %vm299, %v2669, %v2670
  %v2672 = vrot.slane %v2531, 7
  %v2673 = vrot.slane %v2532, 7
  %v2674 = vsel %vm299, %v2672, %v2673
  %v2675 = vrot.slane %v2533, 7
  %v2676 = vrot.slane %v2534, 7
  %v2677 = vsel %vm299, %v2675, %v2676
  %v2678 = vrot.slane %v2535, 7
  %v2679 = vrot.slane %v2536, 7
  %v2680 = vsel %vm299, %v2678, %v2679
  %v2681 = vrot.slane %v2537, 7
  %v2682 = vrot.slane %v2538, 7
  %v2683 = vsel %vm299, %v2681, %v2682
  %v2684 = vrot.slane %v2539, 7
  %v2685 = vrot.slane %v2540, 7
  %v2686 = vsel %vm299, %v2684, %v2685
  %v2687 = vrot.slane %v2541, 7
  %v2688 = vrot.slane %v2542, 7
  %v2689 = vsel %vm299, %v2687, %v2688
  %v2690 = vrot.slane %v2543, 7
  %v2691 = vrot.slane %v2544, 7
  %v2692 = vsel %vm299, %v2690, %v2691
  %v2693 = vrot.slane %v2545, 7
  %v2694 = vrot.slane %v2546, 7
  %v2695 = vsel %vm299, %v2693, %v2694
  %v2696 = vrot.slane %v2547, 7
  %v2697 = vrot.slane %v2548, 7
  %v2698 = vsel %vm299, %v2696, %v2697
  %2699 = vrot.lane.b32.xlu0 %v2609, 96
  %v2700 = vpop.permute.xlu0 %2699
  %2701 = vrot.lane.b32.xlu0 %v2611, 96
  %v2702 = vpop.permute.xlu0 %2701
  %2703 = vrot.lane.b32.xlu0 %v2612, 96
  %v2704 = vpop.permute.xlu0 %2703
  %2705 = vrot.lane.b32.xlu0 %v2614, 96
  %v2706 = vpop.permute.xlu0 %2705
  %2707 = vrot.lane.b32.xlu0 %v2615, 96
  %v2708 = vpop.permute.xlu0 %2707
  %2709 = vrot.lane.b32.xlu0 %v2617, 96
  %v2710 = vpop.permute.xlu0 %2709
  %2711 = vrot.lane.b32.xlu0 %v2618, 96
  %v2712 = vpop.permute.xlu0 %2711
  %2713 = vrot.lane.b32.xlu0 %v2620, 96
  %v2714 = vpop.permute.xlu0 %2713
  %2715 = vrot.lane.b32.xlu0 %v2621, 96
  %v2716 = vpop.permute.xlu0 %2715
  %2717 = vrot.lane.b32.xlu0 %v2623, 96
  %v2718 = vpop.permute.xlu0 %2717
  %2719 = vrot.lane.b32.xlu0 %v2624, 96
  %v2720 = vpop.permute.xlu0 %2719
  %2721 = vrot.lane.b32.xlu0 %v2626, 96
  %v2722 = vpop.permute.xlu0 %2721
  %2723 = vrot.lane.b32.xlu0 %v2627, 96
  %v2724 = vpop.permute.xlu0 %2723
  %2725 = vrot.lane.b32.xlu0 %v2629, 96
  %v2726 = vpop.permute.xlu0 %2725
  %2727 = vrot.lane.b32.xlu0 %v2630, 96
  %v2728 = vpop.permute.xlu0 %2727
  %2729 = vrot.lane.b32.xlu0 %v2632, 96
  %v2730 = vpop.permute.xlu0 %2729
  %2731 = vrot.lane.b32.xlu0 %v2633, 96
  %v2732 = vpop.permute.xlu0 %2731
  %2733 = vrot.lane.b32.xlu0 %v2635, 96
  %v2734 = vpop.permute.xlu0 %2733
  %2735 = vrot.lane.b32.xlu0 %v2636, 96
  %v2736 = vpop.permute.xlu0 %2735
  %2737 = vrot.lane.b32.xlu0 %v2638, 96
  %v2738 = vpop.permute.xlu0 %2737
  %2739 = vrot.lane.b32.xlu0 %v2639, 96
  %v2740 = vpop.permute.xlu0 %2739
  %2741 = vrot.lane.b32.xlu0 %v2641, 96
  %v2742 = vpop.permute.xlu0 %2741
  %2743 = vrot.lane.b32.xlu0 %v2642, 96
  %v2744 = vpop.permute.xlu0 %2743
  %2745 = vrot.lane.b32.xlu0 %v2644, 96
  %v2746 = vpop.permute.xlu0 %2745
  %2747 = vrot.lane.b32.xlu0 %v2645, 96
  %v2748 = vpop.permute.xlu0 %2747
  %2749 = vrot.lane.b32.xlu0 %v2647, 96
  %v2750 = vpop.permute.xlu0 %2749
  %2751 = vrot.lane.b32.xlu0 %v2648, 96
  %v2752 = vpop.permute.xlu0 %2751
  %2753 = vrot.lane.b32.xlu0 %v2650, 96
  %v2754 = vpop.permute.xlu0 %2753
  %2755 = vrot.lane.b32.xlu0 %v2651, 96
  %v2756 = vpop.permute.xlu0 %2755
  %2757 = vrot.lane.b32.xlu0 %v2653, 96
  %v2758 = vpop.permute.xlu0 %2757
  %2759 = vrot.lane.b32.xlu0 %v2654, 96
  %v2760 = vpop.permute.xlu0 %2759
  %2761 = vrot.lane.b32.xlu0 %v2656, 96
  %v2762 = vpop.permute.xlu0 %2761
  %2763 = vrot.lane.b32.xlu0 %v2657, 96
  %v2764 = vpop.permute.xlu0 %2763
  %2765 = vrot.lane.b32.xlu0 %v2659, 96
  %v2766 = vpop.permute.xlu0 %2765
  %2767 = vrot.lane.b32.xlu0 %v2660, 96
  %v2768 = vpop.permute.xlu0 %2767
  %2769 = vrot.lane.b32.xlu0 %v2662, 96
  %v2770 = vpop.permute.xlu0 %2769
  %2771 = vrot.lane.b32.xlu0 %v2663, 96
  %v2772 = vpop.permute.xlu0 %2771
  %2773 = vrot.lane.b32.xlu0 %v2665, 96
  %v2774 = vpop.permute.xlu0 %2773
  %2775 = vrot.lane.b32.xlu0 %v2666, 96
  %v2776 = vpop.permute.xlu0 %2775
  %2777 = vrot.lane.b32.xlu0 %v2668, 96
  %v2778 = vpop.permute.xlu0 %2777
  %2779 = vrot.lane.b32.xlu0 %v2669, 96
  %v2780 = vpop.permute.xlu0 %2779
  %2781 = vrot.lane.b32.xlu0 %v2671, 96
  %v2782 = vpop.permute.xlu0 %2781
  %2783 = vrot.lane.b32.xlu0 %v2672, 96
  %v2784 = vpop.permute.xlu0 %2783
  %2785 = vrot.lane.b32.xlu0 %v2674, 96
  %v2786 = vpop.permute.xlu0 %2785
  %2787 = vrot.lane.b32.xlu0 %v2675, 96
  %v2788 = vpop.permute.xlu0 %2787
  %2789 = vrot.lane.b32.xlu0 %v2677, 96
  %v2790 = vpop.permute.xlu0 %2789
  %2791 = vrot.lane.b32.xlu0 %v2678, 96
  %v2792 = vpop.permute.xlu0 %2791
  %2793 = vrot.lane.b32.xlu0 %v2680, 96
  %v2794 = vpop.permute.xlu0 %2793
  %2795 = vrot.lane.b32.xlu0 %v2681, 96
  %v2796 = vpop.permute.xlu0 %2795
  %2797 = vrot.lane.b32.xlu0 %v2683, 96
  %v2798 = vpop.permute.xlu0 %2797
  %2799 = vrot.lane.b32.xlu0 %v2684, 96
  %v2800 = vpop.permute.xlu0 %2799
  %2801 = vrot.lane.b32.xlu0 %v2686, 96
  %v2802 = vpop.permute.xlu0 %2801
  %2803 = vrot.lane.b32.xlu0 %v2687, 96
  %v2804 = vpop.permute.xlu0 %2803
  %2805 = vrot.lane.b32.xlu0 %v2689, 96
  %v2806 = vpop.permute.xlu0 %2805
  %2807 = vrot.lane.b32.xlu0 %v2690, 96
  %v2808 = vpop.permute.xlu0 %2807
  %2809 = vrot.lane.b32.xlu0 %v2692, 96
  %v2810 = vpop.permute.xlu0 %2809
  %2811 = vrot.lane.b32.xlu0 %v2693, 96
  %v2812 = vpop.permute.xlu0 %2811
  %2813 = vrot.lane.b32.xlu0 %v2695, 96
  %v2814 = vpop.permute.xlu0 %2813
  %2815 = vrot.lane.b32.xlu0 %v2696, 96
  %v2816 = vpop.permute.xlu0 %2815
  %2817 = vrot.lane.b32.xlu0 %v2698, 96
  %v2818 = vpop.permute.xlu0 %2817
  %vm2879 = vcmask 917249
  %2880 = vst.msk [vmem:[#allocation2] sm:$0xfe] %vm2879, %v2700
  %vm2881 = vcmask 917248
  %2882 = vst.msk [vmem:[#allocation2 + $0x10] sm:$0xff] %vm2881, %v2702
  %2883 = vst.msk [vmem:[#allocation2 + $0x20] sm:$0xfe] %vm2879, %v2704
  %2884 = vst.msk [vmem:[#allocation2 + $0x30] sm:$0xff] %vm2881, %v2706
  %2885 = vst.msk [vmem:[#allocation2 + $0x40] sm:$0xfe] %vm2879, %v2708
  %2886 = vst.msk [vmem:[#allocation2 + $0x50] sm:$0xff] %vm2881, %v2710
  %2887 = vst.msk [vmem:[#allocation2 + $0x60] sm:$0xfe] %vm2879, %v2712
  %2888 = vst.msk [vmem:[#allocation2 + $0x70] sm:$0xff] %vm2881, %v2714
  %2889 = vst.msk [vmem:[#allocation2 + $0x80] sm:$0xfe] %vm2879, %v2716
  %2890 = vst.msk [vmem:[#allocation2 + $0x90] sm:$0xff] %vm2881, %v2718
  %2891 = vst.msk [vmem:[#allocation2 + $0xa0] sm:$0xfe] %vm2879, %v2720
  %2892 = vst.msk [vmem:[#allocation2 + $0xb0] sm:$0xff] %vm2881, %v2722
  %2893 = vst.msk [vmem:[#allocation2 + $0xc0] sm:$0xfe] %vm2879, %v2724
  %2894 = vst.msk [vmem:[#allocation2 + $0xd0] sm:$0xff] %vm2881, %v2726
  %2895 = vst.msk [vmem:[#allocation2 + $0xe0] sm:$0xfe] %vm2879, %v2728
  %2896 = vst.msk [vmem:[#allocation2 + $0xf0] sm:$0xff] %vm2881, %v2730
  %2897 = vst.msk [vmem:[#allocation2 + $0x100] sm:$0xfe] %vm2879, %v2732
  %2898 = vst.msk [vmem:[#allocation2 + $0x110] sm:$0xff] %vm2881, %v2734
  %2899 = vst.msk [vmem:[#allocation2 + $0x120] sm:$0xfe] %vm2879, %v2736
  %2900 = vst.msk [vmem:[#allocation2 + $0x130] sm:$0xff] %vm2881, %v2738
  %2901 = vst.msk [vmem:[#allocation2 + $0x140] sm:$0xfe] %vm2879, %v2740
  %2902 = vst.msk [vmem:[#allocation2 + $0x150] sm:$0xff] %vm2881, %v2742
  %2903 = vst.msk [vmem:[#allocation2 + $0x160] sm:$0xfe] %vm2879, %v2744
  %2904 = vst.msk [vmem:[#allocation2 + $0x170] sm:$0xff] %vm2881, %v2746
  %2905 = vst.msk [vmem:[#allocation2 + $0x180] sm:$0xfe] %vm2879, %v2748
  %2906 = vst.msk [vmem:[#allocation2 + $0x190] sm:$0xff] %vm2881, %v2750
  %2907 = vst.msk [vmem:[#allocation2 + $0x1a0] sm:$0xfe] %vm2879, %v2752
  %2908 = vst.msk [vmem:[#allocation2 + $0x1b0] sm:$0xff] %vm2881, %v2754
  %2909 = vst.msk [vmem:[#allocation2 + $0x1c0] sm:$0xfe] %vm2879, %v2756
  %2910 = vst.msk [vmem:[#allocation2 + $0x1d0] sm:$0xff] %vm2881, %v2758
  %2911 = vst.msk [vmem:[#allocation2 + $0x200] sm:$0xfe] %vm2879, %v2760
  %2912 = vst.msk [vmem:[#allocation2 + $0x210] sm:$0xff] %vm2881, %v2762
  %2913 = vst.msk [vmem:[#allocation2 + $0x220] sm:$0xfe] %vm2879, %v2764
  %2914 = vst.msk [vmem:[#allocation2 + $0x230] sm:$0xff] %vm2881, %v2766
  %2915 = vst.msk [vmem:[#allocation2 + $0x240] sm:$0xfe] %vm2879, %v2768
  %2916 = vst.msk [vmem:[#allocation2 + $0x250] sm:$0xff] %vm2881, %v2770
  %2917 = vst.msk [vmem:[#allocation2 + $0x260] sm:$0xfe] %vm2879, %v2772
  %2918 = vst.msk [vmem:[#allocation2 + $0x270] sm:$0xff] %vm2881, %v2774
  %2919 = vst.msk [vmem:[#allocation2 + $0x280] sm:$0xfe] %vm2879, %v2776
  %2920 = vst.msk [vmem:[#allocation2 + $0x290] sm:$0xff] %vm2881, %v2778
  %2921 = vst.msk [vmem:[#allocation2 + $0x2a0] sm:$0xfe] %vm2879, %v2780
  %2922 = vst.msk [vmem:[#allocation2 + $0x2b0] sm:$0xff] %vm2881, %v2782
  %2923 = vst.msk [vmem:[#allocation2 + $0x2c0] sm:$0xfe] %vm2879, %v2784
  %2924 = vst.msk [vmem:[#allocation2 + $0x2d0] sm:$0xff] %vm2881, %v2786
  %2925 = vst.msk [vmem:[#allocation2 + $0x2e0] sm:$0xfe] %vm2879, %v2788
  %2926 = vst.msk [vmem:[#allocation2 + $0x2f0] sm:$0xff] %vm2881, %v2790
  %2927 = vst.msk [vmem:[#allocation2 + $0x300] sm:$0xfe] %vm2879, %v2792
  %2928 = vst.msk [vmem:[#allocation2 + $0x310] sm:$0xff] %vm2881, %v2794
  %2929 = vst.msk [vmem:[#allocation2 + $0x320] sm:$0xfe] %vm2879, %v2796
  %2930 = vst.msk [vmem:[#allocation2 + $0x330] sm:$0xff] %vm2881, %v2798
  %2931 = vst.msk [vmem:[#allocation2 + $0x340] sm:$0xfe] %vm2879, %v2800
  %2932 = vst.msk [vmem:[#allocation2 + $0x350] sm:$0xff] %vm2881, %v2802
  %2933 = vst.msk [vmem:[#allocation2 + $0x360] sm:$0xfe] %vm2879, %v2804
  %2934 = vst.msk [vmem:[#allocation2 + $0x370] sm:$0xff] %vm2881, %v2806
  %2935 = vst.msk [vmem:[#allocation2 + $0x380] sm:$0xfe] %vm2879, %v2808
  %2936 = vst.msk [vmem:[#allocation2 + $0x390] sm:$0xff] %vm2881, %v2810
  %2937 = vst.msk [vmem:[#allocation2 + $0x3a0] sm:$0xfe] %vm2879, %v2812
  %2938 = vst.msk [vmem:[#allocation2 + $0x3b0] sm:$0xff] %vm2881, %v2814
  %2939 = vst.msk [vmem:[#allocation2 + $0x3c0] sm:$0xfe] %vm2879, %v2816
  %2940 = vst.msk [vmem:[#allocation2 + $0x3d0] sm:$0xff] %vm2881, %v2818
  %v2941 = vld [vmem:[%s2488] sm:$0xff]
  %v2942 = vld [vmem:[%s2488 + $0x8] sm:$0xff]
  %v2943 = vld [vmem:[%s2488 + $0x10] sm:$0xff]
  %v2944 = vld [vmem:[%s2488 + $0x18] sm:$0xff]
  %v2945 = vld [vmem:[%s2488 + $0x20] sm:$0xff]
  %v2946 = vld [vmem:[%s2488 + $0x28] sm:$0xff]
  %v2947 = vld [vmem:[%s2488 + $0x30] sm:$0xff]
  %v2948 = vld [vmem:[%s2488 + $0x38] sm:$0xff]
  %v2949 = vld [vmem:[%s2488 + $0x40] sm:$0xff]
  %v2950 = vld [vmem:[%s2488 + $0x48] sm:$0xff]
  %v2951 = vld [vmem:[%s2488 + $0x50] sm:$0xff]
  %v2952 = vld [vmem:[%s2488 + $0x58] sm:$0xff]
  %v2953 = vld [vmem:[%s2488 + $0x60] sm:$0xff]
  %v2954 = vld [vmem:[%s2488 + $0x68] sm:$0xff]
  %v2955 = vld [vmem:[%s2488 + $0x70] sm:$0xff]
  %v2956 = vld [vmem:[%s2488 + $0x78] sm:$0xff]
  %v2957 = vld [vmem:[%s2488 + $0x80] sm:$0xff]
  %v2958 = vld [vmem:[%s2488 + $0x88] sm:$0xff]
  %v2959 = vld [vmem:[%s2488 + $0x90] sm:$0xff]
  %v2960 = vld [vmem:[%s2488 + $0x98] sm:$0xff]
  %v2961 = vld [vmem:[%s2488 + $0xa0] sm:$0xff]
  %v2962 = vld [vmem:[%s2488 + $0xa8] sm:$0xff]
  %v2963 = vld [vmem:[%s2488 + $0xb0] sm:$0xff]
  %v2964 = vld [vmem:[%s2488 + $0xb8] sm:$0xff]
  %v2965 = vld [vmem:[%s2488 + $0xc0] sm:$0xff]
  %v2966 = vld [vmem:[%s2488 + $0xc8] sm:$0xff]
  %v2967 = vld [vmem:[%s2488 + $0xd0] sm:$0xff]
  %v2968 = vld [vmem:[%s2488 + $0xd8] sm:$0xff]
  %v2969 = vld [vmem:[%s2488 + $0xe0] sm:$0xff]
  %v2970 = vld [vmem:[%s2488 + $0xe8] sm:$0xff]
  %v2971 = vld [vmem:[%s2488 + $0x100] sm:$0xff]
  %v2972 = vld [vmem:[%s2488 + $0x108] sm:$0xff]
  %v2973 = vld [vmem:[%s2488 + $0x110] sm:$0xff]
  %v2974 = vld [vmem:[%s2488 + $0x118] sm:$0xff]
  %v2975 = vld [vmem:[%s2488 + $0x120] sm:$0xff]
  %v2976 = vld [vmem:[%s2488 + $0x128] sm:$0xff]
  %v2977 = vld [vmem:[%s2488 + $0x130] sm:$0xff]
  %v2978 = vld [vmem:[%s2488 + $0x138] sm:$0xff]
  %v2979 = vld [vmem:[%s2488 + $0x140] sm:$0xff]
  %v2980 = vld [vmem:[%s2488 + $0x148] sm:$0xff]
  %v2981 = vld [vmem:[%s2488 + $0x150] sm:$0xff]
  %v2982 = vld [vmem:[%s2488 + $0x158] sm:$0xff]
  %v2983 = vld [vmem:[%s2488 + $0x160] sm:$0xff]
  %v2984 = vld [vmem:[%s2488 + $0x168] sm:$0xff]
  %v2985 = vld [vmem:[%s2488 + $0x170] sm:$0xff]
  %v2986 = vld [vmem:[%s2488 + $0x178] sm:$0xff]
  %v2987 = vld [vmem:[%s2488 + $0x180] sm:$0xff]
  %v2988 = vld [vmem:[%s2488 + $0x188] sm:$0xff]
  %v2989 = vld [vmem:[%s2488 + $0x190] sm:$0xff]
  %v2990 = vld [vmem:[%s2488 + $0x198] sm:$0xff]
  %v2991 = vld [vmem:[%s2488 + $0x1a0] sm:$0xff]
  %v2992 = vld [vmem:[%s2488 + $0x1a8] sm:$0xff]
  %v2993 = vld [vmem:[%s2488 + $0x1b0] sm:$0xff]
  %v2994 = vld [vmem:[%s2488 + $0x1b8] sm:$0xff]
  %v2995 = vld [vmem:[%s2488 + $0x1c0] sm:$0xff]
  %v2996 = vld [vmem:[%s2488 + $0x1c8] sm:$0xff]
  %v2997 = vld [vmem:[%s2488 + $0x1d0] sm:$0xff]
  %v2998 = vld [vmem:[%s2488 + $0x1d8] sm:$0xff]
  %v2999 = vld [vmem:[%s2488 + $0x1e0] sm:$0xff]
  %v3000 = vld [vmem:[%s2488 + $0x1e8] sm:$0xff]
  %3061 = vrot.lane.b32.xlu0 %v2941, 112
  %v3062 = vpop.permute.xlu0 %3061
  %3063 = vrot.lane.b32.xlu0 %v2942, 112
  %v3064 = vpop.permute.xlu0 %3063
  %3065 = vrot.lane.b32.xlu0 %v2943, 112
  %v3066 = vpop.permute.xlu0 %3065
  %3067 = vrot.lane.b32.xlu0 %v2944, 112
  %v3068 = vpop.permute.xlu0 %3067
  %3069 = vrot.lane.b32.xlu0 %v2945, 112
  %v3070 = vpop.permute.xlu0 %3069
  %3071 = vrot.lane.b32.xlu0 %v2946, 112
  %v3072 = vpop.permute.xlu0 %3071
  %3073 = vrot.lane.b32.xlu0 %v2947, 112
  %v3074 = vpop.permute.xlu0 %3073
  %3075 = vrot.lane.b32.xlu0 %v2948, 112
  %v3076 = vpop.permute.xlu0 %3075
  %3077 = vrot.lane.b32.xlu0 %v2949, 112
  %v3078 = vpop.permute.xlu0 %3077
  %3079 = vrot.lane.b32.xlu0 %v2950, 112
  %v3080 = vpop.permute.xlu0 %3079
  %3081 = vrot.lane.b32.xlu0 %v2951, 112
  %v3082 = vpop.permute.xlu0 %3081
  %3083 = vrot.lane.b32.xlu0 %v2952, 112
  %v3084 = vpop.permute.xlu0 %3083
  %3085 = vrot.lane.b32.xlu0 %v2953, 112
  %v3086 = vpop.permute.xlu0 %3085
  %3087 = vrot.lane.b32.xlu0 %v2954, 112
  %v3088 = vpop.permute.xlu0 %3087
  %3089 = vrot.lane.b32.xlu0 %v2955, 112
  %v3090 = vpop.permute.xlu0 %3089
  %3091 = vrot.lane.b32.xlu0 %v2956, 112
  %v3092 = vpop.permute.xlu0 %3091
  %3093 = vrot.lane.b32.xlu0 %v2957, 112
  %v3094 = vpop.permute.xlu0 %3093
  %3095 = vrot.lane.b32.xlu0 %v2958, 112
  %v3096 = vpop.permute.xlu0 %3095
  %3097 = vrot.lane.b32.xlu0 %v2959, 112
  %v3098 = vpop.permute.xlu0 %3097
  %3099 = vrot.lane.b32.xlu0 %v2960, 112
  %v3100 = vpop.permute.xlu0 %3099
  %3101 = vrot.lane.b32.xlu0 %v2961, 112
  %v3102 = vpop.permute.xlu0 %3101
  %3103 = vrot.lane.b32.xlu0 %v2962, 112
  %v3104 = vpop.permute.xlu0 %3103
  %3105 = vrot.lane.b32.xlu0 %v2963, 112
  %v3106 = vpop.permute.xlu0 %3105
  %3107 = vrot.lane.b32.xlu0 %v2964, 112
  %v3108 = vpop.permute.xlu0 %3107
  %3109 = vrot.lane.b32.xlu0 %v2965, 112
  %v3110 = vpop.permute.xlu0 %3109
  %3111 = vrot.lane.b32.xlu0 %v2966, 112
  %v3112 = vpop.permute.xlu0 %3111
  %3113 = vrot.lane.b32.xlu0 %v2967, 112
  %v3114 = vpop.permute.xlu0 %3113
  %3115 = vrot.lane.b32.xlu0 %v2968, 112
  %v3116 = vpop.permute.xlu0 %3115
  %3117 = vrot.lane.b32.xlu0 %v2969, 112
  %v3118 = vpop.permute.xlu0 %3117
  %3119 = vrot.lane.b32.xlu0 %v2970, 112
  %v3120 = vpop.permute.xlu0 %3119
  %3121 = vrot.lane.b32.xlu0 %v2971, 112
  %v3122 = vpop.permute.xlu0 %3121
  %3123 = vrot.lane.b32.xlu0 %v2972, 112
  %v3124 = vpop.permute.xlu0 %3123
  %3125 = vrot.lane.b32.xlu0 %v2973, 112
  %v3126 = vpop.permute.xlu0 %3125
  %3127 = vrot.lane.b32.xlu0 %v2974, 112
  %v3128 = vpop.permute.xlu0 %3127
  %3129 = vrot.lane.b32.xlu0 %v2975, 112
  %v3130 = vpop.permute.xlu0 %3129
  %3131 = vrot.lane.b32.xlu0 %v2976, 112
  %v3132 = vpop.permute.xlu0 %3131
  %3133 = vrot.lane.b32.xlu0 %v2977, 112
  %v3134 = vpop.permute.xlu0 %3133
  %3135 = vrot.lane.b32.xlu0 %v2978, 112
  %v3136 = vpop.permute.xlu0 %3135
  %3137 = vrot.lane.b32.xlu0 %v2979, 112
  %v3138 = vpop.permute.xlu0 %3137
  %3139 = vrot.lane.b32.xlu0 %v2980, 112
  %v3140 = vpop.permute.xlu0 %3139
  %3141 = vrot.lane.b32.xlu0 %v2981, 112
  %v3142 = vpop.permute.xlu0 %3141
  %3143 = vrot.lane.b32.xlu0 %v2982, 112
  %v3144 = vpop.permute.xlu0 %3143
  %3145 = vrot.lane.b32.xlu0 %v2983, 112
  %v3146 = vpop.permute.xlu0 %3145
  %3147 = vrot.lane.b32.xlu0 %v2984, 112
  %v3148 = vpop.permute.xlu0 %3147
  %3149 = vrot.lane.b32.xlu0 %v2985, 112
  %v3150 = vpop.permute.xlu0 %3149
  %3151 = vrot.lane.b32.xlu0 %v2986, 112
  %v3152 = vpop.permute.xlu0 %3151
  %3153 = vrot.lane.b32.xlu0 %v2987, 112
  %v3154 = vpop.permute.xlu0 %3153
  %3155 = vrot.lane.b32.xlu0 %v2988, 112
  %v3156 = vpop.permute.xlu0 %3155
  %3157 = vrot.lane.b32.xlu0 %v2989, 112
  %v3158 = vpop.permute.xlu0 %3157
  %3159 = vrot.lane.b32.xlu0 %v2990, 112
  %v3160 = vpop.permute.xlu0 %3159
  %3161 = vrot.lane.b32.xlu0 %v2991, 112
  %v3162 = vpop.permute.xlu0 %3161
  %3163 = vrot.lane.b32.xlu0 %v2992, 112
  %v3164 = vpop.permute.xlu0 %3163
  %3165 = vrot.lane.b32.xlu0 %v2993, 112
  %v3166 = vpop.permute.xlu0 %3165
  %3167 = vrot.lane.b32.xlu0 %v2994, 112
  %v3168 = vpop.permute.xlu0 %3167
  %3169 = vrot.lane.b32.xlu0 %v2995, 112
  %v3170 = vpop.permute.xlu0 %3169
  %3171 = vrot.lane.b32.xlu0 %v2996, 112
  %v3172 = vpop.permute.xlu0 %3171
  %3173 = vrot.lane.b32.xlu0 %v2997, 112
  %v3174 = vpop.permute.xlu0 %3173
  %3175 = vrot.lane.b32.xlu0 %v2998, 112
  %v3176 = vpop.permute.xlu0 %3175
  %3177 = vrot.lane.b32.xlu0 %v2999, 112
  %v3178 = vpop.permute.xlu0 %3177
  %3179 = vrot.lane.b32.xlu0 %v3000, 112
  %v3180 = vpop.permute.xlu0 %3179
  %vm3241 = vcmask 1048448
  %3242 = vst.msk [vmem:[#allocation2] sm:$0xff] %vm3241, %v3062
  %3243 = vst.msk [vmem:[#allocation2 + $0x10] sm:$0xff] %vm3241, %v3064
  %3244 = vst.msk [vmem:[#allocation2 + $0x20] sm:$0xff] %vm3241, %v3066
  %3245 = vst.msk [vmem:[#allocation2 + $0x30] sm:$0xff] %vm3241, %v3068
  %3246 = vst.msk [vmem:[#allocation2 + $0x40] sm:$0xff] %vm3241, %v3070
  %3247 = vst.msk [vmem:[#allocation2 + $0x50] sm:$0xff] %vm3241, %v3072
  %3248 = vst.msk [vmem:[#allocation2 + $0x60] sm:$0xff] %vm3241, %v3074
  %3249 = vst.msk [vmem:[#allocation2 + $0x70] sm:$0xff] %vm3241, %v3076
  %3250 = vst.msk [vmem:[#allocation2 + $0x80] sm:$0xff] %vm3241, %v3078
  %3251 = vst.msk [vmem:[#allocation2 + $0x90] sm:$0xff] %vm3241, %v3080
  %3252 = vst.msk [vmem:[#allocation2 + $0xa0] sm:$0xff] %vm3241, %v3082
  %3253 = vst.msk [vmem:[#allocation2 + $0xb0] sm:$0xff] %vm3241, %v3084
  %3254 = vst.msk [vmem:[#allocation2 + $0xc0] sm:$0xff] %vm3241, %v3086
  %3255 = vst.msk [vmem:[#allocation2 + $0xd0] sm:$0xff] %vm3241, %v3088
  %3256 = vst.msk [vmem:[#allocation2 + $0xe0] sm:$0xff] %vm3241, %v3090
  %3257 = vst.msk [vmem:[#allocation2 + $0xf0] sm:$0xff] %vm3241, %v3092
  %3258 = vst.msk [vmem:[#allocation2 + $0x100] sm:$0xff] %vm3241, %v3094
  %3259 = vst.msk [vmem:[#allocation2 + $0x110] sm:$0xff] %vm3241, %v3096
  %3260 = vst.msk [vmem:[#allocation2 + $0x120] sm:$0xff] %vm3241, %v3098
  %3261 = vst.msk [vmem:[#allocation2 + $0x130] sm:$0xff] %vm3241, %v3100
  %3262 = vst.msk [vmem:[#allocation2 + $0x140] sm:$0xff] %vm3241, %v3102
  %3263 = vst.msk [vmem:[#allocation2 + $0x150] sm:$0xff] %vm3241, %v3104
  %3264 = vst.msk [vmem:[#allocation2 + $0x160] sm:$0xff] %vm3241, %v3106
  %3265 = vst.msk [vmem:[#allocation2 + $0x170] sm:$0xff] %vm3241, %v3108
  %3266 = vst.msk [vmem:[#allocation2 + $0x180] sm:$0xff] %vm3241, %v3110
  %3267 = vst.msk [vmem:[#allocation2 + $0x190] sm:$0xff] %vm3241, %v3112
  %3268 = vst.msk [vmem:[#allocation2 + $0x1a0] sm:$0xff] %vm3241, %v3114
  %3269 = vst.msk [vmem:[#allocation2 + $0x1b0] sm:$0xff] %vm3241, %v3116
  %3270 = vst.msk [vmem:[#allocation2 + $0x1c0] sm:$0xff] %vm3241, %v3118
  %3271 = vst.msk [vmem:[#allocation2 + $0x1d0] sm:$0xff] %vm3241, %v3120
  %3272 = vst.msk [vmem:[#allocation2 + $0x200] sm:$0xff] %vm3241, %v3122
  %3273 = vst.msk [vmem:[#allocation2 + $0x210] sm:$0xff] %vm3241, %v3124
  %3274 = vst.msk [vmem:[#allocation2 + $0x220] sm:$0xff] %vm3241, %v3126
  %3275 = vst.msk [vmem:[#allocation2 + $0x230] sm:$0xff] %vm3241, %v3128
  %3276 = vst.msk [vmem:[#allocation2 + $0x240] sm:$0xff] %vm3241, %v3130
  %3277 = vst.msk [vmem:[#allocation2 + $0x250] sm:$0xff] %vm3241, %v3132
  %3278 = vst.msk [vmem:[#allocation2 + $0x260] sm:$0xff] %vm3241, %v3134
  %3279 = vst.msk [vmem:[#allocation2 + $0x270] sm:$0xff] %vm3241, %v3136
  %3280 = vst.msk [vmem:[#allocation2 + $0x280] sm:$0xff] %vm3241, %v3138
  %3281 = vst.msk [vmem:[#allocation2 + $0x290] sm:$0xff] %vm3241, %v3140
  %3282 = vst.msk [vmem:[#allocation2 + $0x2a0] sm:$0xff] %vm3241, %v3142
  %3283 = vst.msk [vmem:[#allocation2 + $0x2b0] sm:$0xff] %vm3241, %v3144
  %3284 = vst.msk [vmem:[#allocation2 + $0x2c0] sm:$0xff] %vm3241, %v3146
  %3285 = vst.msk [vmem:[#allocation2 + $0x2d0] sm:$0xff] %vm3241, %v3148
  %3286 = vst.msk [vmem:[#allocation2 + $0x2e0] sm:$0xff] %vm3241, %v3150
  %3287 = vst.msk [vmem:[#allocation2 + $0x2f0] sm:$0xff] %vm3241, %v3152
  %3288 = vst.msk [vmem:[#allocation2 + $0x300] sm:$0xff] %vm3241, %v3154
  %3289 = vst.msk [vmem:[#allocation2 + $0x310] sm:$0xff] %vm3241, %v3156
  %3290 = vst.msk [vmem:[#allocation2 + $0x320] sm:$0xff] %vm3241, %v3158
  %3291 = vst.msk [vmem:[#allocation2 + $0x330] sm:$0xff] %vm3241, %v3160
  %3292 = vst.msk [vmem:[#allocation2 + $0x340] sm:$0xff] %vm3241, %v3162
  %3293 = vst.msk [vmem:[#allocation2 + $0x350] sm:$0xff] %vm3241, %v3164
  %3294 = vst.msk [vmem:[#allocation2 + $0x360] sm:$0xff] %vm3241, %v3166
  %3295 = vst.msk [vmem:[#allocation2 + $0x370] sm:$0xff] %vm3241, %v3168
  %3296 = vst.msk [vmem:[#allocation2 + $0x380] sm:$0xff] %vm3241, %v3170
  %3297 = vst.msk [vmem:[#allocation2 + $0x390] sm:$0xff] %vm3241, %v3172
  %3298 = vst.msk [vmem:[#allocation2 + $0x3a0] sm:$0xff] %vm3241, %v3174
  %3299 = vst.msk [vmem:[#allocation2 + $0x3b0] sm:$0xff] %vm3241, %v3176
  %3300 = vst.msk [vmem:[#allocation2 + $0x3c0] sm:$0xff] %vm3241, %v3178
  %3301 = vst.msk [vmem:[#allocation2 + $0x3d0] sm:$0xff] %vm3241, %v3180
  %v3302 = vld [vmem:[%s2488 + $0x1] sm:$0xff]
  %v3303 = vld [vmem:[%s2488 + $0x9] sm:$0x7f]
  %v3304 = vld [vmem:[%s2488 + $0x11] sm:$0xff]
  %v3305 = vld [vmem:[%s2488 + $0x19] sm:$0x7f]
  %v3306 = vld [vmem:[%s2488 + $0x21] sm:$0xff]
  %v3307 = vld [vmem:[%s2488 + $0x29] sm:$0x7f]
  %v3308 = vld [vmem:[%s2488 + $0x31] sm:$0xff]
  %v3309 = vld [vmem:[%s2488 + $0x39] sm:$0x7f]
  %v3310 = vld [vmem:[%s2488 + $0x41] sm:$0xff]
  %v3311 = vld [vmem:[%s2488 + $0x49] sm:$0x7f]
  %v3312 = vld [vmem:[%s2488 + $0x51] sm:$0xff]
  %v3313 = vld [vmem:[%s2488 + $0x59] sm:$0x7f]
  %v3314 = vld [vmem:[%s2488 + $0x61] sm:$0xff]
  %v3315 = vld [vmem:[%s2488 + $0x69] sm:$0x7f]
  %v3316 = vld [vmem:[%s2488 + $0x71] sm:$0xff]
  %v3317 = vld [vmem:[%s2488 + $0x79] sm:$0x7f]
  %v3318 = vld [vmem:[%s2488 + $0x81] sm:$0xff]
  %v3319 = vld [vmem:[%s2488 + $0x89] sm:$0x7f]
  %v3320 = vld [vmem:[%s2488 + $0x91] sm:$0xff]
  %v3321 = vld [vmem:[%s2488 + $0x99] sm:$0x7f]
  %v3322 = vld [vmem:[%s2488 + $0xa1] sm:$0xff]
  %v3323 = vld [vmem:[%s2488 + $0xa9] sm:$0x7f]
  %v3324 = vld [vmem:[%s2488 + $0xb1] sm:$0xff]
  %v3325 = vld [vmem:[%s2488 + $0xb9] sm:$0x7f]
  %v3326 = vld [vmem:[%s2488 + $0xc1] sm:$0xff]
  %v3327 = vld [vmem:[%s2488 + $0xc9] sm:$0x7f]
  %v3328 = vld [vmem:[%s2488 + $0xd1] sm:$0xff]
  %v3329 = vld [vmem:[%s2488 + $0xd9] sm:$0x7f]
  %v3330 = vld [vmem:[%s2488 + $0xe1] sm:$0xff]
  %v3331 = vld [vmem:[%s2488 + $0xe9] sm:$0x7f]
  %v3332 = vld [vmem:[%s2488 + $0x101] sm:$0xff]
  %v3333 = vld [vmem:[%s2488 + $0x109] sm:$0x7f]
  %v3334 = vld [vmem:[%s2488 + $0x111] sm:$0xff]
  %v3335 = vld [vmem:[%s2488 + $0x119] sm:$0x7f]
  %v3336 = vld [vmem:[%s2488 + $0x121] sm:$0xff]
  %v3337 = vld [vmem:[%s2488 + $0x129] sm:$0x7f]
  %v3338 = vld [vmem:[%s2488 + $0x131] sm:$0xff]
  %v3339 = vld [vmem:[%s2488 + $0x139] sm:$0x7f]
  %v3340 = vld [vmem:[%s2488 + $0x141] sm:$0xff]
  %v3341 = vld [vmem:[%s2488 + $0x149] sm:$0x7f]
  %v3342 = vld [vmem:[%s2488 + $0x151] sm:$0xff]
  %v3343 = vld [vmem:[%s2488 + $0x159] sm:$0x7f]
  %v3344 = vld [vmem:[%s2488 + $0x161] sm:$0xff]
  %v3345 = vld [vmem:[%s2488 + $0x169] sm:$0x7f]
  %v3346 = vld [vmem:[%s2488 + $0x171] sm:$0xff]
  %v3347 = vld [vmem:[%s2488 + $0x179] sm:$0x7f]
  %v3348 = vld [vmem:[%s2488 + $0x181] sm:$0xff]
  %v3349 = vld [vmem:[%s2488 + $0x189] sm:$0x7f]
  %v3350 = vld [vmem:[%s2488 + $0x191] sm:$0xff]
  %v3351 = vld [vmem:[%s2488 + $0x199] sm:$0x7f]
  %v3352 = vld [vmem:[%s2488 + $0x1a1] sm:$0xff]
  %v3353 = vld [vmem:[%s2488 + $0x1a9] sm:$0x7f]
  %v3354 = vld [vmem:[%s2488 + $0x1b1] sm:$0xff]
  %v3355 = vld [vmem:[%s2488 + $0x1b9] sm:$0x7f]
  %v3356 = vld [vmem:[%s2488 + $0x1c1] sm:$0xff]
  %v3357 = vld [vmem:[%s2488 + $0x1c9] sm:$0x7f]
  %v3358 = vld [vmem:[%s2488 + $0x1d1] sm:$0xff]
  %v3359 = vld [vmem:[%s2488 + $0x1d9] sm:$0x7f]
  %v3360 = vld [vmem:[%s2488 + $0x1e1] sm:$0xff]
  %v3361 = vld [vmem:[%s2488 + $0x1e9] sm:$0x7f]
  %3362 = vst.msk [vmem:[#allocation2 + $0x8] sm:$0xff] %vm51, %v3302
  %vm3363 = vcmask 129024
  %3364 = vst.msk [vmem:[#allocation2 + $0x18] sm:$0x7f] %vm3363, %v3303
  %3365 = vst.msk [vmem:[#allocation2 + $0x28] sm:$0xff] %vm51, %v3304
  %3366 = vst.msk [vmem:[#allocation2 + $0x38] sm:$0x7f] %vm3363, %v3305
  %3367 = vst.msk [vmem:[#allocation2 + $0x48] sm:$0xff] %vm51, %v3306
  %3368 = vst.msk [vmem:[#allocation2 + $0x58] sm:$0x7f] %vm3363, %v3307
  %3369 = vst.msk [vmem:[#allocation2 + $0x68] sm:$0xff] %vm51, %v3308
  %3370 = vst.msk [vmem:[#allocation2 + $0x78] sm:$0x7f] %vm3363, %v3309
  %3371 = vst.msk [vmem:[#allocation2 + $0x88] sm:$0xff] %vm51, %v3310
  %3372 = vst.msk [vmem:[#allocation2 + $0x98] sm:$0x7f] %vm3363, %v3311
  %3373 = vst.msk [vmem:[#allocation2 + $0xa8] sm:$0xff] %vm51, %v3312
  %3374 = vst.msk [vmem:[#allocation2 + $0xb8] sm:$0x7f] %vm3363, %v3313
  %3375 = vst.msk [vmem:[#allocation2 + $0xc8] sm:$0xff] %vm51, %v3314
  %3376 = vst.msk [vmem:[#allocation2 + $0xd8] sm:$0x7f] %vm3363, %v3315
  %3377 = vst.msk [vmem:[#allocation2 + $0xe8] sm:$0xff] %vm51, %v3316
  %3378 = vst.msk [vmem:[#allocation2 + $0xf8] sm:$0x7f] %vm3363, %v3317
  %3379 = vst.msk [vmem:[#allocation2 + $0x108] sm:$0xff] %vm51, %v3318
  %3380 = vst.msk [vmem:[#allocation2 + $0x118] sm:$0x7f] %vm3363, %v3319
  %3381 = vst.msk [vmem:[#allocation2 + $0x128] sm:$0xff] %vm51, %v3320
  %3382 = vst.msk [vmem:[#allocation2 + $0x138] sm:$0x7f] %vm3363, %v3321
  %3383 = vst.msk [vmem:[#allocation2 + $0x148] sm:$0xff] %vm51, %v3322
  %3384 = vst.msk [vmem:[#allocation2 + $0x158] sm:$0x7f] %vm3363, %v3323
  %3385 = vst.msk [vmem:[#allocation2 + $0x168] sm:$0xff] %vm51, %v3324
  %3386 = vst.msk [vmem:[#allocation2 + $0x178] sm:$0x7f] %vm3363, %v3325
  %3387 = vst.msk [vmem:[#allocation2 + $0x188] sm:$0xff] %vm51, %v3326
  %3388 = vst.msk [vmem:[#allocation2 + $0x198] sm:$0x7f] %vm3363, %v3327
  %3389 = vst.msk [vmem:[#allocation2 + $0x1a8] sm:$0xff] %vm51, %v3328
  %3390 = vst.msk [vmem:[#allocation2 + $0x1b8] sm:$0x7f] %vm3363, %v3329
  %3391 = vst.msk [vmem:[#allocation2 + $0x1c8] sm:$0xff] %vm51, %v3330
  %3392 = vst.msk [vmem:[#allocation2 + $0x1d8] sm:$0x7f] %vm3363, %v3331
  %3393 = vst.msk [vmem:[#allocation2 + $0x208] sm:$0xff] %vm51, %v3332
  %3394 = vst.msk [vmem:[#allocation2 + $0x218] sm:$0x7f] %vm3363, %v3333
  %3395 = vst.msk [vmem:[#allocation2 + $0x228] sm:$0xff] %vm51, %v3334
  %3396 = vst.msk [vmem:[#allocation2 + $0x238] sm:$0x7f] %vm3363, %v3335
  %3397 = vst.msk [vmem:[#allocation2 + $0x248] sm:$0xff] %vm51, %v3336
  %3398 = vst.msk [vmem:[#allocation2 + $0x258] sm:$0x7f] %vm3363, %v3337
  %3399 = vst.msk [vmem:[#allocation2 + $0x268] sm:$0xff] %vm51, %v3338
  %3400 = vst.msk [vmem:[#allocation2 + $0x278] sm:$0x7f] %vm3363, %v3339
  %3401 = vst.msk [vmem:[#allocation2 + $0x288] sm:$0xff] %vm51, %v3340
  %3402 = vst.msk [vmem:[#allocation2 + $0x298] sm:$0x7f] %vm3363, %v3341
  %3403 = vst.msk [vmem:[#allocation2 + $0x2a8] sm:$0xff] %vm51, %v3342
  %3404 = vst.msk [vmem:[#allocation2 + $0x2b8] sm:$0x7f] %vm3363, %v3343
  %3405 = vst.msk [vmem:[#allocation2 + $0x2c8] sm:$0xff] %vm51, %v3344
  %3406 = vst.msk [vmem:[#allocation2 + $0x2d8] sm:$0x7f] %vm3363, %v3345
  %3407 = vst.msk [vmem:[#allocation2 + $0x2e8] sm:$0xff] %vm51, %v3346
  %3408 = vst.msk [vmem:[#allocation2 + $0x2f8] sm:$0x7f] %vm3363, %v3347
  %3409 = vst.msk [vmem:[#allocation2 + $0x308] sm:$0xff] %vm51, %v3348
  %3410 = vst.msk [vmem:[#allocation2 + $0x318] sm:$0x7f] %vm3363, %v3349
  %3411 = vst.msk [vmem:[#allocation2 + $0x328] sm:$0xff] %vm51, %v3350
  %3412 = vst.msk [vmem:[#allocation2 + $0x338] sm:$0x7f] %vm3363, %v3351
  %3413 = vst.msk [vmem:[#allocation2 + $0x348] sm:$0xff] %vm51, %v3352
  %3414 = vst.msk [vmem:[#allocation2 + $0x358] sm:$0x7f] %vm3363, %v3353
  %3415 = vst.msk [vmem:[#allocation2 + $0x368] sm:$0xff] %vm51, %v3354
  %3416 = vst.msk [vmem:[#allocation2 + $0x378] sm:$0x7f] %vm3363, %v3355
  %3417 = vst.msk [vmem:[#allocation2 + $0x388] sm:$0xff] %vm51, %v3356
  %3418 = vst.msk [vmem:[#allocation2 + $0x398] sm:$0x7f] %vm3363, %v3357
  %3419 = vst.msk [vmem:[#allocation2 + $0x3a8] sm:$0xff] %vm51, %v3358
  %3420 = vst.msk [vmem:[#allocation2 + $0x3b8] sm:$0x7f] %vm3363, %v3359
  %3421 = vst.msk [vmem:[#allocation2 + $0x3c8] sm:$0xff] %vm51, %v3360
  %3422 = vst.msk [vmem:[#allocation2 + $0x3d8] sm:$0x7f] %vm3363, %v3361
  %v3423 = vld [vmem:[#allocation2] sm:$0xff]
  %v3424 = vld [vmem:[#allocation2 + $0x8] sm:$0xff]
  %v3425 = vld [vmem:[#allocation2 + $0x10] sm:$0xff]
  %v3426 = vld [vmem:[#allocation2 + $0x18] sm:$0xff]
  %v3427 = vld [vmem:[#allocation2 + $0x20] sm:$0xff]
  %v3428 = vld [vmem:[#allocation2 + $0x28] sm:$0xff]
  %v3429 = vld [vmem:[#allocation2 + $0x30] sm:$0xff]
  %v3430 = vld [vmem:[#allocation2 + $0x38] sm:$0xff]
  %v3431 = vld [vmem:[#allocation2 + $0x40] sm:$0xff]
  %v3432 = vld [vmem:[#allocation2 + $0x48] sm:$0xff]
  %v3433 = vld [vmem:[#allocation2 + $0x50] sm:$0xff]
  %v3434 = vld [vmem:[#allocation2 + $0x58] sm:$0xff]
  %v3435 = vld [vmem:[#allocation2 + $0x60] sm:$0xff]
  %v3436 = vld [vmem:[#allocation2 + $0x68] sm:$0xff]
  %v3437 = vld [vmem:[#allocation2 + $0x70] sm:$0xff]
  %v3438 = vld [vmem:[#allocation2 + $0x78] sm:$0xff]
  %v3439 = vld [vmem:[#allocation2 + $0x80] sm:$0xff]
  %v3440 = vld [vmem:[#allocation2 + $0x88] sm:$0xff]
  %v3441 = vld [vmem:[#allocation2 + $0x90] sm:$0xff]
  %v3442 = vld [vmem:[#allocation2 + $0x98] sm:$0xff]
  %v3443 = vld [vmem:[#allocation2 + $0xa0] sm:$0xff]
  %v3444 = vld [vmem:[#allocation2 + $0xa8] sm:$0xff]
  %v3445 = vld [vmem:[#allocation2 + $0xb0] sm:$0xff]
  %v3446 = vld [vmem:[#allocation2 + $0xb8] sm:$0xff]
  %v3447 = vld [vmem:[#allocation2 + $0xc0] sm:$0xff]
  %v3448 = vld [vmem:[#allocation2 + $0xc8] sm:$0xff]
  %v3449 = vld [vmem:[#allocation2 + $0xd0] sm:$0xff]
  %v3450 = vld [vmem:[#allocation2 + $0xd8] sm:$0xff]
  %v3451 = vld [vmem:[#allocation2 + $0xe0] sm:$0xff]
  %v3452 = vld [vmem:[#allocation2 + $0xe8] sm:$0xff]
  %v3453 = vld [vmem:[#allocation2 + $0xf0] sm:$0xff]
  %v3454 = vld [vmem:[#allocation2 + $0xf8] sm:$0xff]
  %v3455 = vld [vmem:[#allocation2 + $0x100] sm:$0xff]
  %v3456 = vld [vmem:[#allocation2 + $0x108] sm:$0xff]
  %v3457 = vld [vmem:[#allocation2 + $0x110] sm:$0xff]
  %v3458 = vld [vmem:[#allocation2 + $0x118] sm:$0xff]
  %v3459 = vld [vmem:[#allocation2 + $0x120] sm:$0xff]
  %v3460 = vld [vmem:[#allocation2 + $0x128] sm:$0xff]
  %v3461 = vld [vmem:[#allocation2 + $0x130] sm:$0xff]
  %v3462 = vld [vmem:[#allocation2 + $0x138] sm:$0xff]
  %v3463 = vld [vmem:[#allocation2 + $0x140] sm:$0xff]
  %v3464 = vld [vmem:[#allocation2 + $0x148] sm:$0xff]
  %v3465 = vld [vmem:[#allocation2 + $0x150] sm:$0xff]
  %v3466 = vld [vmem:[#allocation2 + $0x158] sm:$0xff]
  %v3467 = vld [vmem:[#allocation2 + $0x160] sm:$0xff]
  %v3468 = vld [vmem:[#allocation2 + $0x168] sm:$0xff]
  %v3469 = vld [vmem:[#allocation2 + $0x170] sm:$0xff]
  %v3470 = vld [vmem:[#allocation2 + $0x178] sm:$0xff]
  %v3471 = vld [vmem:[#allocation2 + $0x180] sm:$0xff]
  %v3472 = vld [vmem:[#allocation2 + $0x188] sm:$0xff]
  %v3473 = vld [vmem:[#allocation2 + $0x190] sm:$0xff]
  %v3474 = vld [vmem:[#allocation2 + $0x198] sm:$0xff]
  %v3475 = vld [vmem:[#allocation2 + $0x1a0] sm:$0xff]
  %v3476 = vld [vmem:[#allocation2 + $0x1a8] sm:$0xff]
  %v3477 = vld [vmem:[#allocation2 + $0x1b0] sm:$0xff]
  %v3478 = vld [vmem:[#allocation2 + $0x1b8] sm:$0xff]
  %v3479 = vld [vmem:[#allocation2 + $0x1c0] sm:$0xff]
  %v3480 = vld [vmem:[#allocation2 + $0x1c8] sm:$0xff]
  %v3481 = vld [vmem:[#allocation2 + $0x1d0] sm:$0xff]
  %v3482 = vld [vmem:[#allocation2 + $0x1d8] sm:$0xff]
  %v3483 = vld [vmem:[#allocation2 + $0x1e0] sm:$0xff]
  %v3484 = vld [vmem:[#allocation2 + $0x1e8] sm:$0xff]
  %v3485 = vld [vmem:[#allocation2 + $0x1f0] sm:$0xff]
  %v3486 = vld [vmem:[#allocation2 + $0x1f8] sm:$0xff]
  %v3487 = vld [vmem:[#allocation2 + $0x200] sm:$0xff]
  %v3488 = vld [vmem:[#allocation2 + $0x208] sm:$0xff]
  %v3489 = vld [vmem:[#allocation2 + $0x210] sm:$0xff]
  %v3490 = vld [vmem:[#allocation2 + $0x218] sm:$0xff]
  %v3491 = vld [vmem:[#allocation2 + $0x220] sm:$0xff]
  %v3492 = vld [vmem:[#allocation2 + $0x228] sm:$0xff]
  %v3493 = vld [vmem:[#allocation2 + $0x230] sm:$0xff]
  %v3494 = vld [vmem:[#allocation2 + $0x238] sm:$0xff]
  %v3495 = vld [vmem:[#allocation2 + $0x240] sm:$0xff]
  %v3496 = vld [vmem:[#allocation2 + $0x248] sm:$0xff]
  %v3497 = vld [vmem:[#allocation2 + $0x250] sm:$0xff]
  %v3498 = vld [vmem:[#allocation2 + $0x258] sm:$0xff]
  %v3499 = vld [vmem:[#allocation2 + $0x260] sm:$0xff]
  %v3500 = vld [vmem:[#allocation2 + $0x268] sm:$0xff]
  %v3501 = vld [vmem:[#allocation2 + $0x270] sm:$0xff]
  %v3502 = vld [vmem:[#allocation2 + $0x278] sm:$0xff]
  %v3503 = vld [vmem:[#allocation2 + $0x280] sm:$0xff]
  %v3504 = vld [vmem:[#allocation2 + $0x288] sm:$0xff]
  %v3505 = vld [vmem:[#allocation2 + $0x290] sm:$0xff]
  %v3506 = vld [vmem:[#allocation2 + $0x298] sm:$0xff]
  %v3507 = vld [vmem:[#allocation2 + $0x2a0] sm:$0xff]
  %v3508 = vld [vmem:[#allocation2 + $0x2a8] sm:$0xff]
  %v3509 = vld [vmem:[#allocation2 + $0x2b0] sm:$0xff]
  %v3510 = vld [vmem:[#allocation2 + $0x2b8] sm:$0xff]
  %v3511 = vld [vmem:[#allocation2 + $0x2c0] sm:$0xff]
  %v3512 = vld [vmem:[#allocation2 + $0x2c8] sm:$0xff]
  %v3513 = vld [vmem:[#allocation2 + $0x2d0] sm:$0xff]
  %v3514 = vld [vmem:[#allocation2 + $0x2d8] sm:$0xff]
  %v3515 = vld [vmem:[#allocation2 + $0x2e0] sm:$0xff]
  %v3516 = vld [vmem:[#allocation2 + $0x2e8] sm:$0xff]
  %v3517 = vld [vmem:[#allocation2 + $0x2f0] sm:$0xff]
  %v3518 = vld [vmem:[#allocation2 + $0x2f8] sm:$0xff]
  %v3519 = vld [vmem:[#allocation2 + $0x300] sm:$0xff]
  %v3520 = vld [vmem:[#allocation2 + $0x308] sm:$0xff]
  %v3521 = vld [vmem:[#allocation2 + $0x310] sm:$0xff]
  %v3522 = vld [vmem:[#allocation2 + $0x318] sm:$0xff]
  %v3523 = vld [vmem:[#allocation2 + $0x320] sm:$0xff]
  %v3524 = vld [vmem:[#allocation2 + $0x328] sm:$0xff]
  %v3525 = vld [vmem:[#allocation2 + $0x330] sm:$0xff]
  %v3526 = vld [vmem:[#allocation2 + $0x338] sm:$0xff]
  %v3527 = vld [vmem:[#allocation2 + $0x340] sm:$0xff]
  %v3528 = vld [vmem:[#allocation2 + $0x348] sm:$0xff]
  %v3529 = vld [vmem:[#allocation2 + $0x350] sm:$0xff]
  %v3530 = vld [vmem:[#allocation2 + $0x358] sm:$0xff]
  %v3531 = vld [vmem:[#allocation2 + $0x360] sm:$0xff]
  %v3532 = vld [vmem:[#allocation2 + $0x368] sm:$0xff]
  %v3533 = vld [vmem:[#allocation2 + $0x370] sm:$0xff]
  %v3534 = vld [vmem:[#allocation2 + $0x378] sm:$0xff]
  %v3535 = vld [vmem:[#allocation2 + $0x380] sm:$0xff]
  %v3536 = vld [vmem:[#allocation2 + $0x388] sm:$0xff]
  %v3537 = vld [vmem:[#allocation2 + $0x390] sm:$0xff]
  %v3538 = vld [vmem:[#allocation2 + $0x398] sm:$0xff]
  %v3539 = vld [vmem:[#allocation2 + $0x3a0] sm:$0xff]
  %v3540 = vld [vmem:[#allocation2 + $0x3a8] sm:$0xff]
  %v3541 = vld [vmem:[#allocation2 + $0x3b0] sm:$0xff]
  %v3542 = vld [vmem:[#allocation2 + $0x3b8] sm:$0xff]
  %v3543 = vld [vmem:[#allocation2 + $0x3c0] sm:$0xff]
  %v3544 = vld [vmem:[#allocation2 + $0x3c8] sm:$0xff]
  %v3545 = vld [vmem:[#allocation2 + $0x3d0] sm:$0xff]
  %v3546 = vld [vmem:[#allocation2 + $0x3d8] sm:$0xff]
  %v3547 = vld [vmem:[#allocation2 + $0x3e0] sm:$0xff]
  %v3548 = vld [vmem:[#allocation2 + $0x3e8] sm:$0xff]
  %v3549 = vld [vmem:[#allocation2 + $0x3f0] sm:$0xff]
  %v3550 = vld [vmem:[#allocation2 + $0x3f8] sm:$0xff]
  %v3551 = vld [vmem:[%s5] sm:$0xff]
  %v3552 = vld [vmem:[%s5 + $0x8] sm:$0xff]
  %v3553 = vld [vmem:[%s5 + $0x10] sm:$0xff]
  %v3554 = vld [vmem:[%s5 + $0x18] sm:$0xff]
  %v3555 = vld [vmem:[%s5 + $0x20] sm:$0xff]
  %v3556 = vld [vmem:[%s5 + $0x28] sm:$0xff]
  %v3557 = vld [vmem:[%s5 + $0x30] sm:$0xff]
  %v3558 = vld [vmem:[%s5 + $0x38] sm:$0xff]
  %v3559 = vld [vmem:[%s5 + $0x40] sm:$0xff]
  %v3560 = vld [vmem:[%s5 + $0x48] sm:$0xff]
  %v3561 = vld [vmem:[%s5 + $0x50] sm:$0xff]
  %v3562 = vld [vmem:[%s5 + $0x58] sm:$0xff]
  %v3563 = vld [vmem:[%s5 + $0x60] sm:$0xff]
  %v3564 = vld [vmem:[%s5 + $0x68] sm:$0xff]
  %v3565 = vld [vmem:[%s5 + $0x70] sm:$0xff]
  %v3566 = vld [vmem:[%s5 + $0x78] sm:$0xff]
  %v3567 = vld [vmem:[%s5 + $0x80] sm:$0xff]
  %v3568 = vld [vmem:[%s5 + $0x88] sm:$0xff]
  %v3569 = vld [vmem:[%s6] sm:$0x1]
  %v3571 = vlaneseq
  %v3572 = vshrl.u32 %v3571, 7
  %v3573 = vsub.s32 0, %v3572
  %v3574 = vrot.slane %v3569, %v3573
  %v3577 = vsel %vm51, %v3424, 0
  %v3580 = vsel %vm51, %v3426, 0
  %v3583 = vsel %vm51, %v3428, 0
  %v3586 = vsel %vm51, %v3430, 0
  %v3589 = vsel %vm51, %v3432, 0
  %v3592 = vsel %vm51, %v3434, 0
  %v3595 = vsel %vm51, %v3436, 0
  %v3598 = vsel %vm51, %v3438, 0
  %v3601 = vsel %vm51, %v3440, 0
  %v3604 = vsel %vm51, %v3442, 0
  %v3607 = vsel %vm51, %v3444, 0
  %v3610 = vsel %vm51, %v3446, 0
  %v3613 = vsel %vm51, %v3448, 0
  %v3616 = vsel %vm51, %v3450, 0
  %v3619 = vsel %vm51, %v3452, 0
  %v3622 = vsel %vm51, %v3454, 0
  %v3625 = vsel %vm51, %v3456, 0
  %v3628 = vsel %vm51, %v3458, 0
  %v3631 = vsel %vm51, %v3460, 0
  %v3634 = vsel %vm51, %v3462, 0
  %v3637 = vsel %vm51, %v3464, 0
  %v3640 = vsel %vm51, %v3466, 0
  %v3643 = vsel %vm51, %v3468, 0
  %v3646 = vsel %vm51, %v3470, 0
  %v3649 = vsel %vm51, %v3472, 0
  %v3652 = vsel %vm51, %v3474, 0
  %v3655 = vsel %vm51, %v3476, 0
  %v3658 = vsel %vm51, %v3478, 0
  %v3661 = vsel %vm51, %v3480, 0
  %v3664 = vsel %vm51, %v3482, 0
  %v3667 = vsel %vm51, %v3484, 0
  %v3670 = vsel %vm51, %v3486, 0
  %v3673 = vsel %vm51, %v3488, 0
  %v3676 = vsel %vm51, %v3490, 0
  %v3679 = vsel %vm51, %v3492, 0
  %v3682 = vsel %vm51, %v3494, 0
  %v3685 = vsel %vm51, %v3496, 0
  %v3688 = vsel %vm51, %v3498, 0
  %v3691 = vsel %vm51, %v3500, 0
  %v3694 = vsel %vm51, %v3502, 0
  %v3697 = vsel %vm51, %v3504, 0
  %v3700 = vsel %vm51, %v3506, 0
  %v3703 = vsel %vm51, %v3508, 0
  %v3706 = vsel %vm51, %v3510, 0
  %v3709 = vsel %vm51, %v3512, 0
  %v3712 = vsel %vm51, %v3514, 0
  %v3715 = vsel %vm51, %v3516, 0
  %v3718 = vsel %vm51, %v3518, 0
  %v3721 = vsel %vm51, %v3520, 0
  %v3724 = vsel %vm51, %v3522, 0
  %v3727 = vsel %vm51, %v3524, 0
  %v3730 = vsel %vm51, %v3526, 0
  %v3733 = vsel %vm51, %v3528, 0
  %v3736 = vsel %vm51, %v3530, 0
  %v3739 = vsel %vm51, %v3532, 0
  %v3742 = vsel %vm51, %v3534, 0
  %v3745 = vsel %vm51, %v3536, 0
  %v3748 = vsel %vm51, %v3538, 0
  %v3751 = vsel %vm51, %v3540, 0
  %v3754 = vsel %vm51, %v3542, 0
  %v3757 = vsel %vm51, %v3544, 0
  %v3760 = vsel %vm51, %v3546, 0
  %v3763 = vsel %vm51, %v3548, 0
  %v3766 = vsel %vm51, %v3550, 0
  %3768 = vmatprep.subr.mxu0 0.0
  %3769 = vmatpush1.msra.mxu0 %v3566
  %3770 = vmatprep.subr.mxu0 0.0
  %3771 = vmatpush1.msra.mxu0 %v3565
  %3772 = vmatprep.subr.mxu0 0.0
  %3773 = vmatpush1.msra.mxu0 %v3564
  %3774 = vmatprep.subr.mxu0 0.0
  %3775 = vmatpush1.msra.mxu0 %v3563
  %3776 = vmatprep.subr.mxu0 0.0
  %3777 = vmatpush1.msra.mxu0 %v3562
  %3778 = vmatprep.subr.mxu0 0.0
  %3779 = vmatpush1.msra.mxu0 %v3561
  %3780 = vmatprep.subr.mxu0 0.0
  %3781 = vmatpush1.msra.mxu0 %v3560
  %3782 = vmatprep.subr.mxu0 0.0
  %3783 = vmatpush1.msra.mxu0 %v3559
  %3784 = vmatprep.subr.mxu0 0.0
  %3785 = vmatpush1.msra.mxu0 %v3558
  %3786 = vmatprep.subr.mxu0 0.0
  %3787 = vmatpush1.msra.mxu0 %v3557
  %3788 = vmatprep.subr.mxu0 0.0
  %3789 = vmatpush1.msra.mxu0 %v3556
  %3790 = vmatprep.subr.mxu0 0.0
  %3791 = vmatpush1.msra.mxu0 %v3555
  %3792 = vmatprep.subr.mxu0 0.0
  %3793 = vmatpush1.msra.mxu0 %v3554
  %3794 = vmatprep.subr.mxu0 0.0
  %3795 = vmatpush1.msra.mxu0 %v3553
  %3796 = vmatprep.subr.mxu0 0.0
  %3797 = vmatpush1.msra.mxu0 %v3552
  %3798 = vmatprep.subr.mxu0 0.0
  %3799 = vmatpush1.msra.mxu0 %v3551
  %3800 = vmatprep.subr.mxu0 0.0
  %3801 = vmatpush2.msra.mxu0 0.0
  %3802 = vmatprep.subr.mxu0 0.0
  %3803 = vmatpush2.msra.mxu0 0.0
  %3804 = vmatprep.subr.mxu0 0.0
  %3805 = vmatpush2.msra.mxu0 0.0
  %3806 = vmatprep.subr.mxu0 0.0
  %3807 = vmatpush2.msra.mxu0 0.0
  %3808 = vmatprep.subr.mxu0 0.0
  %3809 = vmatpush2.msra.mxu0 0.0
  %3810 = vmatprep.subr.mxu0 0.0
  %3811 = vmatpush2.msra.mxu0 0.0
  %3812 = vmatprep.subr.mxu0 0.0
  %3813 = vmatpush2.msra.mxu0 0.0
  %3814 = vmatprep.subr.mxu0 0.0
  %3815 = vmatpush2.msra.mxu0 0.0
  %3816 = vmatprep.subr.mxu0 0.0
  %3817 = vmatpush2.msra.mxu0 0.0
  %3818 = vmatprep.subr.mxu0 0.0
  %3819 = vmatpush2.msra.mxu0 0.0
  %3820 = vmatprep.subr.mxu0 0.0
  %3821 = vmatpush2.msra.mxu0 0.0
  %3822 = vmatprep.subr.mxu0 0.0
  %3823 = vmatpush2.msra.mxu0 0.0
  %3824 = vmatprep.subr.mxu0 0.0
  %3825 = vmatpush2.msra.mxu0 0.0
  %3826 = vmatprep.subr.mxu0 0.0
  %3827 = vmatpush2.msra.mxu0 0.0
  %3828 = vmatprep.subr.mxu0 0.0
  %3829 = vmatpush2.msra.mxu0 %v3568
  %3830 = vmatprep.subr.mxu0 0.0
  %3831 = vmatpush2.msra.mxu0 %v3567
  %3832 = vmatprep.mubr.f32.mxu0 %v3577
  %3833 = vmatmul.mubr.f32.gmra.mxu0 %v3423
  %v3834 = vpop.f32.mrf.mxu0
  %v3835 = vadd.f32 %v3574, %v3834
  %v3836 = vpop.f32.mrf.mxu0
  %3837 = vmatprep.mubr.f32.mxu0 %v3580
  %3838 = vmatmul.mubr.f32.gmra.mxu0 %v3425
  %v3839 = vpop.f32.mrf.mxu0
  %v3840 = vadd.f32 %v3574, %v3839
  %v3841 = vpop.f32.mrf.mxu0
  %3842 = vmatprep.mubr.f32.mxu0 %v3583
  %3843 = vmatmul.mubr.f32.gmra.mxu0 %v3427
  %v3844 = vpop.f32.mrf.mxu0
  %v3845 = vadd.f32 %v3574, %v3844
  %v3846 = vpop.f32.mrf.mxu0
  %3847 = vmatprep.mubr.f32.mxu0 %v3586
  %3848 = vmatmul.mubr.f32.gmra.mxu0 %v3429
  %v3849 = vpop.f32.mrf.mxu0
  %v3850 = vadd.f32 %v3574, %v3849
  %v3851 = vpop.f32.mrf.mxu0
  %3852 = vmatprep.mubr.f32.mxu0 %v3589
  %3853 = vmatmul.mubr.f32.gmra.mxu0 %v3431
  %v3854 = vpop.f32.mrf.mxu0
  %v3855 = vadd.f32 %v3574, %v3854
  %v3856 = vpop.f32.mrf.mxu0
  %3857 = vmatprep.mubr.f32.mxu0 %v3592
  %3858 = vmatmul.mubr.f32.gmra.mxu0 %v3433
  %v3859 = vpop.f32.mrf.mxu0
  %v3860 = vadd.f32 %v3574, %v3859
  %v3861 = vpop.f32.mrf.mxu0
  %3862 = vmatprep.mubr.f32.mxu0 %v3595
  %3863 = vmatmul.mubr.f32.gmra.mxu0 %v3435
  %v3864 = vpop.f32.mrf.mxu0
  %v3865 = vadd.f32 %v3574, %v3864
  %v3866 = vpop.f32.mrf.mxu0
  %3867 = vmatprep.mubr.f32.mxu0 %v3598
  %3868 = vmatmul.mubr.f32.gmra.mxu0 %v3437
  %v3869 = vpop.f32.mrf.mxu0
  %v3870 = vadd.f32 %v3574, %v3869
  %v3871 = vpop.f32.mrf.mxu0
  %3872 = vmatprep.mubr.f32.mxu0 %v3601
  %3873 = vmatmul.mubr.f32.gmra.mxu0 %v3439
  %v3874 = vpop.f32.mrf.mxu0
  %v3875 = vadd.f32 %v3574, %v3874
  %v3876 = vpop.f32.mrf.mxu0
  %3877 = vmatprep.mubr.f32.mxu0 %v3604
  %3878 = vmatmul.mubr.f32.gmra.mxu0 %v3441
  %v3879 = vpop.f32.mrf.mxu0
  %v3880 = vadd.f32 %v3574, %v3879
  %v3881 = vpop.f32.mrf.mxu0
  %3882 = vmatprep.mubr.f32.mxu0 %v3607
  %3883 = vmatmul.mubr.f32.gmra.mxu0 %v3443
  %v3884 = vpop.f32.mrf.mxu0
  %v3885 = vadd.f32 %v3574, %v3884
  %v3886 = vpop.f32.mrf.mxu0
  %3887 = vmatprep.mubr.f32.mxu0 %v3610
  %3888 = vmatmul.mubr.f32.gmra.mxu0 %v3445
  %v3889 = vpop.f32.mrf.mxu0
  %v3890 = vadd.f32 %v3574, %v3889
  %v3891 = vpop.f32.mrf.mxu0
  %3892 = vmatprep.mubr.f32.mxu0 %v3613
  %3893 = vmatmul.mubr.f32.gmra.mxu0 %v3447
  %v3894 = vpop.f32.mrf.mxu0
  %v3895 = vadd.f32 %v3574, %v3894
  %v3896 = vpop.f32.mrf.mxu0
  %3897 = vmatprep.mubr.f32.mxu0 %v3616
  %3898 = vmatmul.mubr.f32.gmra.mxu0 %v3449
  %v3899 = vpop.f32.mrf.mxu0
  %v3900 = vadd.f32 %v3574, %v3899
  %v3901 = vpop.f32.mrf.mxu0
  %3902 = vmatprep.mubr.f32.mxu0 %v3619
  %3903 = vmatmul.mubr.f32.gmra.mxu0 %v3451
  %v3904 = vpop.f32.mrf.mxu0
  %v3905 = vadd.f32 %v3574, %v3904
  %v3906 = vpop.f32.mrf.mxu0
  %3907 = vmatprep.mubr.f32.mxu0 %v3622
  %3908 = vmatmul.mubr.f32.gmra.mxu0 %v3453
  %v3909 = vpop.f32.mrf.mxu0
  %v3910 = vadd.f32 %v3574, %v3909
  %v3911 = vpop.f32.mrf.mxu0
  %3912 = vmatprep.mubr.f32.mxu0 %v3625
  %3913 = vmatmul.mubr.f32.gmra.mxu0 %v3455
  %v3914 = vpop.f32.mrf.mxu0
  %v3915 = vadd.f32 %v3574, %v3914
  %v3916 = vpop.f32.mrf.mxu0
  %3917 = vmatprep.mubr.f32.mxu0 %v3628
  %3918 = vmatmul.mubr.f32.gmra.mxu0 %v3457
  %v3919 = vpop.f32.mrf.mxu0
  %v3920 = vadd.f32 %v3574, %v3919
  %v3921 = vpop.f32.mrf.mxu0
  %3922 = vmatprep.mubr.f32.mxu0 %v3631
  %3923 = vmatmul.mubr.f32.gmra.mxu0 %v3459
  %v3924 = vpop.f32.mrf.mxu0
  %v3925 = vadd.f32 %v3574, %v3924
  %v3926 = vpop.f32.mrf.mxu0
  %3927 = vmatprep.mubr.f32.mxu0 %v3634
  %3928 = vmatmul.mubr.f32.gmra.mxu0 %v3461
  %v3929 = vpop.f32.mrf.mxu0
  %v3930 = vadd.f32 %v3574, %v3929
  %v3931 = vpop.f32.mrf.mxu0
  %3932 = vmatprep.mubr.f32.mxu0 %v3637
  %3933 = vmatmul.mubr.f32.gmra.mxu0 %v3463
  %v3934 = vpop.f32.mrf.mxu0
  %v3935 = vadd.f32 %v3574, %v3934
  %v3936 = vpop.f32.mrf.mxu0
  %3937 = vmatprep.mubr.f32.mxu0 %v3640
  %3938 = vmatmul.mubr.f32.gmra.mxu0 %v3465
  %v3939 = vpop.f32.mrf.mxu0
  %v3940 = vadd.f32 %v3574, %v3939
  %v3941 = vpop.f32.mrf.mxu0
  %3942 = vmatprep.mubr.f32.mxu0 %v3643
  %3943 = vmatmul.mubr.f32.gmra.mxu0 %v3467
  %v3944 = vpop.f32.mrf.mxu0
  %v3945 = vadd.f32 %v3574, %v3944
  %v3946 = vpop.f32.mrf.mxu0
  %3947 = vmatprep.mubr.f32.mxu0 %v3646
  %3948 = vmatmul.mubr.f32.gmra.mxu0 %v3469
  %v3949 = vpop.f32.mrf.mxu0
  %v3950 = vadd.f32 %v3574, %v3949
  %v3951 = vpop.f32.mrf.mxu0
  %3952 = vmatprep.mubr.f32.mxu0 %v3649
  %3953 = vmatmul.mubr.f32.gmra.mxu0 %v3471
  %v3954 = vpop.f32.mrf.mxu0
  %v3955 = vadd.f32 %v3574, %v3954
  %v3956 = vpop.f32.mrf.mxu0
  %3957 = vmatprep.mubr.f32.mxu0 %v3652
  %3958 = vmatmul.mubr.f32.gmra.mxu0 %v3473
  %v3959 = vpop.f32.mrf.mxu0
  %v3960 = vadd.f32 %v3574, %v3959
  %v3961 = vpop.f32.mrf.mxu0
  %3962 = vmatprep.mubr.f32.mxu0 %v3655
  %3963 = vmatmul.mubr.f32.gmra.mxu0 %v3475
  %v3964 = vpop.f32.mrf.mxu0
  %v3965 = vadd.f32 %v3574, %v3964
  %v3966 = vpop.f32.mrf.mxu0
  %3967 = vmatprep.mubr.f32.mxu0 %v3658
  %3968 = vmatmul.mubr.f32.gmra.mxu0 %v3477
  %v3969 = vpop.f32.mrf.mxu0
  %v3970 = vadd.f32 %v3574, %v3969
  %v3971 = vpop.f32.mrf.mxu0
  %3972 = vmatprep.mubr.f32.mxu0 %v3661
  %3973 = vmatmul.mubr.f32.gmra.mxu0 %v3479
  %v3974 = vpop.f32.mrf.mxu0
  %v3975 = vadd.f32 %v3574, %v3974
  %v3976 = vpop.f32.mrf.mxu0
  %3977 = vmatprep.mubr.f32.mxu0 %v3664
  %3978 = vmatmul.mubr.f32.gmra.mxu0 %v3481
  %v3979 = vpop.f32.mrf.mxu0
  %v3980 = vadd.f32 %v3574, %v3979
  %v3981 = vpop.f32.mrf.mxu0
  %3982 = vmatprep.mubr.f32.mxu0 %v3667
  %3983 = vmatmul.mubr.f32.gmra.mxu0 %v3483
  %v3984 = vpop.f32.mrf.mxu0
  %v3985 = vadd.f32 %v3574, %v3984
  %v3986 = vpop.f32.mrf.mxu0
  %3987 = vmatprep.mubr.f32.mxu0 %v3670
  %3988 = vmatmul.mubr.f32.gmra.mxu0 %v3485
  %v3989 = vpop.f32.mrf.mxu0
  %v3990 = vadd.f32 %v3574, %v3989
  %v3991 = vpop.f32.mrf.mxu0
  %3992 = vmatprep.mubr.f32.mxu0 %v3673
  %3993 = vmatmul.mubr.f32.gmra.mxu0 %v3487
  %v3994 = vpop.f32.mrf.mxu0
  %v3995 = vadd.f32 %v3574, %v3994
  %v3996 = vpop.f32.mrf.mxu0
  %3997 = vmatprep.mubr.f32.mxu0 %v3676
  %3998 = vmatmul.mubr.f32.gmra.mxu0 %v3489
  %v3999 = vpop.f32.mrf.mxu0
  %v4000 = vadd.f32 %v3574, %v3999
  %v4001 = vpop.f32.mrf.mxu0
  %4002 = vmatprep.mubr.f32.mxu0 %v3679
  %4003 = vmatmul.mubr.f32.gmra.mxu0 %v3491
  %v4004 = vpop.f32.mrf.mxu0
  %v4005 = vadd.f32 %v3574, %v4004
  %v4006 = vpop.f32.mrf.mxu0
  %4007 = vmatprep.mubr.f32.mxu0 %v3682
  %4008 = vmatmul.mubr.f32.gmra.mxu0 %v3493
  %v4009 = vpop.f32.mrf.mxu0
  %v4010 = vadd.f32 %v3574, %v4009
  %v4011 = vpop.f32.mrf.mxu0
  %4012 = vmatprep.mubr.f32.mxu0 %v3685
  %4013 = vmatmul.mubr.f32.gmra.mxu0 %v3495
  %v4014 = vpop.f32.mrf.mxu0
  %v4015 = vadd.f32 %v3574, %v4014
  %v4016 = vpop.f32.mrf.mxu0
  %4017 = vmatprep.mubr.f32.mxu0 %v3688
  %4018 = vmatmul.mubr.f32.gmra.mxu0 %v3497
  %v4019 = vpop.f32.mrf.mxu0
  %v4020 = vadd.f32 %v3574, %v4019
  %v4021 = vpop.f32.mrf.mxu0
  %4022 = vmatprep.mubr.f32.mxu0 %v3691
  %4023 = vmatmul.mubr.f32.gmra.mxu0 %v3499
  %v4024 = vpop.f32.mrf.mxu0
  %v4025 = vadd.f32 %v3574, %v4024
  %v4026 = vpop.f32.mrf.mxu0
  %4027 = vmatprep.mubr.f32.mxu0 %v3694
  %4028 = vmatmul.mubr.f32.gmra.mxu0 %v3501
  %v4029 = vpop.f32.mrf.mxu0
  %v4030 = vadd.f32 %v3574, %v4029
  %v4031 = vpop.f32.mrf.mxu0
  %4032 = vmatprep.mubr.f32.mxu0 %v3697
  %4033 = vmatmul.mubr.f32.gmra.mxu0 %v3503
  %v4034 = vpop.f32.mrf.mxu0
  %v4035 = vadd.f32 %v3574, %v4034
  %v4036 = vpop.f32.mrf.mxu0
  %4037 = vmatprep.mubr.f32.mxu0 %v3700
  %4038 = vmatmul.mubr.f32.gmra.mxu0 %v3505
  %v4039 = vpop.f32.mrf.mxu0
  %v4040 = vadd.f32 %v3574, %v4039
  %v4041 = vpop.f32.mrf.mxu0
  %4042 = vmatprep.mubr.f32.mxu0 %v3703
  %4043 = vmatmul.mubr.f32.gmra.mxu0 %v3507
  %v4044 = vpop.f32.mrf.mxu0
  %v4045 = vadd.f32 %v3574, %v4044
  %v4046 = vpop.f32.mrf.mxu0
  %4047 = vmatprep.mubr.f32.mxu0 %v3706
  %4048 = vmatmul.mubr.f32.gmra.mxu0 %v3509
  %v4049 = vpop.f32.mrf.mxu0
  %v4050 = vadd.f32 %v3574, %v4049
  %v4051 = vpop.f32.mrf.mxu0
  %4052 = vmatprep.mubr.f32.mxu0 %v3709
  %4053 = vmatmul.mubr.f32.gmra.mxu0 %v3511
  %v4054 = vpop.f32.mrf.mxu0
  %v4055 = vadd.f32 %v3574, %v4054
  %v4056 = vpop.f32.mrf.mxu0
  %4057 = vmatprep.mubr.f32.mxu0 %v3712
  %4058 = vmatmul.mubr.f32.gmra.mxu0 %v3513
  %v4059 = vpop.f32.mrf.mxu0
  %v4060 = vadd.f32 %v3574, %v4059
  %v4061 = vpop.f32.mrf.mxu0
  %4062 = vmatprep.mubr.f32.mxu0 %v3715
  %4063 = vmatmul.mubr.f32.gmra.mxu0 %v3515
  %v4064 = vpop.f32.mrf.mxu0
  %v4065 = vadd.f32 %v3574, %v4064
  %v4066 = vpop.f32.mrf.mxu0
  %4067 = vmatprep.mubr.f32.mxu0 %v3718
  %4068 = vmatmul.mubr.f32.gmra.mxu0 %v3517
  %v4069 = vpop.f32.mrf.mxu0
  %v4070 = vadd.f32 %v3574, %v4069
  %v4071 = vpop.f32.mrf.mxu0
  %4072 = vmatprep.mubr.f32.mxu0 %v3721
  %4073 = vmatmul.mubr.f32.gmra.mxu0 %v3519
  %v4074 = vpop.f32.mrf.mxu0
  %v4075 = vadd.f32 %v3574, %v4074
  %v4076 = vpop.f32.mrf.mxu0
  %4077 = vmatprep.mubr.f32.mxu0 %v3724
  %4078 = vmatmul.mubr.f32.gmra.mxu0 %v3521
  %v4079 = vpop.f32.mrf.mxu0
  %v4080 = vadd.f32 %v3574, %v4079
  %v4081 = vpop.f32.mrf.mxu0
  %4082 = vmatprep.mubr.f32.mxu0 %v3727
  %4083 = vmatmul.mubr.f32.gmra.mxu0 %v3523
  %v4084 = vpop.f32.mrf.mxu0
  %v4085 = vadd.f32 %v3574, %v4084
  %v4086 = vpop.f32.mrf.mxu0
  %4087 = vmatprep.mubr.f32.mxu0 %v3730
  %4088 = vmatmul.mubr.f32.gmra.mxu0 %v3525
  %v4089 = vpop.f32.mrf.mxu0
  %v4090 = vadd.f32 %v3574, %v4089
  %v4091 = vpop.f32.mrf.mxu0
  %4092 = vmatprep.mubr.f32.mxu0 %v3733
  %4093 = vmatmul.mubr.f32.gmra.mxu0 %v3527
  %v4094 = vpop.f32.mrf.mxu0
  %v4095 = vadd.f32 %v3574, %v4094
  %v4096 = vpop.f32.mrf.mxu0
  %4097 = vmatprep.mubr.f32.mxu0 %v3736
  %4098 = vmatmul.mubr.f32.gmra.mxu0 %v3529
  %v4099 = vpop.f32.mrf.mxu0
  %v4100 = vadd.f32 %v3574, %v4099
  %v4101 = vpop.f32.mrf.mxu0
  %4102 = vmatprep.mubr.f32.mxu0 %v3739
  %4103 = vmatmul.mubr.f32.gmra.mxu0 %v3531
  %v4104 = vpop.f32.mrf.mxu0
  %v4105 = vadd.f32 %v3574, %v4104
  %v4106 = vpop.f32.mrf.mxu0
  %4107 = vmatprep.mubr.f32.mxu0 %v3742
  %4108 = vmatmul.mubr.f32.gmra.mxu0 %v3533
  %v4109 = vpop.f32.mrf.mxu0
  %v4110 = vadd.f32 %v3574, %v4109
  %v4111 = vpop.f32.mrf.mxu0
  %4112 = vmatprep.mubr.f32.mxu0 %v3745
  %4113 = vmatmul.mubr.f32.gmra.mxu0 %v3535
  %v4114 = vpop.f32.mrf.mxu0
  %v4115 = vadd.f32 %v3574, %v4114
  %v4116 = vpop.f32.mrf.mxu0
  %4117 = vmatprep.mubr.f32.mxu0 %v3748
  %4118 = vmatmul.mubr.f32.gmra.mxu0 %v3537
  %v4119 = vpop.f32.mrf.mxu0
  %v4120 = vadd.f32 %v3574, %v4119
  %v4121 = vpop.f32.mrf.mxu0
  %4122 = vmatprep.mubr.f32.mxu0 %v3751
  %4123 = vmatmul.mubr.f32.gmra.mxu0 %v3539
  %v4124 = vpop.f32.mrf.mxu0
  %v4125 = vadd.f32 %v3574, %v4124
  %v4126 = vpop.f32.mrf.mxu0
  %4127 = vmatprep.mubr.f32.mxu0 %v3754
  %4128 = vmatmul.mubr.f32.gmra.mxu0 %v3541
  %v4129 = vpop.f32.mrf.mxu0
  %v4130 = vadd.f32 %v3574, %v4129
  %v4131 = vpop.f32.mrf.mxu0
  %4132 = vmatprep.mubr.f32.mxu0 %v3757
  %4133 = vmatmul.mubr.f32.gmra.mxu0 %v3543
  %v4134 = vpop.f32.mrf.mxu0
  %v4135 = vadd.f32 %v3574, %v4134
  %v4136 = vpop.f32.mrf.mxu0
  %4137 = vmatprep.mubr.f32.mxu0 %v3760
  %4138 = vmatmul.mubr.f32.gmra.mxu0 %v3545
  %v4139 = vpop.f32.mrf.mxu0
  %v4140 = vadd.f32 %v3574, %v4139
  %v4141 = vpop.f32.mrf.mxu0
  %4142 = vmatprep.mubr.f32.mxu0 %v3763
  %4143 = vmatmul.mubr.f32.gmra.mxu0 %v3547
  %v4144 = vpop.f32.mrf.mxu0
  %v4145 = vadd.f32 %v3574, %v4144
  %v4146 = vpop.f32.mrf.mxu0
  %4147 = vmatprep.mubr.f32.mxu0 %v3766
  %4148 = vmatmul.mubr.f32.gmra.mxu0 %v3549
  %v4149 = vpop.f32.mrf.mxu0
  %v4150 = vadd.f32 %v3574, %v4149
  %v4151 = vpop.f32.mrf.mxu0
  %4152 = vdwg.mxu0
  %vm4153 = vcmask 64512
  %v4154 = vsel %vm4153, %v3835, 0.0
  %v4155 = vsel %vm4153, %v3840, 0.0
  %v4156 = vadd.f32 %v4154, %v4155
  %v4157 = vsel %vm4153, %v3845, 0.0
  %v4158 = vadd.f32 %v4156, %v4157
  %v4159 = vsel %vm4153, %v3850, 0.0
  %v4160 = vadd.f32 %v4158, %v4159
  %v4161 = vsel %vm4153, %v3855, 0.0
  %v4162 = vadd.f32 %v4160, %v4161
  %v4163 = vsel %vm4153, %v3860, 0.0
  %v4164 = vadd.f32 %v4162, %v4163
  %v4165 = vsel %vm4153, %v3865, 0.0
  %v4166 = vadd.f32 %v4164, %v4165
  %v4167 = vsel %vm4153, %v3870, 0.0
  %v4168 = vadd.f32 %v4166, %v4167
  %v4169 = vsel %vm4153, %v3875, 0.0
  %v4170 = vadd.f32 %v4168, %v4169
  %v4171 = vsel %vm4153, %v3880, 0.0
  %v4172 = vadd.f32 %v4170, %v4171
  %v4173 = vsel %vm4153, %v3885, 0.0
  %v4174 = vadd.f32 %v4172, %v4173
  %v4175 = vsel %vm4153, %v3890, 0.0
  %v4176 = vadd.f32 %v4174, %v4175
  %v4177 = vsel %vm4153, %v3895, 0.0
  %v4178 = vadd.f32 %v4176, %v4177
  %v4179 = vsel %vm4153, %v3900, 0.0
  %v4180 = vadd.f32 %v4178, %v4179
  %v4181 = vsel %vm4153, %v3905, 0.0
  %v4182 = vadd.f32 %v4180, %v4181
  %v4183 = vsel %vm4153, %v3910, 0.0
  %v4184 = vadd.f32 %v4182, %v4183
  %v4185 = vsel %vm4153, %v3915, 0.0
  %v4186 = vadd.f32 %v4184, %v4185
  %v4187 = vsel %vm4153, %v3920, 0.0
  %v4188 = vadd.f32 %v4186, %v4187
  %v4189 = vsel %vm4153, %v3925, 0.0
  %v4190 = vadd.f32 %v4188, %v4189
  %v4191 = vsel %vm4153, %v3930, 0.0
  %v4192 = vadd.f32 %v4190, %v4191
  %v4193 = vsel %vm4153, %v3935, 0.0
  %v4194 = vadd.f32 %v4192, %v4193
  %v4195 = vsel %vm4153, %v3940, 0.0
  %v4196 = vadd.f32 %v4194, %v4195
  %v4197 = vsel %vm4153, %v3945, 0.0
  %v4198 = vadd.f32 %v4196, %v4197
  %v4199 = vsel %vm4153, %v3950, 0.0
  %v4200 = vadd.f32 %v4198, %v4199
  %v4201 = vsel %vm4153, %v3955, 0.0
  %v4202 = vadd.f32 %v4200, %v4201
  %v4203 = vsel %vm4153, %v3960, 0.0
  %v4204 = vadd.f32 %v4202, %v4203
  %v4205 = vsel %vm4153, %v3965, 0.0
  %v4206 = vadd.f32 %v4204, %v4205
  %v4207 = vsel %vm4153, %v3970, 0.0
  %v4208 = vadd.f32 %v4206, %v4207
  %v4209 = vsel %vm4153, %v3975, 0.0
  %v4210 = vadd.f32 %v4208, %v4209
  %v4211 = vsel %vm4153, %v3980, 0.0
  %v4212 = vadd.f32 %v4210, %v4211
  %v4213 = vsel %vm4153, %v3985, 0.0
  %v4214 = vadd.f32 %v4212, %v4213
  %v4215 = vsel %vm4153, %v3990, 0.0
  %v4216 = vadd.f32 %v4214, %v4215
  %v4217 = vsel %vm4153, %v3995, 0.0
  %v4218 = vadd.f32 %v4216, %v4217
  %v4219 = vsel %vm4153, %v4000, 0.0
  %v4220 = vadd.f32 %v4218, %v4219
  %v4221 = vsel %vm4153, %v4005, 0.0
  %v4222 = vadd.f32 %v4220, %v4221
  %v4223 = vsel %vm4153, %v4010, 0.0
  %v4224 = vadd.f32 %v4222, %v4223
  %v4225 = vsel %vm4153, %v4015, 0.0
  %v4226 = vadd.f32 %v4224, %v4225
  %v4227 = vsel %vm4153, %v4020, 0.0
  %v4228 = vadd.f32 %v4226, %v4227
  %v4229 = vsel %vm4153, %v4025, 0.0
  %v4230 = vadd.f32 %v4228, %v4229
  %v4231 = vsel %vm4153, %v4030, 0.0
  %v4232 = vadd.f32 %v4230, %v4231
  %v4233 = vsel %vm4153, %v4035, 0.0
  %v4234 = vadd.f32 %v4232, %v4233
  %v4235 = vsel %vm4153, %v4040, 0.0
  %v4236 = vadd.f32 %v4234, %v4235
  %v4237 = vsel %vm4153, %v4045, 0.0
  %v4238 = vadd.f32 %v4236, %v4237
  %v4239 = vsel %vm4153, %v4050, 0.0
  %v4240 = vadd.f32 %v4238, %v4239
  %v4241 = vsel %vm4153, %v4055, 0.0
  %v4242 = vadd.f32 %v4240, %v4241
  %v4243 = vsel %vm4153, %v4060, 0.0
  %v4244 = vadd.f32 %v4242, %v4243
  %v4245 = vsel %vm4153, %v4065, 0.0
  %v4246 = vadd.f32 %v4244, %v4245
  %v4247 = vsel %vm4153, %v4070, 0.0
  %v4248 = vadd.f32 %v4246, %v4247
  %v4249 = vsel %vm4153, %v4075, 0.0
  %v4250 = vadd.f32 %v4248, %v4249
  %v4251 = vsel %vm4153, %v4080, 0.0
  %v4252 = vadd.f32 %v4250, %v4251
  %v4253 = vsel %vm4153, %v4085, 0.0
  %v4254 = vadd.f32 %v4252, %v4253
  %v4255 = vsel %vm4153, %v4090, 0.0
  %v4256 = vadd.f32 %v4254, %v4255
  %v4257 = vsel %vm4153, %v4095, 0.0
  %v4258 = vadd.f32 %v4256, %v4257
  %v4259 = vsel %vm4153, %v4100, 0.0
  %v4260 = vadd.f32 %v4258, %v4259
  %v4261 = vsel %vm4153, %v4105, 0.0
  %v4262 = vadd.f32 %v4260, %v4261
  %v4263 = vsel %vm4153, %v4110, 0.0
  %v4264 = vadd.f32 %v4262, %v4263
  %v4265 = vsel %vm4153, %v4115, 0.0
  %v4266 = vadd.f32 %v4264, %v4265
  %v4267 = vsel %vm4153, %v4120, 0.0
  %v4268 = vadd.f32 %v4266, %v4267
  %v4269 = vsel %vm4153, %v4125, 0.0
  %v4270 = vadd.f32 %v4268, %v4269
  %v4271 = vsel %vm4153, %v4130, 0.0
  %v4272 = vadd.f32 %v4270, %v4271
  %v4273 = vsel %vm4153, %v4135, 0.0
  %v4274 = vadd.f32 %v4272, %v4273
  %v4275 = vsel %vm4153, %v4140, 0.0
  %v4276 = vadd.f32 %v4274, %v4275
  %v4277 = vsel %vm4153, %v4145, 0.0
  %v4278 = vadd.f32 %v4276, %v4277
  %v4279 = vsel %vm4153, %v4150, 0.0
  %v4280 = vadd.f32 %v4278, %v4279
  %v4281 = vrot.slane %v4280, 4
  %v4282 = vadd.f32 %v4280, %v4281
  %v4283 = vrot.slane %v4282, 2
  %v4284 = vadd.f32 %v4282, %v4283
  %v4285 = vrot.slane %v4284, 1
  %v4286 = vadd.f32 %v4284, %v4285
  %v4287 = vrcp.pop 512.0
  %v4288 = vmul.f32 %v4286, %v4287
  %v4289 = vmul.f32 %v3835, %v3835
  %v4290 = vmul.f32 %v3840, %v3840
  %v4291 = vmul.f32 %v3845, %v3845
  %v4292 = vmul.f32 %v3850, %v3850
  %v4293 = vmul.f32 %v3855, %v3855
  %v4294 = vmul.f32 %v3860, %v3860
  %v4295 = vmul.f32 %v3865, %v3865
  %v4296 = vmul.f32 %v3870, %v3870
  %v4297 = vmul.f32 %v3875, %v3875
  %v4298 = vmul.f32 %v3880, %v3880
  %v4299 = vmul.f32 %v3885, %v3885
  %v4300 = vmul.f32 %v3890, %v3890
  %v4301 = vmul.f32 %v3895, %v3895
  %v4302 = vmul.f32 %v3900, %v3900
  %v4303 = vmul.f32 %v3905, %v3905
  %v4304 = vmul.f32 %v3910, %v3910
  %v4305 = vmul.f32 %v3915, %v3915
  %v4306 = vmul.f32 %v3920, %v3920
  %v4307 = vmul.f32 %v3925, %v3925
  %v4308 = vmul.f32 %v3930, %v3930
  %v4309 = vmul.f32 %v3935, %v3935
  %v4310 = vmul.f32 %v3940, %v3940
  %v4311 = vmul.f32 %v3945, %v3945
  %v4312 = vmul.f32 %v3950, %v3950
  %v4313 = vmul.f32 %v3955, %v3955
  %v4314 = vmul.f32 %v3960, %v3960
  %v4315 = vmul.f32 %v3965, %v3965
  %v4316 = vmul.f32 %v3970, %v3970
  %v4317 = vmul.f32 %v3975, %v3975
  %v4318 = vmul.f32 %v3980, %v3980
  %v4319 = vmul.f32 %v3985, %v3985
  %v4320 = vmul.f32 %v3990, %v3990
  %v4321 = vmul.f32 %v3995, %v3995
  %v4322 = vmul.f32 %v4000, %v4000
  %v4323 = vmul.f32 %v4005, %v4005
  %v4324 = vmul.f32 %v4010, %v4010
  %v4325 = vmul.f32 %v4015, %v4015
  %v4326 = vmul.f32 %v4020, %v4020
  %v4327 = vmul.f32 %v4025, %v4025
  %v4328 = vmul.f32 %v4030, %v4030
  %v4329 = vmul.f32 %v4035, %v4035
  %v4330 = vmul.f32 %v4040, %v4040
  %v4331 = vmul.f32 %v4045, %v4045
  %v4332 = vmul.f32 %v4050, %v4050
  %v4333 = vmul.f32 %v4055, %v4055
  %v4334 = vmul.f32 %v4060, %v4060
  %v4335 = vmul.f32 %v4065, %v4065
  %v4336 = vmul.f32 %v4070, %v4070
  %v4337 = vmul.f32 %v4075, %v4075
  %v4338 = vmul.f32 %v4080, %v4080
  %v4339 = vmul.f32 %v4085, %v4085
  %v4340 = vmul.f32 %v4090, %v4090
  %v4341 = vmul.f32 %v4095, %v4095
  %v4342 = vmul.f32 %v4100, %v4100
  %v4343 = vmul.f32 %v4105, %v4105
  %v4344 = vmul.f32 %v4110, %v4110
  %v4345 = vmul.f32 %v4115, %v4115
  %v4346 = vmul.f32 %v4120, %v4120
  %v4347 = vmul.f32 %v4125, %v4125
  %v4348 = vmul.f32 %v4130, %v4130
  %v4349 = vmul.f32 %v4135, %v4135
  %v4350 = vmul.f32 %v4140, %v4140
  %v4351 = vmul.f32 %v4145, %v4145
  %v4352 = vmul.f32 %v4150, %v4150
  %v4353 = vsel %vm4153, %v4289, 0.0
  %v4354 = vsel %vm4153, %v4290, 0.0
  %v4355 = vadd.f32 %v4353, %v4354
  %v4356 = vsel %vm4153, %v4291, 0.0
  %v4357 = vadd.f32 %v4355, %v4356
  %v4358 = vsel %vm4153, %v4292, 0.0
  %v4359 = vadd.f32 %v4357, %v4358
  %v4360 = vsel %vm4153, %v4293, 0.0
  %v4361 = vadd.f32 %v4359, %v4360
  %v4362 = vsel %vm4153, %v4294, 0.0
  %v4363 = vadd.f32 %v4361, %v4362
  %v4364 = vsel %vm4153, %v4295, 0.0
  %v4365 = vadd.f32 %v4363, %v4364
  %v4366 = vsel %vm4153, %v4296, 0.0
  %v4367 = vadd.f32 %v4365, %v4366
  %v4368 = vsel %vm4153, %v4297, 0.0
  %v4369 = vadd.f32 %v4367, %v4368
  %v4370 = vsel %vm4153, %v4298, 0.0
  %v4371 = vadd.f32 %v4369, %v4370
  %v4372 = vsel %vm4153, %v4299, 0.0
  %v4373 = vadd.f32 %v4371, %v4372
  %v4374 = vsel %vm4153, %v4300, 0.0
  %v4375 = vadd.f32 %v4373, %v4374
  %v4376 = vsel %vm4153, %v4301, 0.0
  %v4377 = vadd.f32 %v4375, %v4376
  %v4378 = vsel %vm4153, %v4302, 0.0
  %v4379 = vadd.f32 %v4377, %v4378
  %v4380 = vsel %vm4153, %v4303, 0.0
  %v4381 = vadd.f32 %v4379, %v4380
  %v4382 = vsel %vm4153, %v4304, 0.0
  %v4383 = vadd.f32 %v4381, %v4382
  %v4384 = vsel %vm4153, %v4305, 0.0
  %v4385 = vadd.f32 %v4383, %v4384
  %v4386 = vsel %vm4153, %v4306, 0.0
  %v4387 = vadd.f32 %v4385, %v4386
  %v4388 = vsel %vm4153, %v4307, 0.0
  %v4389 = vadd.f32 %v4387, %v4388
  %v4390 = vsel %vm4153, %v4308, 0.0
  %v4391 = vadd.f32 %v4389, %v4390
  %v4392 = vsel %vm4153, %v4309, 0.0
  %v4393 = vadd.f32 %v4391, %v4392
  %v4394 = vsel %vm4153, %v4310, 0.0
  %v4395 = vadd.f32 %v4393, %v4394
  %v4396 = vsel %vm4153, %v4311, 0.0
  %v4397 = vadd.f32 %v4395, %v4396
  %v4398 = vsel %vm4153, %v4312, 0.0
  %v4399 = vadd.f32 %v4397, %v4398
  %v4400 = vsel %vm4153, %v4313, 0.0
  %v4401 = vadd.f32 %v4399, %v4400
  %v4402 = vsel %vm4153, %v4314, 0.0
  %v4403 = vadd.f32 %v4401, %v4402
  %v4404 = vsel %vm4153, %v4315, 0.0
  %v4405 = vadd.f32 %v4403, %v4404
  %v4406 = vsel %vm4153, %v4316, 0.0
  %v4407 = vadd.f32 %v4405, %v4406
  %v4408 = vsel %vm4153, %v4317, 0.0
  %v4409 = vadd.f32 %v4407, %v4408
  %v4410 = vsel %vm4153, %v4318, 0.0
  %v4411 = vadd.f32 %v4409, %v4410
  %v4412 = vsel %vm4153, %v4319, 0.0
  %v4413 = vadd.f32 %v4411, %v4412
  %v4414 = vsel %vm4153, %v4320, 0.0
  %v4415 = vadd.f32 %v4413, %v4414
  %v4416 = vsel %vm4153, %v4321, 0.0
  %v4417 = vadd.f32 %v4415, %v4416
  %v4418 = vsel %vm4153, %v4322, 0.0
  %v4419 = vadd.f32 %v4417, %v4418
  %v4420 = vsel %vm4153, %v4323, 0.0
  %v4421 = vadd.f32 %v4419, %v4420
  %v4422 = vsel %vm4153, %v4324, 0.0
  %v4423 = vadd.f32 %v4421, %v4422
  %v4424 = vsel %vm4153, %v4325, 0.0
  %v4425 = vadd.f32 %v4423, %v4424
  %v4426 = vsel %vm4153, %v4326, 0.0
  %v4427 = vadd.f32 %v4425, %v4426
  %v4428 = vsel %vm4153, %v4327, 0.0
  %v4429 = vadd.f32 %v4427, %v4428
  %v4430 = vsel %vm4153, %v4328, 0.0
  %v4431 = vadd.f32 %v4429, %v4430
  %v4432 = vsel %vm4153, %v4329, 0.0
  %v4433 = vadd.f32 %v4431, %v4432
  %v4434 = vsel %vm4153, %v4330, 0.0
  %v4435 = vadd.f32 %v4433, %v4434
  %v4436 = vsel %vm4153, %v4331, 0.0
  %v4437 = vadd.f32 %v4435, %v4436
  %v4438 = vsel %vm4153, %v4332, 0.0
  %v4439 = vadd.f32 %v4437, %v4438
  %v4440 = vsel %vm4153, %v4333, 0.0
  %v4441 = vadd.f32 %v4439, %v4440
  %v4442 = vsel %vm4153, %v4334, 0.0
  %v4443 = vadd.f32 %v4441, %v4442
  %v4444 = vsel %vm4153, %v4335, 0.0
  %v4445 = vadd.f32 %v4443, %v4444
  %v4446 = vsel %vm4153, %v4336, 0.0
  %v4447 = vadd.f32 %v4445, %v4446
  %v4448 = vsel %vm4153, %v4337, 0.0
  %v4449 = vadd.f32 %v4447, %v4448
  %v4450 = vsel %vm4153, %v4338, 0.0
  %v4451 = vadd.f32 %v4449, %v4450
  %v4452 = vsel %vm4153, %v4339, 0.0
  %v4453 = vadd.f32 %v4451, %v4452
  %v4454 = vsel %vm4153, %v4340, 0.0
  %v4455 = vadd.f32 %v4453, %v4454
  %v4456 = vsel %vm4153, %v4341, 0.0
  %v4457 = vadd.f32 %v4455, %v4456
  %v4458 = vsel %vm4153, %v4342, 0.0
  %v4459 = vadd.f32 %v4457, %v4458
  %v4460 = vsel %vm4153, %v4343, 0.0
  %v4461 = vadd.f32 %v4459, %v4460
  %v4462 = vsel %vm4153, %v4344, 0.0
  %v4463 = vadd.f32 %v4461, %v4462
  %v4464 = vsel %vm4153, %v4345, 0.0
  %v4465 = vadd.f32 %v4463, %v4464
  %v4466 = vsel %vm4153, %v4346, 0.0
  %v4467 = vadd.f32 %v4465, %v4466
  %v4468 = vsel %vm4153, %v4347, 0.0
  %v4469 = vadd.f32 %v4467, %v4468
  %v4470 = vsel %vm4153, %v4348, 0.0
  %v4471 = vadd.f32 %v4469, %v4470
  %v4472 = vsel %vm4153, %v4349, 0.0
  %v4473 = vadd.f32 %v4471, %v4472
  %v4474 = vsel %vm4153, %v4350, 0.0
  %v4475 = vadd.f32 %v4473, %v4474
  %v4476 = vsel %vm4153, %v4351, 0.0
  %v4477 = vadd.f32 %v4475, %v4476
  %v4478 = vsel %vm4153, %v4352, 0.0
  %v4479 = vadd.f32 %v4477, %v4478
  %v4480 = vrot.slane %v4479, 4
  %v4481 = vadd.f32 %v4479, %v4480
  %v4482 = vrot.slane %v4481, 2
  %v4483 = vadd.f32 %v4481, %v4482
  %v4484 = vrot.slane %v4483, 1
  %v4485 = vadd.f32 %v4483, %v4484
  %v4486 = vmul.f32 %v4485, %v4287
  %v4487 = vmul.f32 %v4288, %v4288
  %v4488 = vsub.f32 %v4486, %v4487
  %v4489 = vld [vmem:[%s2] sm:$0xff]
  %v4490 = vld [vmem:[%s2 + $0x8] sm:$0xff]
  %v4491 = vld [vmem:[%s2 + $0x10] sm:$0xff]
  %v4492 = vld [vmem:[%s2 + $0x18] sm:$0xff]
  %v4493 = vld [vmem:[%s2 + $0x20] sm:$0xff]
  %v4494 = vld [vmem:[%s2 + $0x28] sm:$0xff]
  %v4495 = vld [vmem:[%s2 + $0x30] sm:$0xff]
  %v4496 = vld [vmem:[%s2 + $0x38] sm:$0xff]
  %v4497 = vld [vmem:[%s2 + $0x40] sm:$0xff]
  %v4498 = vld [vmem:[%s2 + $0x48] sm:$0xff]
  %v4499 = vld [vmem:[%s2 + $0x50] sm:$0xff]
  %v4500 = vld [vmem:[%s2 + $0x58] sm:$0xff]
  %v4501 = vld [vmem:[%s2 + $0x60] sm:$0xff]
  %v4502 = vld [vmem:[%s2 + $0x68] sm:$0xff]
  %v4503 = vld [vmem:[%s2 + $0x70] sm:$0xff]
  %v4504 = vld [vmem:[%s2 + $0x78] sm:$0xff]
  %4505 = vmatprep.subr.mxu0 0.0
  %4506 = vmatpush1.msra.mxu0 %v3910
  %4507 = vmatprep.subr.mxu0 0.0
  %4508 = vmatpush1.msra.mxu0 %v3905
  %4509 = vmatprep.subr.mxu0 0.0
  %4510 = vmatpush1.msra.mxu0 %v3900
  %4511 = vmatprep.subr.mxu0 0.0
  %4512 = vmatpush1.msra.mxu0 %v3895
  %4513 = vmatprep.subr.mxu0 0.0
  %4514 = vmatpush1.msra.mxu0 %v3890
  %4515 = vmatprep.subr.mxu0 0.0
  %4516 = vmatpush1.msra.mxu0 %v3885
  %4517 = vmatprep.subr.mxu0 0.0
  %4518 = vmatpush1.msra.mxu0 %v3880
  %4519 = vmatprep.subr.mxu0 0.0
  %4520 = vmatpush1.msra.mxu0 %v3875
  %4521 = vmatprep.subr.mxu0 0.0
  %4522 = vmatpush1.msra.mxu0 %v3870
  %4523 = vmatprep.subr.mxu0 0.0
  %4524 = vmatpush1.msra.mxu0 %v3865
  %4525 = vmatprep.subr.mxu0 0.0
  %4526 = vmatpush1.msra.mxu0 %v3860
  %4527 = vmatprep.subr.mxu0 0.0
  %4528 = vmatpush1.msra.mxu0 %v3855
  %4529 = vmatprep.subr.mxu0 0.0
  %4530 = vmatpush1.msra.mxu0 %v3850
  %4531 = vmatprep.subr.mxu0 0.0
  %4532 = vmatpush1.msra.mxu0 %v3845
  %4533 = vmatprep.subr.mxu0 0.0
  %4534 = vmatpush1.msra.mxu0 %v3840
  %4535 = vmatprep.subr.mxu0 0.0
  %4536 = vmatpush1.msra.mxu0 %v3835
  %4537 = vmatprep.subr.mxu0 0.0
  %4538 = vmatpush2.msra.mxu0 %v3990
  %4539 = vmatprep.subr.mxu0 0.0
  %4540 = vmatpush2.msra.mxu0 %v3985
  %4541 = vmatprep.subr.mxu0 0.0
  %4542 = vmatpush2.msra.mxu0 %v3980
  %4543 = vmatprep.subr.mxu0 0.0
  %4544 = vmatpush2.msra.mxu0 %v3975
  %4545 = vmatprep.subr.mxu0 0.0
  %4546 = vmatpush2.msra.mxu0 %v3970
  %4547 = vmatprep.subr.mxu0 0.0
  %4548 = vmatpush2.msra.mxu0 %v3965
  %4549 = vmatprep.subr.mxu0 0.0
  %4550 = vmatpush2.msra.mxu0 %v3960
  %4551 = vmatprep.subr.mxu0 0.0
  %4552 = vmatpush2.msra.mxu0 %v3955
  %4553 = vmatprep.subr.mxu0 0.0
  %4554 = vmatpush2.msra.mxu0 %v3950
  %4555 = vmatprep.subr.mxu0 0.0
  %4556 = vmatpush2.msra.mxu0 %v3945
  %4557 = vmatprep.subr.mxu0 0.0
  %4558 = vmatpush2.msra.mxu0 %v3940
  %4559 = vmatprep.subr.mxu0 0.0
  %4560 = vmatpush2.msra.mxu0 %v3935
  %4561 = vmatprep.subr.mxu0 0.0
  %4562 = vmatpush2.msra.mxu0 %v3930
  %4563 = vmatprep.subr.mxu0 0.0
  %4564 = vmatpush2.msra.mxu0 %v3925
  %4565 = vmatprep.subr.mxu0 0.0
  %4566 = vmatpush2.msra.mxu0 %v3920
  %4567 = vmatprep.subr.mxu0 0.0
  %4568 = vmatpush2.msra.mxu0 %v3915
  %4569 = vmatprep.mubr.f32.mxu0 %v4490
  %4570 = vmatmul.mubr.f32.gmra.mxu0 %v4489
  %v4571 = vpop.f32.mrf.mxu0
  %v4572 = vadd.f32 0.0, %v4571
  %v4573 = vpop.f32.mrf.mxu0
  %4574 = vmatprep.mubr.f32.mxu0 %v4494
  %4575 = vmatmul.mubr.f32.gmra.mxu0 %v4493
  %v4576 = vpop.f32.mrf.mxu0
  %v4577 = vadd.f32 0.0, %v4576
  %v4578 = vpop.f32.mrf.mxu0
  %4579 = vmatprep.mubr.f32.mxu0 %v4498
  %4580 = vmatmul.mubr.f32.gmra.mxu0 %v4497
  %v4581 = vpop.f32.mrf.mxu0
  %v4582 = vadd.f32 0.0, %v4581
  %v4583 = vpop.f32.mrf.mxu0
  %4584 = vmatprep.mubr.f32.mxu0 %v4502
  %4585 = vmatmul.mubr.f32.gmra.mxu0 %v4501
  %v4586 = vpop.f32.mrf.mxu0
  %v4587 = vadd.f32 0.0, %v4586
  %v4588 = vpop.f32.mrf.mxu0
  %4589 = vdwg.mxu0
  %4590 = vmatprep.subr.mxu0 0.0
  %4591 = vmatpush1.msra.mxu0 %v4070
  %4592 = vmatprep.subr.mxu0 0.0
  %4593 = vmatpush1.msra.mxu0 %v4065
  %4594 = vmatprep.subr.mxu0 0.0
  %4595 = vmatpush1.msra.mxu0 %v4060
  %4596 = vmatprep.subr.mxu0 0.0
  %4597 = vmatpush1.msra.mxu0 %v4055
  %4598 = vmatprep.subr.mxu0 0.0
  %4599 = vmatpush1.msra.mxu0 %v4050
  %4600 = vmatprep.subr.mxu0 0.0
  %4601 = vmatpush1.msra.mxu0 %v4045
  %4602 = vmatprep.subr.mxu0 0.0
  %4603 = vmatpush1.msra.mxu0 %v4040
  %4604 = vmatprep.subr.mxu0 0.0
  %4605 = vmatpush1.msra.mxu0 %v4035
  %4606 = vmatprep.subr.mxu0 0.0
  %4607 = vmatpush1.msra.mxu0 %v4030
  %4608 = vmatprep.subr.mxu0 0.0
  %4609 = vmatpush1.msra.mxu0 %v4025
  %4610 = vmatprep.subr.mxu0 0.0
  %4611 = vmatpush1.msra.mxu0 %v4020
  %4612 = vmatprep.subr.mxu0 0.0
  %4613 = vmatpush1.msra.mxu0 %v4015
  %4614 = vmatprep.subr.mxu0 0.0
  %4615 = vmatpush1.msra.mxu0 %v4010
  %4616 = vmatprep.subr.mxu0 0.0
  %4617 = vmatpush1.msra.mxu0 %v4005
  %4618 = vmatprep.subr.mxu0 0.0
  %4619 = vmatpush1.msra.mxu0 %v4000
  %4620 = vmatprep.subr.mxu0 0.0
  %4621 = vmatpush1.msra.mxu0 %v3995
  %4622 = vmatprep.subr.mxu0 0.0
  %4623 = vmatpush2.msra.mxu0 %v4150
  %4624 = vmatprep.subr.mxu0 0.0
  %4625 = vmatpush2.msra.mxu0 %v4145
  %4626 = vmatprep.subr.mxu0 0.0
  %4627 = vmatpush2.msra.mxu0 %v4140
  %4628 = vmatprep.subr.mxu0 0.0
  %4629 = vmatpush2.msra.mxu0 %v4135
  %4630 = vmatprep.subr.mxu0 0.0
  %4631 = vmatpush2.msra.mxu0 %v4130
  %4632 = vmatprep.subr.mxu0 0.0
  %4633 = vmatpush2.msra.mxu0 %v4125
  %4634 = vmatprep.subr.mxu0 0.0
  %4635 = vmatpush2.msra.mxu0 %v4120
  %4636 = vmatprep.subr.mxu0 0.0
  %4637 = vmatpush2.msra.mxu0 %v4115
  %4638 = vmatprep.subr.mxu0 0.0
  %4639 = vmatpush2.msra.mxu0 %v4110
  %4640 = vmatprep.subr.mxu0 0.0
  %4641 = vmatpush2.msra.mxu0 %v4105
  %4642 = vmatprep.subr.mxu0 0.0
  %4643 = vmatpush2.msra.mxu0 %v4100
  %4644 = vmatprep.subr.mxu0 0.0
  %4645 = vmatpush2.msra.mxu0 %v4095
  %4646 = vmatprep.subr.mxu0 0.0
  %4647 = vmatpush2.msra.mxu0 %v4090
  %4648 = vmatprep.subr.mxu0 0.0
  %4649 = vmatpush2.msra.mxu0 %v4085
  %4650 = vmatprep.subr.mxu0 0.0
  %4651 = vmatpush2.msra.mxu0 %v4080
  %4652 = vmatprep.subr.mxu0 0.0
  %4653 = vmatpush2.msra.mxu0 %v4075
  %4654 = vmatprep.mubr.f32.mxu0 %v4492
  %4655 = vmatmul.mubr.f32.gmra.mxu0 %v4491
  %v4656 = vpop.f32.mrf.mxu0
  %v4657 = vadd.f32 %v4572, %v4656
  %v4658 = vpop.f32.mrf.mxu0
  %4659 = vmatprep.mubr.f32.mxu0 %v4496
  %4660 = vmatmul.mubr.f32.gmra.mxu0 %v4495
  %v4661 = vpop.f32.mrf.mxu0
  %v4662 = vadd.f32 %v4577, %v4661
  %v4663 = vpop.f32.mrf.mxu0
  %4664 = vmatprep.mubr.f32.mxu0 %v4500
  %4665 = vmatmul.mubr.f32.gmra.mxu0 %v4499
  %v4666 = vpop.f32.mrf.mxu0
  %v4667 = vadd.f32 %v4582, %v4666
  %v4668 = vpop.f32.mrf.mxu0
  %4669 = vmatprep.mubr.f32.mxu0 %v4504
  %4670 = vmatmul.mubr.f32.gmra.mxu0 %v4503
  %v4671 = vpop.f32.mrf.mxu0
  %v4672 = vadd.f32 %v4587, %v4671
  %v4673 = vpop.f32.mrf.mxu0
  %4674 = vdwg.mxu0
  %v4675 = vsub.f32 %v4657, %v4288
  %v4676 = vsub.f32 %v4662, %v4288
  %v4677 = vsub.f32 %v4667, %v4288
  %v4678 = vsub.f32 %v4672, %v4288
  %v4679 = vadd.f32 %v4488, 1e-05
  %v4680 = vrsqrt.pop %v4679
  %v4681 = vmul.f32 %v4675, %v4680
  %v4682 = vmul.f32 %v4676, %v4680
  %v4683 = vmul.f32 %v4677, %v4680
  %v4684 = vmul.f32 %v4678, %v4680
  %v4685 = vld [vmem:[%s7] sm:$0x1]
  %v4687 = vlaneseq
  %v4688 = vshrl.u32 %v4687, 7
  %v4689 = vsub.s32 0, %v4688
  %v4690 = vrot.slane %v4685, %v4689
  %v4692 = vmul.f32 %v4681, %v4690
  %v4693 = vmul.f32 %v4682, %v4690
  %v4694 = vmul.f32 %v4683, %v4690
  %v4695 = vmul.f32 %v4684, %v4690
  %v4696 = vld [vmem:[%s8] sm:$0x1]
  %v4698 = vlaneseq
  %v4699 = vshrl.u32 %v4698, 7
  %v4700 = vsub.s32 0, %v4699
  %v4701 = vrot.slane %v4696, %v4700
  %v4703 = vadd.f32 %v4692, %v4701
  %v4704 = vadd.f32 %v4693, %v4701
  %v4705 = vadd.f32 %v4694, %v4701
  %v4706 = vadd.f32 %v4695, %v4701
  %vm4707 = vcmp.gt.f32.partialorder %v4703, 0.0
  %vm4708 = vcmp.gt.f32.partialorder %v4704, 0.0
  %vm4709 = vcmp.gt.f32.partialorder %v4705, 0.0
  %vm4710 = vcmp.gt.f32.partialorder %v4706, 0.0
  %v4711 = vmul.f32 %v4703, 0.2
  %v4712 = vmul.f32 %v4704, 0.2
  %v4713 = vmul.f32 %v4705, 0.2
  %v4714 = vmul.f32 %v4706, 0.2
  %v4715 = vsel %vm4707, %v4703, %v4711
  %v4716 = vsel %vm4708, %v4704, %v4712
  %v4717 = vsel %vm4709, %v4705, %v4713
  %v4718 = vsel %vm4710, %v4706, %v4714
  %v4719 = vld [vmem:[%s9] sm:$0xff]
  %v4720 = vld [vmem:[%s1] sm:$0xff]
  %v4721 = vld [vmem:[%s1 + $0x8] sm:$0xff]
  %v4722 = vld [vmem:[%s1 + $0x10] sm:$0xff]
  %v4723 = vld [vmem:[%s1 + $0x18] sm:$0xff]
  %v4724 = vld [vmem:[%s10] sm:$0xff]
  %v4726 = vsel %vm4153, %v4720, 0
  %v4729 = vsel %vm4153, %v4721, 0
  %v4732 = vsel %vm4153, %v4722, 0
  %v4735 = vsel %vm4153, %v4723, 0
  %4737 = vmatprep.subr.mxu0 0.0
  %4738 = vmatpush1.msra.mxu0 0.0
  %4739 = vmatprep.subr.mxu0 0.0
  %4740 = vmatpush1.msra.mxu0 0.0
  %4741 = vmatprep.subr.mxu0 0.0
  %4742 = vmatpush1.msra.mxu0 0.0
  %4743 = vmatprep.subr.mxu0 0.0
  %4744 = vmatpush1.msra.mxu0 0.0
  %4745 = vmatprep.subr.mxu0 0.0
  %4746 = vmatpush1.msra.mxu0 0.0
  %4747 = vmatprep.subr.mxu0 0.0
  %4748 = vmatpush1.msra.mxu0 0.0
  %4749 = vmatprep.subr.mxu0 0.0
  %4750 = vmatpush1.msra.mxu0 0.0
  %4751 = vmatprep.subr.mxu0 0.0
  %4752 = vmatpush1.msra.mxu0 0.0
  %4753 = vmatprep.subr.mxu0 0.0
  %4754 = vmatpush1.msra.mxu0 0.0
  %4755 = vmatprep.subr.mxu0 0.0
  %4756 = vmatpush1.msra.mxu0 0.0
  %4757 = vmatprep.subr.mxu0 0.0
  %4758 = vmatpush1.msra.mxu0 0.0
  %4759 = vmatprep.subr.mxu0 0.0
  %4760 = vmatpush1.msra.mxu0 0.0
  %4761 = vmatprep.subr.mxu0 0.0
  %4762 = vmatpush1.msra.mxu0 0.0
  %4763 = vmatprep.subr.mxu0 0.0
  %4764 = vmatpush1.msra.mxu0 0.0
  %4765 = vmatprep.subr.mxu0 0.0
  %4766 = vmatpush1.msra.mxu0 0.0
  %4767 = vmatprep.subr.mxu0 0.0
  %4768 = vmatpush1.msra.mxu0 %v4724
  %4769 = vmatprep.subr.mxu0 0.0
  %4770 = vmatpush2.msra.mxu0 0.0
  %4771 = vmatprep.subr.mxu0 0.0
  %4772 = vmatpush2.msra.mxu0 0.0
  %4773 = vmatprep.subr.mxu0 0.0
  %4774 = vmatpush2.msra.mxu0 0.0
  %4775 = vmatprep.subr.mxu0 0.0
  %4776 = vmatpush2.msra.mxu0 0.0
  %4777 = vmatprep.subr.mxu0 0.0
  %4778 = vmatpush2.msra.mxu0 0.0
  %4779 = vmatprep.subr.mxu0 0.0
  %4780 = vmatpush2.msra.mxu0 0.0
  %4781 = vmatprep.subr.mxu0 0.0
  %4782 = vmatpush2.msra.mxu0 0.0
  %4783 = vmatprep.subr.mxu0 0.0
  %4784 = vmatpush2.msra.mxu0 0.0
  %4785 = vmatprep.subr.mxu0 0.0
  %4786 = vmatpush2.msra.mxu0 0.0
  %4787 = vmatprep.subr.mxu0 0.0
  %4788 = vmatpush2.msra.mxu0 0.0
  %4789 = vmatprep.subr.mxu0 0.0
  %4790 = vmatpush2.msra.mxu0 0.0
  %4791 = vmatprep.subr.mxu0 0.0
  %4792 = vmatpush2.msra.mxu0 0.0
  %4793 = vmatprep.subr.mxu0 0.0
  %4794 = vmatpush2.msra.mxu0 0.0
  %4795 = vmatprep.subr.mxu0 0.0
  %4796 = vmatpush2.msra.mxu0 0.0
  %4797 = vmatprep.subr.mxu0 0.0
  %4798 = vmatpush2.msra.mxu0 0.0
  %4799 = vmatprep.subr.mxu0 0.0
  %4800 = vmatpush2.msra.mxu0 0.0
  %4801 = vmatprep.mubr.f32.mxu0 0.0
  %4802 = vmatmul.mubr.f32.gmra.mxu0 %v4726
  %v4803 = vpop.f32.mrf.mxu0
  %v4804 = vadd.f32 0.0, %v4803
  %v4805 = vpop.f32.mrf.mxu0
  %4806 = vmatprep.mubr.f32.mxu0 0.0
  %4807 = vmatmul.mubr.f32.gmra.mxu0 %v4729
  %v4808 = vpop.f32.mrf.mxu0
  %v4809 = vadd.f32 0.0, %v4808
  %v4810 = vpop.f32.mrf.mxu0
  %4811 = vmatprep.mubr.f32.mxu0 0.0
  %4812 = vmatmul.mubr.f32.gmra.mxu0 %v4732
  %v4813 = vpop.f32.mrf.mxu0
  %v4814 = vadd.f32 0.0, %v4813
  %v4815 = vpop.f32.mrf.mxu0
  %4816 = vmatprep.mubr.f32.mxu0 0.0
  %4817 = vmatmul.mubr.f32.gmra.mxu0 %v4735
  %v4818 = vpop.f32.mrf.mxu0
  %v4819 = vadd.f32 0.0, %v4818
  %v4820 = vpop.f32.mrf.mxu0
  %4821 = vdwg.mxu0
  %v4823 = vsel %vm4153, %v4715, 0
  %v4826 = vsel %vm4153, %v4716, 0
  %v4829 = vsel %vm4153, %v4717, 0
  %v4832 = vsel %vm4153, %v4718, 0
  %4834 = vmatprep.subr.mxu0 0.0
  %4835 = vmatpush1.msra.mxu0 0.0
  %4836 = vmatprep.subr.mxu0 0.0
  %4837 = vmatpush1.msra.mxu0 0.0
  %4838 = vmatprep.subr.mxu0 0.0
  %4839 = vmatpush1.msra.mxu0 0.0
  %4840 = vmatprep.subr.mxu0 0.0
  %4841 = vmatpush1.msra.mxu0 0.0
  %4842 = vmatprep.subr.mxu0 0.0
  %4843 = vmatpush1.msra.mxu0 0.0
  %4844 = vmatprep.subr.mxu0 0.0
  %4845 = vmatpush1.msra.mxu0 0.0
  %4846 = vmatprep.subr.mxu0 0.0
  %4847 = vmatpush1.msra.mxu0 0.0
  %4848 = vmatprep.subr.mxu0 0.0
  %4849 = vmatpush1.msra.mxu0 0.0
  %4850 = vmatprep.subr.mxu0 0.0
  %4851 = vmatpush1.msra.mxu0 0.0
  %4852 = vmatprep.subr.mxu0 0.0
  %4853 = vmatpush1.msra.mxu0 0.0
  %4854 = vmatprep.subr.mxu0 0.0
  %4855 = vmatpush1.msra.mxu0 0.0
  %4856 = vmatprep.subr.mxu0 0.0
  %4857 = vmatpush1.msra.mxu0 0.0
  %4858 = vmatprep.subr.mxu0 0.0
  %4859 = vmatpush1.msra.mxu0 0.0
  %4860 = vmatprep.subr.mxu0 0.0
  %4861 = vmatpush1.msra.mxu0 0.0
  %4862 = vmatprep.subr.mxu0 0.0
  %4863 = vmatpush1.msra.mxu0 0.0
  %4864 = vmatprep.subr.mxu0 0.0
  %4865 = vmatpush1.msra.mxu0 %v4719
  %4866 = vmatprep.subr.mxu0 0.0
  %4867 = vmatpush2.msra.mxu0 0.0
  %4868 = vmatprep.subr.mxu0 0.0
  %4869 = vmatpush2.msra.mxu0 0.0
  %4870 = vmatprep.subr.mxu0 0.0
  %4871 = vmatpush2.msra.mxu0 0.0
  %4872 = vmatprep.subr.mxu0 0.0
  %4873 = vmatpush2.msra.mxu0 0.0
  %4874 = vmatprep.subr.mxu0 0.0
  %4875 = vmatpush2.msra.mxu0 0.0
  %4876 = vmatprep.subr.mxu0 0.0
  %4877 = vmatpush2.msra.mxu0 0.0
  %4878 = vmatprep.subr.mxu0 0.0
  %4879 = vmatpush2.msra.mxu0 0.0
  %4880 = vmatprep.subr.mxu0 0.0
  %4881 = vmatpush2.msra.mxu0 0.0
  %4882 = vmatprep.subr.mxu0 0.0
  %4883 = vmatpush2.msra.mxu0 0.0
  %4884 = vmatprep.subr.mxu0 0.0
  %4885 = vmatpush2.msra.mxu0 0.0
  %4886 = vmatprep.subr.mxu0 0.0
  %4887 = vmatpush2.msra.mxu0 0.0
  %4888 = vmatprep.subr.mxu0 0.0
  %4889 = vmatpush2.msra.mxu0 0.0
  %4890 = vmatprep.subr.mxu0 0.0
  %4891 = vmatpush2.msra.mxu0 0.0
  %4892 = vmatprep.subr.mxu0 0.0
  %4893 = vmatpush2.msra.mxu0 0.0
  %4894 = vmatprep.subr.mxu0 0.0
  %4895 = vmatpush2.msra.mxu0 0.0
  %4896 = vmatprep.subr.mxu0 0.0
  %4897 = vmatpush2.msra.mxu0 0.0
  %4898 = vmatprep.mubr.f32.mxu0 0.0
  %4899 = vmatmul.mubr.f32.gmra.mxu0 %v4823
  %v4900 = vpop.f32.mrf.mxu0
  %v4901 = vadd.f32 %v4804, %v4900
  %v4902 = vpop.f32.mrf.mxu0
  %4903 = vmatprep.mubr.f32.mxu0 0.0
  %4904 = vmatmul.mubr.f32.gmra.mxu0 %v4826
  %v4905 = vpop.f32.mrf.mxu0
  %v4906 = vadd.f32 %v4809, %v4905
  %v4907 = vpop.f32.mrf.mxu0
  %4908 = vmatprep.mubr.f32.mxu0 0.0
  %4909 = vmatmul.mubr.f32.gmra.mxu0 %v4829
  %v4910 = vpop.f32.mrf.mxu0
  %v4911 = vadd.f32 %v4814, %v4910
  %v4912 = vpop.f32.mrf.mxu0
  %4913 = vmatprep.mubr.f32.mxu0 0.0
  %4914 = vmatmul.mubr.f32.gmra.mxu0 %v4832
  %v4915 = vpop.f32.mrf.mxu0
  %v4916 = vadd.f32 %v4819, %v4915
  %v4917 = vpop.f32.mrf.mxu0
  %4918 = vdwg.mxu0
  %4923 = vrot.lane.b32.xlu0 %v4901, 120
  %v4924 = vpop.permute.xlu0 %4923
  %4925 = vrot.lane.b32.xlu0 %v4906, 120
  %v4926 = vpop.permute.xlu0 %4925
  %4927 = vrot.lane.b32.xlu0 %v4911, 120
  %v4928 = vpop.permute.xlu0 %4927
  %4929 = vrot.lane.b32.xlu0 %v4916, 120
  %v4930 = vpop.permute.xlu0 %4929
  %4935 = vrot.lane.b32.xlu0 %v4901, 112
  %v4936 = vpop.permute.xlu0 %4935
  %4937 = vrot.lane.b32.xlu0 %v4906, 112
  %v4938 = vpop.permute.xlu0 %4937
  %4939 = vrot.lane.b32.xlu0 %v4911, 112
  %v4940 = vpop.permute.xlu0 %4939
  %4941 = vrot.lane.b32.xlu0 %v4916, 112
  %v4942 = vpop.permute.xlu0 %4941
  %4947 = vrot.lane.b32.xlu0 %v4901, 104
  %v4948 = vpop.permute.xlu0 %4947
  %4949 = vrot.lane.b32.xlu0 %v4906, 104
  %v4950 = vpop.permute.xlu0 %4949
  %4951 = vrot.lane.b32.xlu0 %v4911, 104
  %v4952 = vpop.permute.xlu0 %4951
  %4953 = vrot.lane.b32.xlu0 %v4916, 104
  %v4954 = vpop.permute.xlu0 %4953
  %4959 = vrot.lane.b32.xlu0 %v4901, 96
  %v4960 = vpop.permute.xlu0 %4959
  %4961 = vrot.lane.b32.xlu0 %v4906, 96
  %v4962 = vpop.permute.xlu0 %4961
  %4963 = vrot.lane.b32.xlu0 %v4911, 96
  %v4964 = vpop.permute.xlu0 %4963
  %4965 = vrot.lane.b32.xlu0 %v4916, 96
  %v4966 = vpop.permute.xlu0 %4965
  %4971 = vrot.lane.b32.xlu0 %v4901, 88
  %v4972 = vpop.permute.xlu0 %4971
  %4973 = vrot.lane.b32.xlu0 %v4906, 88
  %v4974 = vpop.permute.xlu0 %4973
  %4975 = vrot.lane.b32.xlu0 %v4911, 88
  %v4976 = vpop.permute.xlu0 %4975
  %4977 = vrot.lane.b32.xlu0 %v4916, 88
  %v4978 = vpop.permute.xlu0 %4977
  %4983 = vrot.lane.b32.xlu0 %v4901, 80
  %v4984 = vpop.permute.xlu0 %4983
  %4985 = vrot.lane.b32.xlu0 %v4906, 80
  %v4986 = vpop.permute.xlu0 %4985
  %4987 = vrot.lane.b32.xlu0 %v4911, 80
  %v4988 = vpop.permute.xlu0 %4987
  %4989 = vrot.lane.b32.xlu0 %v4916, 80
  %v4990 = vpop.permute.xlu0 %4989
  %4995 = vrot.lane.b32.xlu0 %v4901, 72
  %v4996 = vpop.permute.xlu0 %4995
  %4997 = vrot.lane.b32.xlu0 %v4906, 72
  %v4998 = vpop.permute.xlu0 %4997
  %4999 = vrot.lane.b32.xlu0 %v4911, 72
  %v5000 = vpop.permute.xlu0 %4999
  %5001 = vrot.lane.b32.xlu0 %v4916, 72
  %v5002 = vpop.permute.xlu0 %5001
  %5007 = vrot.lane.b32.xlu0 %v4901, 64
  %v5008 = vpop.permute.xlu0 %5007
  %5009 = vrot.lane.b32.xlu0 %v4906, 64
  %v5010 = vpop.permute.xlu0 %5009
  %5011 = vrot.lane.b32.xlu0 %v4911, 64
  %v5012 = vpop.permute.xlu0 %5011
  %5013 = vrot.lane.b32.xlu0 %v4916, 64
  %v5014 = vpop.permute.xlu0 %5013
  %v5019 = vld [vmem:[%s3] sm:$0xff]
  %v5020 = vld [vmem:[%s3 + $0x8] sm:$0xff]
  %v5021 = vld [vmem:[%s3 + $0x10] sm:$0xff]
  %v5022 = vld [vmem:[%s3 + $0x18] sm:$0xff]
  %v5023 = vld [vmem:[%s3 + $0x20] sm:$0xff]
  %v5024 = vld [vmem:[%s3 + $0x28] sm:$0xff]
  %v5025 = vld [vmem:[%s3 + $0x30] sm:$0xff]
  %v5026 = vld [vmem:[%s3 + $0x38] sm:$0xff]
  %v5027 = vld [vmem:[%s3 + $0x40] sm:$0xff]
  %v5028 = vld [vmem:[%s3 + $0x48] sm:$0xff]
  %v5029 = vld [vmem:[%s3 + $0x50] sm:$0xff]
  %v5030 = vld [vmem:[%s3 + $0x58] sm:$0xff]
  %v5031 = vld [vmem:[%s11] sm:$0x1]
  %v5033 = vlaneseq
  %v5034 = vshrl.u32 %v5033, 7
  %v5035 = vsub.s32 0, %v5034
  %v5036 = vrot.slane %v5031, %v5035
  %vm5038 = vcmask 261120
  %v5040 = vsel %vm5038, %v5021, 0
  %v5043 = vsel %vm5038, %v5024, 0
  %v5046 = vsel %vm5038, %v5027, 0
  %v5049 = vsel %vm5038, %v5030, 0
  %5051 = vmatprep.subr.mxu0 0.0
  %5052 = vmatpush1.msra.mxu0 %v4954
  %5053 = vmatprep.subr.mxu0 0.0
  %5054 = vmatpush1.msra.mxu0 %v4952
  %5055 = vmatprep.subr.mxu0 0.0
  %5056 = vmatpush1.msra.mxu0 %v4950
  %5057 = vmatprep.subr.mxu0 0.0
  %5058 = vmatpush1.msra.mxu0 %v4948
  %5059 = vmatprep.subr.mxu0 0.0
  %5060 = vmatpush1.msra.mxu0 %v4942
  %5061 = vmatprep.subr.mxu0 0.0
  %5062 = vmatpush1.msra.mxu0 %v4940
  %5063 = vmatprep.subr.mxu0 0.0
  %5064 = vmatpush1.msra.mxu0 %v4938
  %5065 = vmatprep.subr.mxu0 0.0
  %5066 = vmatpush1.msra.mxu0 %v4936
  %5067 = vmatprep.subr.mxu0 0.0
  %5068 = vmatpush1.msra.mxu0 %v4930
  %5069 = vmatprep.subr.mxu0 0.0
  %5070 = vmatpush1.msra.mxu0 %v4928
  %5071 = vmatprep.subr.mxu0 0.0
  %5072 = vmatpush1.msra.mxu0 %v4926
  %5073 = vmatprep.subr.mxu0 0.0
  %5074 = vmatpush1.msra.mxu0 %v4924
  %5075 = vmatprep.subr.mxu0 0.0
  %5076 = vmatpush1.msra.mxu0 %v4916
  %5077 = vmatprep.subr.mxu0 0.0
  %5078 = vmatpush1.msra.mxu0 %v4911
  %5079 = vmatprep.subr.mxu0 0.0
  %5080 = vmatpush1.msra.mxu0 %v4906
  %5081 = vmatprep.subr.mxu0 0.0
  %5082 = vmatpush1.msra.mxu0 %v4901
  %5083 = vmatprep.subr.mxu0 0.0
  %5084 = vmatpush2.msra.mxu0 %v5002
  %5085 = vmatprep.subr.mxu0 0.0
  %5086 = vmatpush2.msra.mxu0 %v5000
  %5087 = vmatprep.subr.mxu0 0.0
  %5088 = vmatpush2.msra.mxu0 %v4998
  %5089 = vmatprep.subr.mxu0 0.0
  %5090 = vmatpush2.msra.mxu0 %v4996
  %5091 = vmatprep.subr.mxu0 0.0
  %5092 = vmatpush2.msra.mxu0 %v4990
  %5093 = vmatprep.subr.mxu0 0.0
  %5094 = vmatpush2.msra.mxu0 %v4988
  %5095 = vmatprep.subr.mxu0 0.0
  %5096 = vmatpush2.msra.mxu0 %v4986
  %5097 = vmatprep.subr.mxu0 0.0
  %5098 = vmatpush2.msra.mxu0 %v4984
  %5099 = vmatprep.subr.mxu0 0.0
  %5100 = vmatpush2.msra.mxu0 %v4978
  %5101 = vmatprep.subr.mxu0 0.0
  %5102 = vmatpush2.msra.mxu0 %v4976
  %5103 = vmatprep.subr.mxu0 0.0
  %5104 = vmatpush2.msra.mxu0 %v4974
  %5105 = vmatprep.subr.mxu0 0.0
  %5106 = vmatpush2.msra.mxu0 %v4972
  %5107 = vmatprep.subr.mxu0 0.0
  %5108 = vmatpush2.msra.mxu0 %v4966
  %5109 = vmatprep.subr.mxu0 0.0
  %5110 = vmatpush2.msra.mxu0 %v4964
  %5111 = vmatprep.subr.mxu0 0.0
  %5112 = vmatpush2.msra.mxu0 %v4962
  %5113 = vmatprep.subr.mxu0 0.0
  %5114 = vmatpush2.msra.mxu0 %v4960
  %5115 = vmatprep.mubr.f32.mxu0 %v5020
  %5116 = vmatmul.mubr.f32.gmra.mxu0 %v5019
  %v5117 = vpop.f32.mrf.mxu0
  %v5118 = vadd.f32 %v5036, %v5117
  %v5119 = vpop.f32.mrf.mxu0
  %5120 = vmatprep.mubr.f32.mxu0 %v5023
  %5121 = vmatmul.mubr.f32.gmra.mxu0 %v5022
  %v5122 = vpop.f32.mrf.mxu0
  %v5123 = vadd.f32 %v5036, %v5122
  %v5124 = vpop.f32.mrf.mxu0
  %5125 = vmatprep.mubr.f32.mxu0 %v5026
  %5126 = vmatmul.mubr.f32.gmra.mxu0 %v5025
  %v5127 = vpop.f32.mrf.mxu0
  %v5128 = vadd.f32 %v5036, %v5127
  %v5129 = vpop.f32.mrf.mxu0
  %5130 = vmatprep.mubr.f32.mxu0 %v5029
  %5131 = vmatmul.mubr.f32.gmra.mxu0 %v5028
  %v5132 = vpop.f32.mrf.mxu0
  %v5133 = vadd.f32 %v5036, %v5132
  %v5134 = vpop.f32.mrf.mxu0
  %5135 = vdwg.mxu0
  %5136 = vmatprep.subr.mxu0 0.0
  %5137 = vmatpush1.msra.mxu0 0.0
  %5138 = vmatprep.subr.mxu0 0.0
  %5139 = vmatpush1.msra.mxu0 0.0
  %5140 = vmatprep.subr.mxu0 0.0
  %5141 = vmatpush1.msra.mxu0 0.0
  %5142 = vmatprep.subr.mxu0 0.0
  %5143 = vmatpush1.msra.mxu0 0.0
  %5144 = vmatprep.subr.mxu0 0.0
  %5145 = vmatpush1.msra.mxu0 0.0
  %5146 = vmatprep.subr.mxu0 0.0
  %5147 = vmatpush1.msra.mxu0 0.0
  %5148 = vmatprep.subr.mxu0 0.0
  %5149 = vmatpush1.msra.mxu0 0.0
  %5150 = vmatprep.subr.mxu0 0.0
  %5151 = vmatpush1.msra.mxu0 0.0
  %5152 = vmatprep.subr.mxu0 0.0
  %5153 = vmatpush1.msra.mxu0 0.0
  %5154 = vmatprep.subr.mxu0 0.0
  %5155 = vmatpush1.msra.mxu0 0.0
  %5156 = vmatprep.subr.mxu0 0.0
  %5157 = vmatpush1.msra.mxu0 0.0
  %5158 = vmatprep.subr.mxu0 0.0
  %5159 = vmatpush1.msra.mxu0 0.0
  %5160 = vmatprep.subr.mxu0 0.0
  %5161 = vmatpush1.msra.mxu0 %v5014
  %5162 = vmatprep.subr.mxu0 0.0
  %5163 = vmatpush1.msra.mxu0 %v5012
  %5164 = vmatprep.subr.mxu0 0.0
  %5165 = vmatpush1.msra.mxu0 %v5010
  %5166 = vmatprep.subr.mxu0 0.0
  %5167 = vmatpush1.msra.mxu0 %v5008
  %5168 = vmatprep.subr.mxu0 0.0
  %5169 = vmatpush2.msra.mxu0 0.0
  %5170 = vmatprep.subr.mxu0 0.0
  %5171 = vmatpush2.msra.mxu0 0.0
  %5172 = vmatprep.subr.mxu0 0.0
  %5173 = vmatpush2.msra.mxu0 0.0
  %5174 = vmatprep.subr.mxu0 0.0
  %5175 = vmatpush2.msra.mxu0 0.0
  %5176 = vmatprep.subr.mxu0 0.0
  %5177 = vmatpush2.msra.mxu0 0.0
  %5178 = vmatprep.subr.mxu0 0.0
  %5179 = vmatpush2.msra.mxu0 0.0
  %5180 = vmatprep.subr.mxu0 0.0
  %5181 = vmatpush2.msra.mxu0 0.0
  %5182 = vmatprep.subr.mxu0 0.0
  %5183 = vmatpush2.msra.mxu0 0.0
  %5184 = vmatprep.subr.mxu0 0.0
  %5185 = vmatpush2.msra.mxu0 0.0
  %5186 = vmatprep.subr.mxu0 0.0
  %5187 = vmatpush2.msra.mxu0 0.0
  %5188 = vmatprep.subr.mxu0 0.0
  %5189 = vmatpush2.msra.mxu0 0.0
  %5190 = vmatprep.subr.mxu0 0.0
  %5191 = vmatpush2.msra.mxu0 0.0
  %5192 = vmatprep.subr.mxu0 0.0
  %5193 = vmatpush2.msra.mxu0 0.0
  %5194 = vmatprep.subr.mxu0 0.0
  %5195 = vmatpush2.msra.mxu0 0.0
  %5196 = vmatprep.subr.mxu0 0.0
  %5197 = vmatpush2.msra.mxu0 0.0
  %5198 = vmatprep.subr.mxu0 0.0
  %5199 = vmatpush2.msra.mxu0 0.0
  %5200 = vmatprep.mubr.f32.mxu0 0.0
  %5201 = vmatmul.mubr.f32.gmra.mxu0 %v5040
  %v5202 = vpop.f32.mrf.mxu0
  %v5203 = vadd.f32 %v5118, %v5202
  %v5204 = vpop.f32.mrf.mxu0
  %5205 = vmatprep.mubr.f32.mxu0 0.0
  %5206 = vmatmul.mubr.f32.gmra.mxu0 %v5043
  %v5207 = vpop.f32.mrf.mxu0
  %v5208 = vadd.f32 %v5123, %v5207
  %v5209 = vpop.f32.mrf.mxu0
  %5210 = vmatprep.mubr.f32.mxu0 0.0
  %5211 = vmatmul.mubr.f32.gmra.mxu0 %v5046
  %v5212 = vpop.f32.mrf.mxu0
  %v5213 = vadd.f32 %v5128, %v5212
  %v5214 = vpop.f32.mrf.mxu0
  %5215 = vmatprep.mubr.f32.mxu0 0.0
  %5216 = vmatmul.mubr.f32.gmra.mxu0 %v5049
  %v5217 = vpop.f32.mrf.mxu0
  %v5218 = vadd.f32 %v5133, %v5217
  %v5219 = vpop.f32.mrf.mxu0
  %5220 = vdwg.mxu0
  %v5221 = vsel %vm4153, %v5203, 0.0
  %v5222 = vsel %vm4153, %v5208, 0.0
  %v5223 = vadd.f32 %v5221, %v5222
  %v5224 = vsel %vm4153, %v5213, 0.0
  %v5225 = vadd.f32 %v5223, %v5224
  %v5226 = vsel %vm4153, %v5218, 0.0
  %v5227 = vadd.f32 %v5225, %v5226
  %v5228 = vrot.slane %v5227, 4
  %v5229 = vadd.f32 %v5227, %v5228
  %v5230 = vrot.slane %v5229, 2
  %v5231 = vadd.f32 %v5229, %v5230
  %v5232 = vrot.slane %v5231, 1
  %v5233 = vadd.f32 %v5231, %v5232
  %v5234 = vrcp.pop 32.0
  %v5235 = vmul.f32 %v5233, %v5234
  %v5236 = vmul.f32 %v5203, %v5203
  %v5237 = vmul.f32 %v5208, %v5208
  %v5238 = vmul.f32 %v5213, %v5213
  %v5239 = vmul.f32 %v5218, %v5218
  %v5240 = vsel %vm4153, %v5236, 0.0
  %v5241 = vsel %vm4153, %v5237, 0.0
  %v5242 = vadd.f32 %v5240, %v5241
  %v5243 = vsel %vm4153, %v5238, 0.0
  %v5244 = vadd.f32 %v5242, %v5243
  %v5245 = vsel %vm4153, %v5239, 0.0
  %v5246 = vadd.f32 %v5244, %v5245
  %v5247 = vrot.slane %v5246, 4
  %v5248 = vadd.f32 %v5246, %v5247
  %v5249 = vrot.slane %v5248, 2
  %v5250 = vadd.f32 %v5248, %v5249
  %v5251 = vrot.slane %v5250, 1
  %v5252 = vadd.f32 %v5250, %v5251
  %v5253 = vmul.f32 %v5252, %v5234
  %v5254 = vmul.f32 %v5235, %v5235
  %v5255 = vsub.f32 %v5253, %v5254
  %v5256 = vsub.f32 %v5203, %v5235
  %v5257 = vsub.f32 %v5208, %v5235
  %v5258 = vsub.f32 %v5213, %v5235
  %v5259 = vsub.f32 %v5218, %v5235
  %v5260 = vadd.f32 %v5255, 1e-05
  %v5261 = vrsqrt.pop %v5260
  %v5262 = vmul.f32 %v5256, %v5261
  %v5263 = vmul.f32 %v5257, %v5261
  %v5264 = vmul.f32 %v5258, %v5261
  %v5265 = vmul.f32 %v5259, %v5261
  %v5266 = vld [vmem:[%s12] sm:$0x1]
  %v5268 = vlaneseq
  %v5269 = vshrl.u32 %v5268, 7
  %v5270 = vsub.s32 0, %v5269
  %v5271 = vrot.slane %v5266, %v5270
  %v5273 = vmul.f32 %v5262, %v5271
  %v5274 = vmul.f32 %v5263, %v5271
  %v5275 = vmul.f32 %v5264, %v5271
  %v5276 = vmul.f32 %v5265, %v5271
  %v5277 = vld [vmem:[%s13] sm:$0x1]
  %v5279 = vlaneseq
  %v5280 = vshrl.u32 %v5279, 7
  %v5281 = vsub.s32 0, %v5280
  %v5282 = vrot.slane %v5277, %v5281
  %v5284 = vadd.f32 %v5273, %v5282
  %v5285 = vadd.f32 %v5274, %v5282
  %v5286 = vadd.f32 %v5275, %v5282
  %v5287 = vadd.f32 %v5276, %v5282
  %vm5288 = vcmp.gt.f32.partialorder %v5284, 0.0
  %vm5289 = vcmp.gt.f32.partialorder %v5285, 0.0
  %vm5290 = vcmp.gt.f32.partialorder %v5286, 0.0
  %vm5291 = vcmp.gt.f32.partialorder %v5287, 0.0
  %v5292 = vmul.f32 %v5284, 0.2
  %v5293 = vmul.f32 %v5285, 0.2
  %v5294 = vmul.f32 %v5286, 0.2
  %v5295 = vmul.f32 %v5287, 0.2
  %v5296 = vsel %vm5288, %v5284, %v5292
  %v5297 = vsel %vm5289, %v5285, %v5293
  %v5298 = vsel %vm5290, %v5286, %v5294
  %v5299 = vsel %vm5291, %v5287, %v5295
  %v5300 = vld [vmem:[%s14] sm:$0xff]
  %v5301 = vld [vmem:[%s14 + $0x8] sm:$0xff]
  %v5302 = vld [vmem:[%s14 + $0x10] sm:$0xff]
  %v5303 = vld [vmem:[%s14 + $0x18] sm:$0xff]
  %v5304 = vmul.f32 %v5296, %v5300
  %v5305 = vmul.f32 %v5297, %v5301
  %v5306 = vmul.f32 %v5298, %v5302
  %v5307 = vmul.f32 %v5299, %v5303
  %v5308 = vsel %vm4153, %v5304, 0.0
  %5309 = vadd.xlane.f32.xlu0 %v5308
  %v5310 = vpop.xlane.xlu0 %5309
  %v5311 = vsel %vm4153, %v5305, 0.0
  %5312 = vadd.xlane.f32.xlu0 %v5311
  %v5313 = vpop.xlane.xlu0 %5312
  %v5314 = vsel %vm4153, %v5306, 0.0
  %5315 = vadd.xlane.f32.xlu0 %v5314
  %v5316 = vpop.xlane.xlu0 %5315
  %v5317 = vsel %vm4153, %v5307, 0.0
  %5318 = vadd.xlane.f32.xlu0 %v5317
  %v5319 = vpop.xlane.xlu0 %5318
  %v5320 = vld [vmem:[%s4] sm:$0x3]
  %v5322 = vsel %vm5038, %v5320, 0
  %5324 = vmatprep.subr.mxu0 0.0
  %5325 = vmatpush1.msra.mxu0 0.0
  %5326 = vmatprep.subr.mxu0 0.0
  %5327 = vmatpush1.msra.mxu0 0.0
  %5328 = vmatprep.subr.mxu0 0.0
  %5329 = vmatpush1.msra.mxu0 0.0
  %5330 = vmatprep.subr.mxu0 0.0
  %5331 = vmatpush1.msra.mxu0 0.0
  %5332 = vmatprep.subr.mxu0 0.0
  %5333 = vmatpush1.msra.mxu0 0.0
  %5334 = vmatprep.subr.mxu0 0.0
  %5335 = vmatpush1.msra.mxu0 0.0
  %5336 = vmatprep.subr.mxu0 0.0
  %5337 = vmatpush1.msra.mxu0 0.0
  %5338 = vmatprep.subr.mxu0 0.0
  %5339 = vmatpush1.msra.mxu0 0.0
  %5340 = vmatprep.subr.mxu0 0.0
  %5341 = vmatpush1.msra.mxu0 0.0
  %5342 = vmatprep.subr.mxu0 0.0
  %5343 = vmatpush1.msra.mxu0 0.0
  %5344 = vmatprep.subr.mxu0 0.0
  %5345 = vmatpush1.msra.mxu0 0.0
  %5346 = vmatprep.subr.mxu0 0.0
  %5347 = vmatpush1.msra.mxu0 0.0
  %5348 = vmatprep.subr.mxu0 0.0
  %5349 = vmatpush1.msra.mxu0 %v5319
  %5350 = vmatprep.subr.mxu0 0.0
  %5351 = vmatpush1.msra.mxu0 %v5316
  %5352 = vmatprep.subr.mxu0 0.0
  %5353 = vmatpush1.msra.mxu0 %v5313
  %5354 = vmatprep.subr.mxu0 0.0
  %5355 = vmatpush1.msra.mxu0 %v5310
  %5356 = vmatprep.subr.mxu0 0.0
  %5357 = vmatpush2.msra.mxu0 0.0
  %5358 = vmatprep.subr.mxu0 0.0
  %5359 = vmatpush2.msra.mxu0 0.0
  %5360 = vmatprep.subr.mxu0 0.0
  %5361 = vmatpush2.msra.mxu0 0.0
  %5362 = vmatprep.subr.mxu0 0.0
  %5363 = vmatpush2.msra.mxu0 0.0
  %5364 = vmatprep.subr.mxu0 0.0
  %5365 = vmatpush2.msra.mxu0 0.0
  %5366 = vmatprep.subr.mxu0 0.0
  %5367 = vmatpush2.msra.mxu0 0.0
  %5368 = vmatprep.subr.mxu0 0.0
  %5369 = vmatpush2.msra.mxu0 0.0
  %5370 = vmatprep.subr.mxu0 0.0
  %5371 = vmatpush2.msra.mxu0 0.0
  %5372 = vmatprep.subr.mxu0 0.0
  %5373 = vmatpush2.msra.mxu0 0.0
  %5374 = vmatprep.subr.mxu0 0.0
  %5375 = vmatpush2.msra.mxu0 0.0
  %5376 = vmatprep.subr.mxu0 0.0
  %5377 = vmatpush2.msra.mxu0 0.0
  %5378 = vmatprep.subr.mxu0 0.0
  %5379 = vmatpush2.msra.mxu0 0.0
  %5380 = vmatprep.subr.mxu0 0.0
  %5381 = vmatpush2.msra.mxu0 0.0
  %5382 = vmatprep.subr.mxu0 0.0
  %5383 = vmatpush2.msra.mxu0 0.0
  %5384 = vmatprep.subr.mxu0 0.0
  %5385 = vmatpush2.msra.mxu0 0.0
  %5386 = vmatprep.subr.mxu0 0.0
  %5387 = vmatpush2.msra.mxu0 0.0
  %5388 = vmatprep.mubr.f32.mxu0 0.0
  %5389 = vmatmul.mubr.f32.gmra.mxu0 %v5322
  %v5390 = vpop.f32.mrf.mxu0
  %v5391 = vadd.f32 0.0, %v5390
  %v5392 = vpop.f32.mrf.mxu0
  %5393 = vdwg.mxu0
  %vm5394 = vcmask 1024
  %5395 = vst.msk [vmem:[%s15] sm:$0x3] %vm5394, %v5391
  // Predicated region
  $region62: #{text_image_matcher.1} parent=0 // pred_check
    _
  $region63: #{text_image_matcher.1} parent=0 // pred_check_branch
    %5397 = sbr.rel (0) target = $region65
  $region64: #{text_image_matcher.1} parent=0 // pred_region
    _
  $region65: #{text_image_matcher.1} parent=0 // pred_fallthru
    _
  // Predicated region
  $region66: #{text_image_matcher.1} parent=0 // pred_check
    _
  $region67: #{text_image_matcher.1} parent=0 // pred_check_branch
    %5399 = sbr.rel (0) target = $region69
  $region68: #{text_image_matcher.1} parent=0 // pred_region
    _
  $region69: #{text_image_matcher.1} parent=0 // pred_fallthru
    _

</llo_original>
